<compile_context>
chip_gen: v7x
topology: tpu7x:2x2x1
jax: 0.10.0
libtpu: 0.0.40
codegen_flags: <defaults>
</compile_context>

<pallas_src>
import functools
import numpy as np
import jax
import jax.numpy as jnp
from jax.experimental import pallas as pl
from jax.experimental.pallas import tpu as pltpu

EPS = 1e-5                 # nn.GroupNorm default
MXU_DTYPE = jnp.bfloat16   # MXU operand dtype (f32 accumulation)


# ----------------------------------------------------------------------------
# Bilinear (align_corners=True) helpers
# ----------------------------------------------------------------------------
def _bilinear_taps(in_size, out_size):
    """Per-output-row (lo, hi, frac) for PyTorch bilinear, align_corners=True."""
    lo, hi, frac = [], [], []
    for i in range(out_size):
        src = i * (in_size - 1) / (out_size - 1) if out_size > 1 else 0.0
        l = min(int(np.floor(src)), in_size - 1)
        h = min(l + 1, in_size - 1)
        lo.append(l)
        hi.append(h)
        frac.append(float(src - l))
    return lo, hi, frac


def _bilinear_matrix(in_size, out_size):
    lo, hi, frac = _bilinear_taps(in_size, out_size)
    R = np.zeros((out_size, in_size), np.float32)
    for i in range(out_size):
        R[i, lo[i]] += 1.0 - frac[i]
        R[i, hi[i]] += frac[i]
    return R


# ----------------------------------------------------------------------------
# In-kernel helpers
# ----------------------------------------------------------------------------
def _group_onehot(cout, groups, cpg, transposed=False):
    shape = (groups, cout) if transposed else (cout, groups)
    a = jax.lax.broadcasted_iota(jnp.int32, shape, 0)
    b = jax.lax.broadcasted_iota(jnp.int32, shape, 1)
    ch, gr = (b, a) if transposed else (a, b)
    return (ch // cpg == gr).astype(jnp.float32)


def _conv_gn_act(xp, w_ref, p_ref, *, H, W, KH, KW, groups, act):
    """xp: (Hp, Wp, Cin) bf16 value (padded for 3x3, unpadded for 1x1).
    w_ref: (KH*KW*Cin, Cout) bf16.  p_ref: (3, Cout) f32 = [bias; gamma; beta].
    Returns (H*W, Cout) f32 activated output."""
    cin = xp.shape[-1]
    cout = w_ref.shape[-1]

    # --- im2col: one MXU matmul with K = KH*KW*Cin (bf16 in, f32 acc) ---
    cols = []
    for dy in range(KH):
        for dx in range(KW):
            cols.append(xp[dy:dy + H, dx:dx + W, :].reshape(H * W, cin))
    patches = cols[0] if len(cols) == 1 else jnp.concatenate(cols, axis=-1)
    acc = jnp.dot(patches, w_ref[...], preferred_element_type=jnp.float32)
    acc = acc + p_ref[0:1, :]                                   # bias, (HW, Cout) f32

    # --- GroupNorm: two-pass (centered) variance, affine folded into one scale ---
    cpg = cout // groups
    cnt = float(H * W * cpg)
    s = jnp.sum(acc, axis=0, keepdims=True)                     # (1, Cout)
    if cpg == 1:
        mean_c = s * (1.0 / cnt)
    else:
        gmat = _group_onehot(cout, groups, cpg)                 # (Cout, G)
        gmat_t = _group_onehot(cout, groups, cpg, transposed=True)
        mean_g = jnp.dot(s, gmat, preferred_element_type=jnp.float32) * (1.0 / cnt)
        mean_c = jnp.dot(mean_g, gmat_t, preferred_element_type=jnp.float32)
    centered = acc - mean_c
    ss = jnp.sum(centered * centered, axis=0, keepdims=True)    # (1, Cout)
    if cpg == 1:
        var_c = ss * (1.0 / cnt)
    else:
        var_g = jnp.dot(ss, gmat, preferred_element_type=jnp.float32) * (1.0 / cnt)
        var_c = jnp.dot(var_g, gmat_t, preferred_element_type=jnp.float32)
    scale = jax.lax.rsqrt(var_c + EPS) * p_ref[1:2, :]          # inv_std * gamma
    y = centered * scale + p_ref[2:3, :]

    if act == "silu":
        return y * jax.nn.sigmoid(y)
    return jax.nn.sigmoid(y)


# ----------------------------------------------------------------------------
# Fused kernel: 3 conv+GN+act branches, fuse, separable bilinear x2 upsample
# ----------------------------------------------------------------------------
def _sim_fused_kernel(xl_ref, xg_ref, xn_ref,
                      wl_ref, pl_ref, wi_ref, pi_ref, wg_ref, pg_ref,
                      rw_ref, o1_ref, o2_ref, *, H, W, groups, h_taps):
    C = o1_ref.shape[-1]

    lf = _conv_gn_act(xl_ref[0], wl_ref, pl_ref, H=H, W=W, KH=3, KW=3,
                      groups=groups, act="silu")                # (HW, C) f32
    ga = _conv_gn_act(xg_ref[0], wi_ref, pi_ref, H=H, W=W, KH=1, KW=1,
                      groups=groups, act="sigmoid")
    gf = _conv_gn_act(xn_ref[0], wg_ref, pg_ref, H=H, W=W, KH=3, KW=3,
                      groups=groups, act="silu")

    out1 = lf * ga + gf                                         # (HW, C) f32
    out1_3d = out1.reshape(H, W, C)
    o1_ref[0] = out1_3d.astype(o1_ref.dtype)

    # --- bilinear x2, align_corners=True, separable ---
    # W direction: one batched (2W,W)@(W,C) matmul per image row (MXU, bf16 in / f32 acc)
    rwb = jnp.broadcast_to(rw_ref[...], (H, 2 * W, W))          # (H, 2W, W) bf16
    aw = jnp.einsum("hvw,hwc->hvc", rwb, out1_3d.astype(rw_ref.dtype),
                    preferred_element_type=jnp.float32)         # (H, 2W, C) f32
    # H direction: static 2-tap lerp between adjacent rows (VPU, weights are constants)
    lo, hi, frac = h_taps
    rows = []
    for p in range(2 * H):
        f = frac[p]
        if f == 0.0:
            rows.append(aw[lo[p]])
        else:
            rows.append((1.0 - f) * aw[lo[p]] + f * aw[hi[p]])
    out2 = jnp.stack(rows, axis=0)                              # (2H, 2W, C) f32
    o2_ref[0] = out2.astype(o2_ref.dtype)


# ----------------------------------------------------------------------------
# Module wrapper (NCHW in / NCHW out, like the PyTorch module)
# ----------------------------------------------------------------------------
def semantic_interaction_forward(params, x_l, x_g, x_n, groups=32):
    to_nhwc = lambda x: jnp.transpose(x, (0, 2, 3, 1))
    to_nchw = lambda x: jnp.transpose(x, (0, 3, 1, 2))
    # TODO(synk): carry NHWC end-to-end in the surrounding model to drop these transposes.
    xl, xg, xn = to_nhwc(x_l), to_nhwc(x_g), to_nhwc(x_n)

    N, H, W, _ = xl.shape
    Cout = params["local"]["w"].shape[0]
    assert Cout % groups == 0, "GroupNorm requires out_channels % groups == 0"

    def prep_w(w):  # (Cout, Cin, KH, KW) -> (KH*KW*Cin, Cout), bf16 MXU operand
        co, ci, kh, kw = w.shape
        return jnp.transpose(w, (2, 3, 1, 0)).reshape(kh * kw * ci, co).astype(MXU_DTYPE)

    def prep_p(p):  # (3, Cout) f32: [bias; gamma; beta]
        return jnp.stack([p["b"], p["gamma"], p["beta"]], axis=0).astype(jnp.float32)

    pad1 = lambda x: jnp.pad(x, ((0, 0), (1, 1), (1, 1), (0, 0)))
    xl_p = pad1(xl).astype(MXU_DTYPE)
    xn_p = pad1(xn).astype(MXU_DTYPE)
    xg_b = xg.astype(MXU_DTYPE)

    w_l, p_l = prep_w(params["local"]["w"]), prep_p(params["local"])
    w_i, p_i = prep_w(params["inter"]["w"]), prep_p(params["inter"])
    w_g, p_g = prep_w(params["global"]["w"]), prep_p(params["global"])

    rw = jnp.asarray(_bilinear_matrix(W, 2 * W), MXU_DTYPE)     # (2W, W) column taps
    h_taps = _bilinear_taps(H, 2 * H)                           # static row taps

    Hp, Wp = H + 2, W + 2
    cin_l, cin_g, cin_n = xl.shape[-1], xg.shape[-1], xn.shape[-1]

    kern = functools.partial(_sim_fused_kernel, H=H, W=W, groups=groups, h_taps=h_taps)
    out1, out2 = pl.pallas_call(
        kern,
        out_shape=(jax.ShapeDtypeStruct((N, H, W, Cout), jnp.float32),
                   jax.ShapeDtypeStruct((N, 2 * H, 2 * W, Cout), jnp.float32)),
        grid=(N,),
        in_specs=[
            pl.BlockSpec((1, Hp, Wp, cin_l), lambda n: (n, 0, 0, 0)),
            pl.BlockSpec((1, H, W, cin_g), lambda n: (n, 0, 0, 0)),
            pl.BlockSpec((1, Hp, Wp, cin_n), lambda n: (n, 0, 0, 0)),
            pl.BlockSpec((9 * cin_l, Cout), lambda n: (0, 0)),
            pl.BlockSpec((3, Cout), lambda n: (0, 0)),
            pl.BlockSpec((cin_g, Cout), lambda n: (0, 0)),
            pl.BlockSpec((3, Cout), lambda n: (0, 0)),
            pl.BlockSpec((9 * cin_n, Cout), lambda n: (0, 0)),
            pl.BlockSpec((3, Cout), lambda n: (0, 0)),
            pl.BlockSpec((2 * W, W), lambda n: (0, 0)),
        ],
        out_specs=(
            pl.BlockSpec((1, H, W, Cout), lambda n: (n, 0, 0, 0)),
            pl.BlockSpec((1, 2 * H, 2 * W, Cout), lambda n: (n, 0, 0, 0)),
        ),
        compiler_params=pltpu.CompilerParams(dimension_semantics=("parallel",)),
    )(xl_p, xg_b, xn_p, w_l, p_l, w_i, p_i, w_g, p_g, rw)

    return to_nchw(out1), to_nchw(out2)


# ----------------------------------------------------------------------------
# Params + pure-JAX f32 reference (for correctness check)
# ----------------------------------------------------------------------------
def init_params(key, in_channels, out_channels):
    ks = jax.random.split(key, 12)
    def conv_w(k, cin, kh, kw):
        return jax.random.normal(k, (out_channels, cin, kh, kw), jnp.float32) * 0.1
    def vec(k, scale=0.1, shift=0.0):
        return jax.random.normal(k, (out_channels,), jnp.float32) * scale + shift
    return {
        "local":  dict(w=conv_w(ks[0], in_channels, 3, 3), b=vec(ks[1]),
                       gamma=vec(ks[2], 0.1, 1.0), beta=vec(ks[3], 0.05)),
        "inter":  dict(w=conv_w(ks[4], in_channels, 1, 1), b=vec(ks[5]),
                       gamma=vec(ks[6], 0.1, 1.0), beta=vec(ks[7], 0.05)),
        "global": dict(w=conv_w(ks[8], in_channels, 3, 3), b=vec(ks[9]),
                       gamma=vec(ks[10], 0.1, 1.0), beta=vec(ks[11], 0.05)),
    }


def _ref_block(x_nchw, w, b, gamma, beta, groups, act, pad):
    y = jax.lax.conv_general_dilated(x_nchw, w, (1, 1), [(pad, pad), (pad, pad)],
                                     dimension_numbers=("NCHW", "OIHW", "NCHW"))
    y = y + b[None, :, None, None]
    N, C, H, W = y.shape
    yg = y.reshape(N, groups, C // groups, H, W)
    mean = yg.mean(axis=(2, 3, 4), keepdims=True)
    var = ((yg - mean) ** 2).mean(axis=(2, 3, 4), keepdims=True)
    yn = ((yg - mean) / jnp.sqrt(var + EPS)).reshape(N, C, H, W)
    yn = yn * gamma[None, :, None, None] + beta[None, :, None, None]
    return yn * jax.nn.sigmoid(yn) if act == "silu" else jax.nn.sigmoid(yn)


def _ref_forward(params, x_l, x_g, x_n, groups=32):
    p = params["local"]
    lf = _ref_block(x_l, p["w"], p["b"], p["gamma"], p["beta"], groups, "silu", 1)
    p = params["inter"]
    ga = _ref_block(x_g, p["w"], p["b"], p["gamma"], p["beta"], groups, "sigmoid", 0)
    p = params["global"]
    gf = _ref_block(x_n, p["w"], p["b"], p["gamma"], p["beta"], groups, "silu", 1)
    out1 = lf * ga + gf
    _, _, H, W = out1.shape
    Rh = jnp.asarray(_bilinear_matrix(H, 2 * H))
    Rw = jnp.asarray(_bilinear_matrix(W, 2 * W))
    out2 = jnp.einsum("ih,jw,nchw->ncij", Rh, Rw, out1)
    return out1, out2


if __name__ == "__main__":
    N, Cin, Cout, H, W = 2, 16, 32, 8, 8   # Cout multiple of 32 (GroupNorm(32, .))
    key = jax.random.PRNGKey(0)
    kx, kp = jax.random.split(key)
    kl, kg, kn = jax.random.split(kx, 3)
    x_l = jax.random.normal(kl, (N, Cin, H, W), jnp.float32)
    x_g = jax.random.normal(kg, (N, Cin, H, W), jnp.float32)
    x_n = jax.random.normal(kn, (N, Cin, H, W), jnp.float32)
    params = init_params(kp, Cin, Cout)

    fwd = jax.jit(semantic_interaction_forward)
    out1, out2 = fwd(params, x_l, x_g, x_n)
    jax.block_until_ready((out1, out2))

    r1, r2 = _ref_forward(params, x_l, x_g, x_n)
    assert out1.shape == (N, Cout, H, W) and out2.shape == (N, Cout, 2 * H, 2 * W)
    # bf16 MXU operands with f32 accumulation -> expected abs error ~1e-2 vs f32 ref.
    TOL = 5e-2
    e1 = float(jnp.max(jnp.abs(out1 - r1)))
    e2 = float(jnp.max(jnp.abs(out2 - r2)))
    assert np.isfinite(e1) and np.isfinite(e2)
    assert e1 < TOL, f"out1 max err {e1}"
    assert e2 < TOL, f"out2 max err {e2}"
    print("KERNEL_OK")
</pallas_src>

<mosaic_0001>
module attributes {stable_mosaic.version = 11 : i64} {
  func.func @_sim_fused_kernel(%arg0: i32, %arg1: memref<1x10x10x16xbf16, #tpu.memory_space<vmem>>, %arg2: memref<1x8x8x16xbf16, #tpu.memory_space<vmem>>, %arg3: memref<1x10x10x16xbf16, #tpu.memory_space<vmem>>, %arg4: memref<144x32xbf16, #tpu.memory_space<vmem>>, %arg5: memref<3x32xf32, #tpu.memory_space<vmem>>, %arg6: memref<16x32xbf16, #tpu.memory_space<vmem>>, %arg7: memref<3x32xf32, #tpu.memory_space<vmem>>, %arg8: memref<144x32xbf16, #tpu.memory_space<vmem>>, %arg9: memref<3x32xf32, #tpu.memory_space<vmem>>, %arg10: memref<16x8xbf16, #tpu.memory_space<vmem>>, %arg11: memref<1x8x8x32xf32, #tpu.memory_space<vmem>>, %arg12: memref<1x16x16x32xf32, #tpu.memory_space<vmem>>) attributes {dimension_semantics = [#tpu.dimension_semantics<parallel>], iteration_bounds = array<i64: 2>, scalar_prefetch = 0 : i64, scratch_operands = 0 : i64, tpu.core_type = #tpu.core_type<tc>, window_params = [{transform_indices = @transform_0, window_bounds = array<i64: 1, 10, 10, 16>}, {transform_indices = @transform_1, window_bounds = array<i64: 1, 8, 8, 16>}, {transform_indices = @transform_2, window_bounds = array<i64: 1, 10, 10, 16>}, {pipeline_mode = #tpu.pipeline_mode<synchronous>, transform_indices = @transform_3, window_bounds = array<i64: 144, 32>}, {pipeline_mode = #tpu.pipeline_mode<synchronous>, transform_indices = @transform_4, window_bounds = array<i64: 3, 32>}, {pipeline_mode = #tpu.pipeline_mode<synchronous>, transform_indices = @transform_5, window_bounds = array<i64: 16, 32>}, {pipeline_mode = #tpu.pipeline_mode<synchronous>, transform_indices = @transform_6, window_bounds = array<i64: 3, 32>}, {pipeline_mode = #tpu.pipeline_mode<synchronous>, transform_indices = @transform_7, window_bounds = array<i64: 144, 32>}, {pipeline_mode = #tpu.pipeline_mode<synchronous>, transform_indices = @transform_8, window_bounds = array<i64: 3, 32>}, {pipeline_mode = #tpu.pipeline_mode<synchronous>, transform_indices = @transform_9, window_bounds = array<i64: 16, 8>}, {transform_indices = @transform_10, window_bounds = array<i64: 1, 8, 8, 32>}, {transform_indices = @transform_11, window_bounds = array<i64: 1, 16, 16, 32>}]} {
    %c0 = arith.constant 0 : index
    %c0_0 = arith.constant 0 : index
    %c0_1 = arith.constant 0 : index
    %c0_2 = arith.constant 0 : index
    %0 = vector.load %arg1[%c0, %c0_0, %c0_1, %c0_2] : memref<1x10x10x16xbf16, #tpu.memory_space<vmem>>, vector<1x10x10x16xbf16>
    %1 = vector.shape_cast %0 : vector<1x10x10x16xbf16> to vector<10x10x16xbf16>
    %2 = vector.extract_strided_slice %1 {offsets = [0, 0, 0], sizes = [8, 8, 16], strides = [1, 1, 1]} : vector<10x10x16xbf16> to vector<8x8x16xbf16>
    %3 = vector.shape_cast %2 : vector<8x8x16xbf16> to vector<64x16xbf16>
    %4 = vector.extract_strided_slice %1 {offsets = [0, 1, 0], sizes = [8, 8, 16], strides = [1, 1, 1]} : vector<10x10x16xbf16> to vector<8x8x16xbf16>
    %5 = vector.shape_cast %4 : vector<8x8x16xbf16> to vector<64x16xbf16>
    %6 = vector.extract_strided_slice %1 {offsets = [0, 2, 0], sizes = [8, 8, 16], strides = [1, 1, 1]} : vector<10x10x16xbf16> to vector<8x8x16xbf16>
    %7 = vector.shape_cast %6 : vector<8x8x16xbf16> to vector<64x16xbf16>
    %8 = vector.extract_strided_slice %1 {offsets = [1, 0, 0], sizes = [8, 8, 16], strides = [1, 1, 1]} : vector<10x10x16xbf16> to vector<8x8x16xbf16>
    %9 = vector.shape_cast %8 : vector<8x8x16xbf16> to vector<64x16xbf16>
    %10 = vector.extract_strided_slice %1 {offsets = [1, 1, 0], sizes = [8, 8, 16], strides = [1, 1, 1]} : vector<10x10x16xbf16> to vector<8x8x16xbf16>
    %11 = vector.shape_cast %10 : vector<8x8x16xbf16> to vector<64x16xbf16>
    %12 = vector.extract_strided_slice %1 {offsets = [1, 2, 0], sizes = [8, 8, 16], strides = [1, 1, 1]} : vector<10x10x16xbf16> to vector<8x8x16xbf16>
    %13 = vector.shape_cast %12 : vector<8x8x16xbf16> to vector<64x16xbf16>
    %14 = vector.extract_strided_slice %1 {offsets = [2, 0, 0], sizes = [8, 8, 16], strides = [1, 1, 1]} : vector<10x10x16xbf16> to vector<8x8x16xbf16>
    %15 = vector.shape_cast %14 : vector<8x8x16xbf16> to vector<64x16xbf16>
    %16 = vector.extract_strided_slice %1 {offsets = [2, 1, 0], sizes = [8, 8, 16], strides = [1, 1, 1]} : vector<10x10x16xbf16> to vector<8x8x16xbf16>
    %17 = vector.shape_cast %16 : vector<8x8x16xbf16> to vector<64x16xbf16>
    %18 = vector.extract_strided_slice %1 {offsets = [2, 2, 0], sizes = [8, 8, 16], strides = [1, 1, 1]} : vector<10x10x16xbf16> to vector<8x8x16xbf16>
    %19 = vector.shape_cast %18 : vector<8x8x16xbf16> to vector<64x16xbf16>
    %20 = tpu.concatenate %3, %5, %7, %9, %11, %13, %15, %17, %19 in 1 : vector<64x16xbf16>, vector<64x16xbf16>, vector<64x16xbf16>, vector<64x16xbf16>, vector<64x16xbf16>, vector<64x16xbf16>, vector<64x16xbf16>, vector<64x16xbf16>, vector<64x16xbf16> -> vector<64x144xbf16>
    %c0_3 = arith.constant 0 : index
    %c0_4 = arith.constant 0 : index
    %21 = vector.load %arg4[%c0_3, %c0_4] : memref<144x32xbf16, #tpu.memory_space<vmem>>, vector<144x32xbf16>
    %cst = arith.constant dense<0.000000e+00> : vector<64x32xf32>
    %22 = tpu.matmul %20, %21, %cst {dimension_numbers = #tpu.dot_dimension_numbers<[1], [0], [0], [1], [0, 0, 1, 1], [], []>} : vector<64x144xbf16>, vector<144x32xbf16>, vector<64x32xf32> -> vector<64x32xf32>
    %c0_5 = arith.constant 0 : index
    %c0_6 = arith.constant 0 : index
    %23 = vector.load %arg5[%c0_5, %c0_6] : memref<3x32xf32, #tpu.memory_space<vmem>>, vector<1x32xf32>
    %24 = vector.broadcast %23 : vector<1x32xf32> to vector<64x32xf32>
    %25 = arith.addf %22, %24 : vector<64x32xf32>
    %cst_7 = arith.constant dense<0.000000e+00> : vector<32xf32>
    %26 = vector.multi_reduction <add>, %25, %cst_7 [0] : vector<64x32xf32> to vector<32xf32>
    %27 = vector.shape_cast %26 : vector<32xf32> to vector<1x32xf32>
    %cst_8 = arith.constant 1.562500e-02 : f32
    %28 = vector.broadcast %cst_8 : f32 to vector<1x32xf32>
    %29 = arith.mulf %27, %28 : vector<1x32xf32>
    %30 = vector.broadcast %29 : vector<1x32xf32> to vector<64x32xf32>
    %31 = arith.subf %25, %30 : vector<64x32xf32>
    %32 = arith.mulf %31, %31 : vector<64x32xf32>
    %cst_9 = arith.constant dense<0.000000e+00> : vector<32xf32>
    %33 = vector.multi_reduction <add>, %32, %cst_9 [0] : vector<64x32xf32> to vector<32xf32>
    %34 = vector.shape_cast %33 : vector<32xf32> to vector<1x32xf32>
    %cst_10 = arith.constant 1.562500e-02 : f32
    %35 = vector.broadcast %cst_10 : f32 to vector<1x32xf32>
    %36 = arith.mulf %34, %35 : vector<1x32xf32>
    %cst_11 = arith.constant 9.99999974E-6 : f32
    %37 = vector.broadcast %cst_11 : f32 to vector<1x32xf32>
    %38 = arith.addf %36, %37 : vector<1x32xf32>
    %39 = math.rsqrt %38 : vector<1x32xf32>
    %c1 = arith.constant 1 : index
    %c0_12 = arith.constant 0 : index
    %40 = vector.load %arg5[%c1, %c0_12] : memref<3x32xf32, #tpu.memory_space<vmem>>, vector<1x32xf32>
    %41 = arith.mulf %39, %40 : vector<1x32xf32>
    %42 = vector.broadcast %41 : vector<1x32xf32> to vector<64x32xf32>
    %43 = arith.mulf %31, %42 : vector<64x32xf32>
    %c2 = arith.constant 2 : index
    %c0_13 = arith.constant 0 : index
    %44 = vector.load %arg5[%c2, %c0_13] : memref<3x32xf32, #tpu.memory_space<vmem>>, vector<1x32xf32>
    %45 = vector.broadcast %44 : vector<1x32xf32> to vector<64x32xf32>
    %46 = arith.addf %43, %45 : vector<64x32xf32>
    %47 = arith.negf %46 : vector<64x32xf32>
    %48 = math.exp %47 : vector<64x32xf32>
    %cst_14 = arith.constant 1.000000e+00 : f32
    %49 = vector.broadcast %cst_14 : f32 to vector<64x32xf32>
    %50 = arith.addf %49, %48 : vector<64x32xf32>
    %51 = arith.divf %49, %50 : vector<64x32xf32>
    %52 = arith.mulf %46, %51 : vector<64x32xf32>
    %c0_15 = arith.constant 0 : index
    %c0_16 = arith.constant 0 : index
    %c0_17 = arith.constant 0 : index
    %c0_18 = arith.constant 0 : index
    %53 = vector.load %arg2[%c0_15, %c0_16, %c0_17, %c0_18] : memref<1x8x8x16xbf16, #tpu.memory_space<vmem>>, vector<1x8x8x16xbf16>
    %54 = vector.shape_cast %53 : vector<1x8x8x16xbf16> to vector<8x8x16xbf16>
    %55 = vector.shape_cast %54 : vector<8x8x16xbf16> to vector<64x16xbf16>
    %c0_19 = arith.constant 0 : index
    %c0_20 = arith.constant 0 : index
    %56 = vector.load %arg6[%c0_19, %c0_20] : memref<16x32xbf16, #tpu.memory_space<vmem>>, vector<16x32xbf16>
    %cst_21 = arith.constant dense<0.000000e+00> : vector<64x32xf32>
    %57 = tpu.matmul %55, %56, %cst_21 {dimension_numbers = #tpu.dot_dimension_numbers<[1], [0], [0], [1], [0, 0, 1, 1], [], []>} : vector<64x16xbf16>, vector<16x32xbf16>, vector<64x32xf32> -> vector<64x32xf32>
    %c0_22 = arith.constant 0 : index
    %c0_23 = arith.constant 0 : index
    %58 = vector.load %arg7[%c0_22, %c0_23] : memref<3x32xf32, #tpu.memory_space<vmem>>, vector<1x32xf32>
    %59 = vector.broadcast %58 : vector<1x32xf32> to vector<64x32xf32>
    %60 = arith.addf %57, %59 : vector<64x32xf32>
    %cst_24 = arith.constant dense<0.000000e+00> : vector<32xf32>
    %61 = vector.multi_reduction <add>, %60, %cst_24 [0] : vector<64x32xf32> to vector<32xf32>
    %62 = vector.shape_cast %61 : vector<32xf32> to vector<1x32xf32>
    %cst_25 = arith.constant 1.562500e-02 : f32
    %63 = vector.broadcast %cst_25 : f32 to vector<1x32xf32>
    %64 = arith.mulf %62, %63 : vector<1x32xf32>
    %65 = vector.broadcast %64 : vector<1x32xf32> to vector<64x32xf32>
    %66 = arith.subf %60, %65 : vector<64x32xf32>
    %67 = arith.mulf %66, %66 : vector<64x32xf32>
    %cst_26 = arith.constant dense<0.000000e+00> : vector<32xf32>
    %68 = vector.multi_reduction <add>, %67, %cst_26 [0] : vector<64x32xf32> to vector<32xf32>
    %69 = vector.shape_cast %68 : vector<32xf32> to vector<1x32xf32>
    %cst_27 = arith.constant 1.562500e-02 : f32
    %70 = vector.broadcast %cst_27 : f32 to vector<1x32xf32>
    %71 = arith.mulf %69, %70 : vector<1x32xf32>
    %cst_28 = arith.constant 9.99999974E-6 : f32
    %72 = vector.broadcast %cst_28 : f32 to vector<1x32xf32>
    %73 = arith.addf %71, %72 : vector<1x32xf32>
    %74 = math.rsqrt %73 : vector<1x32xf32>
    %c1_29 = arith.constant 1 : index
    %c0_30 = arith.constant 0 : index
    %75 = vector.load %arg7[%c1_29, %c0_30] : memref<3x32xf32, #tpu.memory_space<vmem>>, vector<1x32xf32>
    %76 = arith.mulf %74, %75 : vector<1x32xf32>
    %77 = vector.broadcast %76 : vector<1x32xf32> to vector<64x32xf32>
    %78 = arith.mulf %66, %77 : vector<64x32xf32>
    %c2_31 = arith.constant 2 : index
    %c0_32 = arith.constant 0 : index
    %79 = vector.load %arg7[%c2_31, %c0_32] : memref<3x32xf32, #tpu.memory_space<vmem>>, vector<1x32xf32>
    %80 = vector.broadcast %79 : vector<1x32xf32> to vector<64x32xf32>
    %81 = arith.addf %78, %80 : vector<64x32xf32>
    %82 = arith.negf %81 : vector<64x32xf32>
    %83 = math.exp %82 : vector<64x32xf32>
    %cst_33 = arith.constant 1.000000e+00 : f32
    %84 = vector.broadcast %cst_33 : f32 to vector<64x32xf32>
    %85 = arith.addf %84, %83 : vector<64x32xf32>
    %86 = arith.divf %84, %85 : vector<64x32xf32>
    %c0_34 = arith.constant 0 : index
    %c0_35 = arith.constant 0 : index
    %c0_36 = arith.constant 0 : index
    %c0_37 = arith.constant 0 : index
    %87 = vector.load %arg3[%c0_34, %c0_35, %c0_36, %c0_37] : memref<1x10x10x16xbf16, #tpu.memory_space<vmem>>, vector<1x10x10x16xbf16>
    %88 = vector.shape_cast %87 : vector<1x10x10x16xbf16> to vector<10x10x16xbf16>
    %89 = vector.extract_strided_slice %88 {offsets = [0, 0, 0], sizes = [8, 8, 16], strides = [1, 1, 1]} : vector<10x10x16xbf16> to vector<8x8x16xbf16>
    %90 = vector.shape_cast %89 : vector<8x8x16xbf16> to vector<64x16xbf16>
    %91 = vector.extract_strided_slice %88 {offsets = [0, 1, 0], sizes = [8, 8, 16], strides = [1, 1, 1]} : vector<10x10x16xbf16> to vector<8x8x16xbf16>
    %92 = vector.shape_cast %91 : vector<8x8x16xbf16> to vector<64x16xbf16>
    %93 = vector.extract_strided_slice %88 {offsets = [0, 2, 0], sizes = [8, 8, 16], strides = [1, 1, 1]} : vector<10x10x16xbf16> to vector<8x8x16xbf16>
    %94 = vector.shape_cast %93 : vector<8x8x16xbf16> to vector<64x16xbf16>
    %95 = vector.extract_strided_slice %88 {offsets = [1, 0, 0], sizes = [8, 8, 16], strides = [1, 1, 1]} : vector<10x10x16xbf16> to vector<8x8x16xbf16>
    %96 = vector.shape_cast %95 : vector<8x8x16xbf16> to vector<64x16xbf16>
    %97 = vector.extract_strided_slice %88 {offsets = [1, 1, 0], sizes = [8, 8, 16], strides = [1, 1, 1]} : vector<10x10x16xbf16> to vector<8x8x16xbf16>
    %98 = vector.shape_cast %97 : vector<8x8x16xbf16> to vector<64x16xbf16>
    %99 = vector.extract_strided_slice %88 {offsets = [1, 2, 0], sizes = [8, 8, 16], strides = [1, 1, 1]} : vector<10x10x16xbf16> to vector<8x8x16xbf16>
    %100 = vector.shape_cast %99 : vector<8x8x16xbf16> to vector<64x16xbf16>
    %101 = vector.extract_strided_slice %88 {offsets = [2, 0, 0], sizes = [8, 8, 16], strides = [1, 1, 1]} : vector<10x10x16xbf16> to vector<8x8x16xbf16>
    %102 = vector.shape_cast %101 : vector<8x8x16xbf16> to vector<64x16xbf16>
    %103 = vector.extract_strided_slice %88 {offsets = [2, 1, 0], sizes = [8, 8, 16], strides = [1, 1, 1]} : vector<10x10x16xbf16> to vector<8x8x16xbf16>
    %104 = vector.shape_cast %103 : vector<8x8x16xbf16> to vector<64x16xbf16>
    %105 = vector.extract_strided_slice %88 {offsets = [2, 2, 0], sizes = [8, 8, 16], strides = [1, 1, 1]} : vector<10x10x16xbf16> to vector<8x8x16xbf16>
    %106 = vector.shape_cast %105 : vector<8x8x16xbf16> to vector<64x16xbf16>
    %107 = tpu.concatenate %90, %92, %94, %96, %98, %100, %102, %104, %106 in 1 : vector<64x16xbf16>, vector<64x16xbf16>, vector<64x16xbf16>, vector<64x16xbf16>, vector<64x16xbf16>, vector<64x16xbf16>, vector<64x16xbf16>, vector<64x16xbf16>, vector<64x16xbf16> -> vector<64x144xbf16>
    %c0_38 = arith.constant 0 : index
    %c0_39 = arith.constant 0 : index
    %108 = vector.load %arg8[%c0_38, %c0_39] : memref<144x32xbf16, #tpu.memory_space<vmem>>, vector<144x32xbf16>
    %cst_40 = arith.constant dense<0.000000e+00> : vector<64x32xf32>
    %109 = tpu.matmul %107, %108, %cst_40 {dimension_numbers = #tpu.dot_dimension_numbers<[1], [0], [0], [1], [0, 0, 1, 1], [], []>} : vector<64x144xbf16>, vector<144x32xbf16>, vector<64x32xf32> -> vector<64x32xf32>
    %c0_41 = arith.constant 0 : index
    %c0_42 = arith.constant 0 : index
    %110 = vector.load %arg9[%c0_41, %c0_42] : memref<3x32xf32, #tpu.memory_space<vmem>>, vector<1x32xf32>
    %111 = vector.broadcast %110 : vector<1x32xf32> to vector<64x32xf32>
    %112 = arith.addf %109, %111 : vector<64x32xf32>
    %cst_43 = arith.constant dense<0.000000e+00> : vector<32xf32>
    %113 = vector.multi_reduction <add>, %112, %cst_43 [0] : vector<64x32xf32> to vector<32xf32>
    %114 = vector.shape_cast %113 : vector<32xf32> to vector<1x32xf32>
    %cst_44 = arith.constant 1.562500e-02 : f32
    %115 = vector.broadcast %cst_44 : f32 to vector<1x32xf32>
    %116 = arith.mulf %114, %115 : vector<1x32xf32>
    %117 = vector.broadcast %116 : vector<1x32xf32> to vector<64x32xf32>
    %118 = arith.subf %112, %117 : vector<64x32xf32>
    %119 = arith.mulf %118, %118 : vector<64x32xf32>
    %cst_45 = arith.constant dense<0.000000e+00> : vector<32xf32>
    %120 = vector.multi_reduction <add>, %119, %cst_45 [0] : vector<64x32xf32> to vector<32xf32>
    %121 = vector.shape_cast %120 : vector<32xf32> to vector<1x32xf32>
    %cst_46 = arith.constant 1.562500e-02 : f32
    %122 = vector.broadcast %cst_46 : f32 to vector<1x32xf32>
    %123 = arith.mulf %121, %122 : vector<1x32xf32>
    %cst_47 = arith.constant 9.99999974E-6 : f32
    %124 = vector.broadcast %cst_47 : f32 to vector<1x32xf32>
    %125 = arith.addf %123, %124 : vector<1x32xf32>
    %126 = math.rsqrt %125 : vector<1x32xf32>
    %c1_48 = arith.constant 1 : index
    %c0_49 = arith.constant 0 : index
    %127 = vector.load %arg9[%c1_48, %c0_49] : memref<3x32xf32, #tpu.memory_space<vmem>>, vector<1x32xf32>
    %128 = arith.mulf %126, %127 : vector<1x32xf32>
    %129 = vector.broadcast %128 : vector<1x32xf32> to vector<64x32xf32>
    %130 = arith.mulf %118, %129 : vector<64x32xf32>
    %c2_50 = arith.constant 2 : index
    %c0_51 = arith.constant 0 : index
    %131 = vector.load %arg9[%c2_50, %c0_51] : memref<3x32xf32, #tpu.memory_space<vmem>>, vector<1x32xf32>
    %132 = vector.broadcast %131 : vector<1x32xf32> to vector<64x32xf32>
    %133 = arith.addf %130, %132 : vector<64x32xf32>
    %134 = arith.negf %133 : vector<64x32xf32>
    %135 = math.exp %134 : vector<64x32xf32>
    %cst_52 = arith.constant 1.000000e+00 : f32
    %136 = vector.broadcast %cst_52 : f32 to vector<64x32xf32>
    %137 = arith.addf %136, %135 : vector<64x32xf32>
    %138 = arith.divf %136, %137 : vector<64x32xf32>
    %139 = arith.mulf %133, %138 : vector<64x32xf32>
    %140 = arith.mulf %52, %86 : vector<64x32xf32>
    %141 = arith.addf %140, %139 : vector<64x32xf32>
    %142 = vector.shape_cast %141 : vector<64x32xf32> to vector<8x8x32xf32>
    %c0_53 = arith.constant 0 : index
    %c0_54 = arith.constant 0 : index
    %c0_55 = arith.constant 0 : index
    %c0_56 = arith.constant 0 : index
    %143 = vector.load %arg11[%c0_53, %c0_54, %c0_55, %c0_56] : memref<1x8x8x32xf32, #tpu.memory_space<vmem>>, vector<1x8x8x32xf32>
    %144 = vector.shape_cast %143 : vector<1x8x8x32xf32> to vector<8x8x32xf32>
    %145 = vector.shape_cast %142 : vector<8x8x32xf32> to vector<1x8x8x32xf32>
    tpu.vector_store %arg11[%c0_53, %c0_54, %c0_55, %c0_56], %145 {strides = array<i32>} : memref<1x8x8x32xf32, #tpu.memory_space<vmem>>, vector<1x8x8x32xf32>,
    %c0_57 = arith.constant 0 : index
    %c0_58 = arith.constant 0 : index
    %146 = vector.load %arg10[%c0_57, %c0_58] : memref<16x8xbf16, #tpu.memory_space<vmem>>, vector<16x8xbf16>
    %147 = vector.shape_cast %146 : vector<16x8xbf16> to vector<1x16x8xbf16>
    %148 = vector.broadcast %147 : vector<1x16x8xbf16> to vector<8x16x8xbf16>
    %149 = arith.truncf %142 : vector<8x8x32xf32> to vector<8x8x32xbf16>
    "tpu.trace_start"() <{level = 10 : i32, message = "hvw,hwc->hvc"}> : () -> ()
    %cst_59 = arith.constant dense<0.000000e+00> : vector<8x16x32xf32>
    %150 = tpu.matmul %148, %149, %cst_59 {dimension_numbers = #tpu.dot_dimension_numbers<[2], [1], [1], [2], [0, 0, 0, 1, 1, 2], [0], [0]>} : vector<8x16x8xbf16>, vector<8x8x32xbf16>, vector<8x16x32xf32> -> vector<8x16x32xf32>
    "tpu.trace_stop"() : () -> ()
    %151 = vector.extract_strided_slice %150 {offsets = [0, 0, 0], sizes = [1, 16, 32], strides = [1, 1, 1]} : vector<8x16x32xf32> to vector<1x16x32xf32>
    %152 = vector.shape_cast %151 : vector<1x16x32xf32> to vector<16x32xf32>
    %153 = vector.extract_strided_slice %150 {offsets = [0, 0, 0], sizes = [1, 16, 32], strides = [1, 1, 1]} : vector<8x16x32xf32> to vector<1x16x32xf32>
    %154 = vector.shape_cast %153 : vector<1x16x32xf32> to vector<16x32xf32>
    %cst_60 = arith.constant 0.533333361 : f32
    %155 = vector.broadcast %cst_60 : f32 to vector<16x32xf32>
    %156 = arith.mulf %155, %154 : vector<16x32xf32>
    %157 = vector.extract_strided_slice %150 {offsets = [1, 0, 0], sizes = [1, 16, 32], strides = [1, 1, 1]} : vector<8x16x32xf32> to vector<1x16x32xf32>
    %158 = vector.shape_cast %157 : vector<1x16x32xf32> to vector<16x32xf32>
    %cst_61 = arith.constant 0.466666669 : f32
    %159 = vector.broadcast %cst_61 : f32 to vector<16x32xf32>
    %160 = arith.mulf %159, %158 : vector<16x32xf32>
    %161 = arith.addf %156, %160 : vector<16x32xf32>
    %162 = vector.extract_strided_slice %150 {offsets = [0, 0, 0], sizes = [1, 16, 32], strides = [1, 1, 1]} : vector<8x16x32xf32> to vector<1x16x32xf32>
    %163 = vector.shape_cast %162 : vector<1x16x32xf32> to vector<16x32xf32>
    %cst_62 = arith.constant 0.0666666701 : f32
    %164 = vector.broadcast %cst_62 : f32 to vector<16x32xf32>
    %165 = arith.mulf %164, %163 : vector<16x32xf32>
    %166 = vector.extract_strided_slice %150 {offsets = [1, 0, 0], sizes = [1, 16, 32], strides = [1, 1, 1]} : vector<8x16x32xf32> to vector<1x16x32xf32>
    %167 = vector.shape_cast %166 : vector<1x16x32xf32> to vector<16x32xf32>
    %cst_63 = arith.constant 0.933333337 : f32
    %168 = vector.broadcast %cst_63 : f32 to vector<16x32xf32>
    %169 = arith.mulf %168, %167 : vector<16x32xf32>
    %170 = arith.addf %165, %169 : vector<16x32xf32>
    %171 = vector.extract_strided_slice %150 {offsets = [1, 0, 0], sizes = [1, 16, 32], strides = [1, 1, 1]} : vector<8x16x32xf32> to vector<1x16x32xf32>
    %172 = vector.shape_cast %171 : vector<1x16x32xf32> to vector<16x32xf32>
    %cst_64 = arith.constant 6.000000e-01 : f32
    %173 = vector.broadcast %cst_64 : f32 to vector<16x32xf32>
    %174 = arith.mulf %173, %172 : vector<16x32xf32>
    %175 = vector.extract_strided_slice %150 {offsets = [2, 0, 0], sizes = [1, 16, 32], strides = [1, 1, 1]} : vector<8x16x32xf32> to vector<1x16x32xf32>
    %176 = vector.shape_cast %175 : vector<1x16x32xf32> to vector<16x32xf32>
    %cst_65 = arith.constant 4.000000e-01 : f32
    %177 = vector.broadcast %cst_65 : f32 to vector<16x32xf32>
    %178 = arith.mulf %177, %176 : vector<16x32xf32>
    %179 = arith.addf %174, %178 : vector<16x32xf32>
    %180 = vector.extract_strided_slice %150 {offsets = [1, 0, 0], sizes = [1, 16, 32], strides = [1, 1, 1]} : vector<8x16x32xf32> to vector<1x16x32xf32>
    %181 = vector.shape_cast %180 : vector<1x16x32xf32> to vector<16x32xf32>
    %cst_66 = arith.constant 0.13333334 : f32
    %182 = vector.broadcast %cst_66 : f32 to vector<16x32xf32>
    %183 = arith.mulf %182, %181 : vector<16x32xf32>
    %184 = vector.extract_strided_slice %150 {offsets = [2, 0, 0], sizes = [1, 16, 32], strides = [1, 1, 1]} : vector<8x16x32xf32> to vector<1x16x32xf32>
    %185 = vector.shape_cast %184 : vector<1x16x32xf32> to vector<16x32xf32>
    %cst_67 = arith.constant 0.866666674 : f32
    %186 = vector.broadcast %cst_67 : f32 to vector<16x32xf32>
    %187 = arith.mulf %186, %185 : vector<16x32xf32>
    %188 = arith.addf %183, %187 : vector<16x32xf32>
    %189 = vector.extract_strided_slice %150 {offsets = [2, 0, 0], sizes = [1, 16, 32], strides = [1, 1, 1]} : vector<8x16x32xf32> to vector<1x16x32xf32>
    %190 = vector.shape_cast %189 : vector<1x16x32xf32> to vector<16x32xf32>
    %cst_68 = arith.constant 0.666666686 : f32
    %191 = vector.broadcast %cst_68 : f32 to vector<16x32xf32>
    %192 = arith.mulf %191, %190 : vector<16x32xf32>
    %193 = vector.extract_strided_slice %150 {offsets = [3, 0, 0], sizes = [1, 16, 32], strides = [1, 1, 1]} : vector<8x16x32xf32> to vector<1x16x32xf32>
    %194 = vector.shape_cast %193 : vector<1x16x32xf32> to vector<16x32xf32>
    %cst_69 = arith.constant 0.333333343 : f32
    %195 = vector.broadcast %cst_69 : f32 to vector<16x32xf32>
    %196 = arith.mulf %195, %194 : vector<16x32xf32>
    %197 = arith.addf %192, %196 : vector<16x32xf32>
    %198 = vector.extract_strided_slice %150 {offsets = [2, 0, 0], sizes = [1, 16, 32], strides = [1, 1, 1]} : vector<8x16x32xf32> to vector<1x16x32xf32>
    %199 = vector.shape_cast %198 : vector<1x16x32xf32> to vector<16x32xf32>
    %cst_70 = arith.constant 2.000000e-01 : f32
    %200 = vector.broadcast %cst_70 : f32 to vector<16x32xf32>
    %201 = arith.mulf %200, %199 : vector<16x32xf32>
    %202 = vector.extract_strided_slice %150 {offsets = [3, 0, 0], sizes = [1, 16, 32], strides = [1, 1, 1]} : vector<8x16x32xf32> to vector<1x16x32xf32>
    %203 = vector.shape_cast %202 : vector<1x16x32xf32> to vector<16x32xf32>
    %cst_71 = arith.constant 8.000000e-01 : f32
    %204 = vector.broadcast %cst_71 : f32 to vector<16x32xf32>
    %205 = arith.mulf %204, %203 : vector<16x32xf32>
    %206 = arith.addf %201, %205 : vector<16x32xf32>
    %207 = vector.extract_strided_slice %150 {offsets = [3, 0, 0], sizes = [1, 16, 32], strides = [1, 1, 1]} : vector<8x16x32xf32> to vector<1x16x32xf32>
    %208 = vector.shape_cast %207 : vector<1x16x32xf32> to vector<16x32xf32>
    %cst_72 = arith.constant 0.733333349 : f32
    %209 = vector.broadcast %cst_72 : f32 to vector<16x32xf32>
    %210 = arith.mulf %209, %208 : vector<16x32xf32>
    %211 = vector.extract_strided_slice %150 {offsets = [4, 0, 0], sizes = [1, 16, 32], strides = [1, 1, 1]} : vector<8x16x32xf32> to vector<1x16x32xf32>
    %212 = vector.shape_cast %211 : vector<1x16x32xf32> to vector<16x32xf32>
    %cst_73 = arith.constant 0.266666681 : f32
    %213 = vector.broadcast %cst_73 : f32 to vector<16x32xf32>
    %214 = arith.mulf %213, %212 : vector<16x32xf32>
    %215 = arith.addf %210, %214 : vector<16x32xf32>
    %216 = vector.extract_strided_slice %150 {offsets = [3, 0, 0], sizes = [1, 16, 32], strides = [1, 1, 1]} : vector<8x16x32xf32> to vector<1x16x32xf32>
    %217 = vector.shape_cast %216 : vector<1x16x32xf32> to vector<16x32xf32>
    %cst_74 = arith.constant 0.266666681 : f32
    %218 = vector.broadcast %cst_74 : f32 to vector<16x32xf32>
    %219 = arith.mulf %218, %217 : vector<16x32xf32>
    %220 = vector.extract_strided_slice %150 {offsets = [4, 0, 0], sizes = [1, 16, 32], strides = [1, 1, 1]} : vector<8x16x32xf32> to vector<1x16x32xf32>
    %221 = vector.shape_cast %220 : vector<1x16x32xf32> to vector<16x32xf32>
    %cst_75 = arith.constant 0.733333349 : f32
    %222 = vector.broadcast %cst_75 : f32 to vector<16x32xf32>
    %223 = arith.mulf %222, %221 : vector<16x32xf32>
    %224 = arith.addf %219, %223 : vector<16x32xf32>
    %225 = vector.extract_strided_slice %150 {offsets = [4, 0, 0], sizes = [1, 16, 32], strides = [1, 1, 1]} : vector<8x16x32xf32> to vector<1x16x32xf32>
    %226 = vector.shape_cast %225 : vector<1x16x32xf32> to vector<16x32xf32>
    %cst_76 = arith.constant 8.000000e-01 : f32
    %227 = vector.broadcast %cst_76 : f32 to vector<16x32xf32>
    %228 = arith.mulf %227, %226 : vector<16x32xf32>
    %229 = vector.extract_strided_slice %150 {offsets = [5, 0, 0], sizes = [1, 16, 32], strides = [1, 1, 1]} : vector<8x16x32xf32> to vector<1x16x32xf32>
    %230 = vector.shape_cast %229 : vector<1x16x32xf32> to vector<16x32xf32>
    %cst_77 = arith.constant 2.000000e-01 : f32
    %231 = vector.broadcast %cst_77 : f32 to vector<16x32xf32>
    %232 = arith.mulf %231, %230 : vector<16x32xf32>
    %233 = arith.addf %228, %232 : vector<16x32xf32>
    %234 = vector.extract_strided_slice %150 {offsets = [4, 0, 0], sizes = [1, 16, 32], strides = [1, 1, 1]} : vector<8x16x32xf32> to vector<1x16x32xf32>
    %235 = vector.shape_cast %234 : vector<1x16x32xf32> to vector<16x32xf32>
    %cst_78 = arith.constant 0.333333343 : f32
    %236 = vector.broadcast %cst_78 : f32 to vector<16x32xf32>
    %237 = arith.mulf %236, %235 : vector<16x32xf32>
    %238 = vector.extract_strided_slice %150 {offsets = [5, 0, 0], sizes = [1, 16, 32], strides = [1, 1, 1]} : vector<8x16x32xf32> to vector<1x16x32xf32>
    %239 = vector.shape_cast %238 : vector<1x16x32xf32> to vector<16x32xf32>
    %cst_79 = arith.constant 0.666666686 : f32
    %240 = vector.broadcast %cst_79 : f32 to vector<16x32xf32>
    %241 = arith.mulf %240, %239 : vector<16x32xf32>
    %242 = arith.addf %237, %241 : vector<16x32xf32>
    %243 = vector.extract_strided_slice %150 {offsets = [5, 0, 0], sizes = [1, 16, 32], strides = [1, 1, 1]} : vector<8x16x32xf32> to vector<1x16x32xf32>
    %244 = vector.shape_cast %243 : vector<1x16x32xf32> to vector<16x32xf32>
    %cst_80 = arith.constant 0.866666674 : f32
    %245 = vector.broadcast %cst_80 : f32 to vector<16x32xf32>
    %246 = arith.mulf %245, %244 : vector<16x32xf32>
    %247 = vector.extract_strided_slice %150 {offsets = [6, 0, 0], sizes = [1, 16, 32], strides = [1, 1, 1]} : vector<8x16x32xf32> to vector<1x16x32xf32>
    %248 = vector.shape_cast %247 : vector<1x16x32xf32> to vector<16x32xf32>
    %cst_81 = arith.constant 0.13333334 : f32
    %249 = vector.broadcast %cst_81 : f32 to vector<16x32xf32>
    %250 = arith.mulf %249, %248 : vector<16x32xf32>
    %251 = arith.addf %246, %250 : vector<16x32xf32>
    %252 = vector.extract_strided_slice %150 {offsets = [5, 0, 0], sizes = [1, 16, 32], strides = [1, 1, 1]} : vector<8x16x32xf32> to vector<1x16x32xf32>
    %253 = vector.shape_cast %252 : vector<1x16x32xf32> to vector<16x32xf32>
    %cst_82 = arith.constant 4.000000e-01 : f32
    %254 = vector.broadcast %cst_82 : f32 to vector<16x32xf32>
    %255 = arith.mulf %254, %253 : vector<16x32xf32>
    %256 = vector.extract_strided_slice %150 {offsets = [6, 0, 0], sizes = [1, 16, 32], strides = [1, 1, 1]} : vector<8x16x32xf32> to vector<1x16x32xf32>
    %257 = vector.shape_cast %256 : vector<1x16x32xf32> to vector<16x32xf32>
    %cst_83 = arith.constant 6.000000e-01 : f32
    %258 = vector.broadcast %cst_83 : f32 to vector<16x32xf32>
    %259 = arith.mulf %258, %257 : vector<16x32xf32>
    %260 = arith.addf %255, %259 : vector<16x32xf32>
    %261 = vector.extract_strided_slice %150 {offsets = [6, 0, 0], sizes = [1, 16, 32], strides = [1, 1, 1]} : vector<8x16x32xf32> to vector<1x16x32xf32>
    %262 = vector.shape_cast %261 : vector<1x16x32xf32> to vector<16x32xf32>
    %cst_84 = arith.constant 0.933333337 : f32
    %263 = vector.broadcast %cst_84 : f32 to vector<16x32xf32>
    %264 = arith.mulf %263, %262 : vector<16x32xf32>
    %265 = vector.extract_strided_slice %150 {offsets = [7, 0, 0], sizes = [1, 16, 32], strides = [1, 1, 1]} : vector<8x16x32xf32> to vector<1x16x32xf32>
    %266 = vector.shape_cast %265 : vector<1x16x32xf32> to vector<16x32xf32>
    %cst_85 = arith.constant 0.0666666701 : f32
    %267 = vector.broadcast %cst_85 : f32 to vector<16x32xf32>
    %268 = arith.mulf %267, %266 : vector<16x32xf32>
    %269 = arith.addf %264, %268 : vector<16x32xf32>
    %270 = vector.extract_strided_slice %150 {offsets = [6, 0, 0], sizes = [1, 16, 32], strides = [1, 1, 1]} : vector<8x16x32xf32> to vector<1x16x32xf32>
    %271 = vector.shape_cast %270 : vector<1x16x32xf32> to vector<16x32xf32>
    %cst_86 = arith.constant 0.466666669 : f32
    %272 = vector.broadcast %cst_86 : f32 to vector<16x32xf32>
    %273 = arith.mulf %272, %271 : vector<16x32xf32>
    %274 = vector.extract_strided_slice %150 {offsets = [7, 0, 0], sizes = [1, 16, 32], strides = [1, 1, 1]} : vector<8x16x32xf32> to vector<1x16x32xf32>
    %275 = vector.shape_cast %274 : vector<1x16x32xf32> to vector<16x32xf32>
    %cst_87 = arith.constant 0.533333361 : f32
    %276 = vector.broadcast %cst_87 : f32 to vector<16x32xf32>
    %277 = arith.mulf %276, %275 : vector<16x32xf32>
    %278 = arith.addf %273, %277 : vector<16x32xf32>
    %279 = vector.extract_strided_slice %150 {offsets = [7, 0, 0], sizes = [1, 16, 32], strides = [1, 1, 1]} : vector<8x16x32xf32> to vector<1x16x32xf32>
    %280 = vector.shape_cast %279 : vector<1x16x32xf32> to vector<16x32xf32>
    %281 = vector.shape_cast %152 : vector<16x32xf32> to vector<1x16x32xf32>
    %282 = vector.shape_cast %161 : vector<16x32xf32> to vector<1x16x32xf32>
    %283 = vector.shape_cast %170 : vector<16x32xf32> to vector<1x16x32xf32>
    %284 = vector.shape_cast %179 : vector<16x32xf32> to vector<1x16x32xf32>
    %285 = vector.shape_cast %188 : vector<16x32xf32> to vector<1x16x32xf32>
    %286 = vector.shape_cast %197 : vector<16x32xf32> to vector<1x16x32xf32>
    %287 = vector.shape_cast %206 : vector<16x32xf32> to vector<1x16x32xf32>
    %288 = vector.shape_cast %215 : vector<16x32xf32> to vector<1x16x32xf32>
    %289 = vector.shape_cast %224 : vector<16x32xf32> to vector<1x16x32xf32>
    %290 = vector.shape_cast %233 : vector<16x32xf32> to vector<1x16x32xf32>
    %291 = vector.shape_cast %242 : vector<16x32xf32> to vector<1x16x32xf32>
    %292 = vector.shape_cast %251 : vector<16x32xf32> to vector<1x16x32xf32>
    %293 = vector.shape_cast %260 : vector<16x32xf32> to vector<1x16x32xf32>
    %294 = vector.shape_cast %269 : vector<16x32xf32> to vector<1x16x32xf32>
    %295 = vector.shape_cast %278 : vector<16x32xf32> to vector<1x16x32xf32>
    %296 = vector.shape_cast %280 : vector<16x32xf32> to vector<1x16x32xf32>
    %297 = tpu.concatenate %281, %282, %283, %284, %285, %286, %287, %288, %289, %290, %291, %292, %293, %294, %295, %296 in 0 : vector<1x16x32xf32>, vector<1x16x32xf32>, vector<1x16x32xf32>, vector<1x16x32xf32>, vector<1x16x32xf32>, vector<1x16x32xf32>, vector<1x16x32xf32>, vector<1x16x32xf32>, vector<1x16x32xf32>, vector<1x16x32xf32>, vector<1x16x32xf32>, vector<1x16x32xf32>, vector<1x16x32xf32>, vector<1x16x32xf32>, vector<1x16x32xf32>, vector<1x16x32xf32> -> vector<16x16x32xf32>
    %c0_88 = arith.constant 0 : index
    %c0_89 = arith.constant 0 : index
    %c0_90 = arith.constant 0 : index
    %c0_91 = arith.constant 0 : index
    %298 = vector.load %arg12[%c0_88, %c0_89, %c0_90, %c0_91] : memref<1x16x16x32xf32, #tpu.memory_space<vmem>>, vector<1x16x16x32xf32>
    %299 = vector.shape_cast %298 : vector<1x16x16x32xf32> to vector<16x16x32xf32>
    %300 = vector.shape_cast %297 : vector<16x16x32xf32> to vector<1x16x16x32xf32>
    tpu.vector_store %arg12[%c0_88, %c0_89, %c0_90, %c0_91], %300 {strides = array<i32>} : memref<1x16x16x32xf32, #tpu.memory_space<vmem>>, vector<1x16x16x32xf32>,
    return
  }
  func.func @transform_0(%arg0: i32) -> (i32, i32, i32, i32) {
    %c0_i32 = arith.constant 0 : i32
    %c0_i32_0 = arith.constant 0 : i32
    %c0_i32_1 = arith.constant 0 : i32
    %c0_i32_2 = arith.constant 0 : i32
    return %arg0, %c0_i32, %c0_i32_0, %c0_i32_1 : i32, i32, i32, i32
  }
  func.func @transform_1(%arg0: i32) -> (i32, i32, i32, i32) {
    %c0_i32 = arith.constant 0 : i32
    %c0_i32_0 = arith.constant 0 : i32
    %c0_i32_1 = arith.constant 0 : i32
    %c0_i32_2 = arith.constant 0 : i32
    return %arg0, %c0_i32, %c0_i32_0, %c0_i32_1 : i32, i32, i32, i32
  }
  func.func @transform_2(%arg0: i32) -> (i32, i32, i32, i32) {
    %c0_i32 = arith.constant 0 : i32
    %c0_i32_0 = arith.constant 0 : i32
    %c0_i32_1 = arith.constant 0 : i32
    %c0_i32_2 = arith.constant 0 : i32
    return %arg0, %c0_i32, %c0_i32_0, %c0_i32_1 : i32, i32, i32, i32
  }
  func.func @transform_3(%arg0: i32) -> (i32, i32) {
    %c0_i32 = arith.constant 0 : i32
    %c0_i32_0 = arith.constant 0 : i32
    %c0_i32_1 = arith.constant 0 : i32
    return %c0_i32, %c0_i32_0 : i32, i32
  }
  func.func @transform_4(%arg0: i32) -> (i32, i32) {
    %c0_i32 = arith.constant 0 : i32
    %c0_i32_0 = arith.constant 0 : i32
    %c0_i32_1 = arith.constant 0 : i32
    return %c0_i32, %c0_i32_0 : i32, i32
  }
  func.func @transform_5(%arg0: i32) -> (i32, i32) {
    %c0_i32 = arith.constant 0 : i32
    %c0_i32_0 = arith.constant 0 : i32
    %c0_i32_1 = arith.constant 0 : i32
    return %c0_i32, %c0_i32_0 : i32, i32
  }
  func.func @transform_6(%arg0: i32) -> (i32, i32) {
    %c0_i32 = arith.constant 0 : i32
    %c0_i32_0 = arith.constant 0 : i32
    %c0_i32_1 = arith.constant 0 : i32
    return %c0_i32, %c0_i32_0 : i32, i32
  }
  func.func @transform_7(%arg0: i32) -> (i32, i32) {
    %c0_i32 = arith.constant 0 : i32
    %c0_i32_0 = arith.constant 0 : i32
    %c0_i32_1 = arith.constant 0 : i32
    return %c0_i32, %c0_i32_0 : i32, i32
  }
  func.func @transform_8(%arg0: i32) -> (i32, i32) {
    %c0_i32 = arith.constant 0 : i32
    %c0_i32_0 = arith.constant 0 : i32
    %c0_i32_1 = arith.constant 0 : i32
    return %c0_i32, %c0_i32_0 : i32, i32
  }
  func.func @transform_9(%arg0: i32) -> (i32, i32) {
    %c0_i32 = arith.constant 0 : i32
    %c0_i32_0 = arith.constant 0 : i32
    %c0_i32_1 = arith.constant 0 : i32
    return %c0_i32, %c0_i32_0 : i32, i32
  }
  func.func @transform_10(%arg0: i32) -> (i32, i32, i32, i32) {
    %c0_i32 = arith.constant 0 : i32
    %c0_i32_0 = arith.constant 0 : i32
    %c0_i32_1 = arith.constant 0 : i32
    %c0_i32_2 = arith.constant 0 : i32
    return %arg0, %c0_i32, %c0_i32_0, %c0_i32_1 : i32, i32, i32, i32
  }
  func.func @transform_11(%arg0: i32) -> (i32, i32, i32, i32) {
    %c0_i32 = arith.constant 0 : i32
    %c0_i32_0 = arith.constant 0 : i32
    %c0_i32_1 = arith.constant 0 : i32
    %c0_i32_2 = arith.constant 0 : i32
    return %arg0, %c0_i32, %c0_i32_0, %c0_i32_1 : i32, i32, i32, i32
  }
}

</mosaic_0001>

<llo_original>
// kernel: semantic_interaction_forward.1
$region0: #{semantic_interaction_forward.1}
  #allocation0 [shape = 'u32[]', space=smem, size = 0x4, offset = 0x4, fixed_abs, tag = 'smem constant byte address 0x4 - core index']
  #allocation1 [shape = 'u32[144,128]{1,0:T(1,128)}', space=vmem, size = 0x12000, scoped, tag = 'internal scratch']
  %s0 = inlined_call_operand.vmem [shape: bf16[2,10,10,16], index: 0, kind: input, shape index: {}]
  %s1 = inlined_call_operand.vmem [shape: bf16[2,8,8,16], index: 1, kind: input, shape index: {}]
  %s2 = inlined_call_operand.vmem [shape: bf16[2,10,10,16], index: 2, kind: input, shape index: {}]
  %s3 = inlined_call_operand.vmem [shape: bf16[144,32], index: 3, kind: input, shape index: {}]
  %s4 = inlined_call_operand.vmem [shape: f32[3,32], index: 4, kind: input, shape index: {}]
  %s5 = inlined_call_operand.vmem [shape: bf16[16,32], index: 5, kind: input, shape index: {}]
  %s6 = inlined_call_operand.vmem [shape: f32[3,32], index: 6, kind: input, shape index: {}]
  %s7 = inlined_call_operand.vmem [shape: bf16[144,32], index: 7, kind: input, shape index: {}]
  %s8 = inlined_call_operand.vmem [shape: f32[3,32], index: 8, kind: input, shape index: {}]
  %s9 = inlined_call_operand.vmem [shape: bf16[16,8], index: 9, kind: input, shape index: {}]
  %s10 = inlined_call_operand.hbm [shape: f32[2,8,8,32], index: 10, kind: output, shape index: {0}]
  %s11 = inlined_call_operand.hbm [shape: f32[2,16,16,32], index: 11, kind: output, shape index: {1}]
  %12 = xla_tuple %s10, %s11
  %s13 = sld [smem:[#allocation0]]
  $region81: #{semantic_interaction_forward.1} parent=0
    _
  %s15 = ssub.s32 1, %s13
  %s16 = scalar_select 0, %s15, %s13
  $region1: #{semantic_interaction_forward.1} parent=0
    #allocation2 [shape = 'u8[65536]{0}', space=vmem, size = 0x10000, scoped, tag = 'output window, operand 0']
    #allocation3 [shape = 's32[2]{0}', space=sflag, size = 0x8, scoped, tag = 'scoped memory for semantic_interaction_forward.1']
    #allocation4 [shape = 'u8[262144]{0}', space=vmem, size = 0x40000, scoped, tag = 'output window, operand 1']
    #allocation5 [shape = 's32[2]{0}', space=sflag, size = 0x8, scoped, tag = 'scoped memory for semantic_interaction_forward.1']
    %17 = vsyncpa [#allocation3], 0
    %s18 = scalar_lea.sflag [#allocation3], 1
    %19 = vsyncpa %s18, 0
    %20 = vsyncpa [#allocation5], 0
    %s21 = scalar_lea.sflag [#allocation5], 1
    %22 = vsyncpa %s21, 0
    loop: start=0, step=1, limit=4
    $region2: #{semantic_interaction_forward.1} parent=1 // loop_pre_header
      _
    $region3: #{semantic_interaction_forward.1} parent=1 // loop_header
      %s24 = sphi 0, %s28
      %p25 = scmp.ge.s32.totalorder %s24, 4
      %s34 = sphi 0, %s36
      %s37 = sphi 0, %s34
      %s38 = sphi 0, %s37
      %s54 = sphi 0, %s38
      %s60 = sphi 0, %s62
      %s63 = sphi 0, %s60
      %s64 = sphi 0, %s63
      %s80 = sphi 0, %s64
      %s86 = sphi 0, %s88
      %s89 = sphi 0, %s86
      %s90 = sphi 0, %s89
      %s106 = sphi 0, %s90
      %s110 = sphi 0, %s110
      %s112 = sphi 0, %s110
      %s113 = sphi 0, %s112
      %s127 = sphi 0, %s113
      %s131 = sphi 0, %s131
      %s133 = sphi 0, %s131
      %s134 = sphi 0, %s133
      %s148 = sphi 0, %s134
      %s152 = sphi 0, %s152
      %s154 = sphi 0, %s152
      %s155 = sphi 0, %s154
      %s169 = sphi 0, %s155
      %s173 = sphi 0, %s173
      %s175 = sphi 0, %s173
      %s176 = sphi 0, %s175
      %s190 = sphi 0, %s176
      %s194 = sphi 0, %s194
      %s196 = sphi 0, %s194
      %s197 = sphi 0, %s196
      %s211 = sphi 0, %s197
      %s215 = sphi 0, %s215
      %s217 = sphi 0, %s215
      %s218 = sphi 0, %s217
      %s232 = sphi 0, %s218
      %s236 = sphi 0, %s236
      %s238 = sphi 0, %s236
      %s239 = sphi 0, %s238
      %s253 = sphi 0, %s239
      %s259 = sphi 0, %s261
      %s262 = sphi 0, %s259
      %s263 = sphi 0, %s262
      %s279 = sphi 0, %s263
      %s285 = sphi 0, %s287
      %s288 = sphi 0, %s285
      %s289 = sphi 0, %s288
      %s305 = sphi 0, %s289
    $region4: #{semantic_interaction_forward.1} parent=1 // loop_header_branch
      %27 = sbr.rel (%p25) target = $region8
    $region5: #{semantic_interaction_forward.1} parent=1 // loop_body
      %s29 = ssub.s32 %s24, 1
      %s30 = ssub.s32 %s24, 2
      %s31 = sadd.s32 %s24, 1
      %s32 = ssub.s32 %s24, %s31
      %p33 = scmp.eq.s32.totalorder %s32, 0
      %s35 = sadd.s32 %s34, 1
      %s36 = scalar_select %p33, %s34, %s35
      %p39 = pneg %p33
      %p40 = scmp.eq.s32.totalorder %s24, 1
      %p41 = por %p39, %p40
      %p42 = scmp.ne.s32.totalorder %s34, %s37
      %p43 = scmp.eq.s32.totalorder %s24, 0
      %p44 = por %p42, %p43
      %p45 = scmp.ne.s32.totalorder %s34, %s37
      %p46 = scmp.eq.s32.totalorder %s29, 1
      %p47 = por %p45, %p46
      %p48 = scmp.ne.s32.totalorder %s37, %s38
      %p49 = scmp.eq.s32.totalorder %s29, 0
      %p50 = por %p48, %p49
      %p51 = scmp.ne.s32.totalorder %s37, %s38
      %p52 = scmp.eq.s32.totalorder %s30, 1
      %p53 = por %p51, %p52
      %p55 = scmp.ne.s32.totalorder %s38, %s54
      %p56 = scmp.eq.s32.totalorder %s30, 0
      %p57 = por %p55, %p56
      %s58 = ssub.s32 %s24, %s31
      %p59 = scmp.eq.s32.totalorder %s58, 0
      %s61 = sadd.s32 %s60, 1
      %s62 = scalar_select %p59, %s60, %s61
      %p65 = pneg %p59
      %p66 = scmp.eq.s32.totalorder %s24, 1
      %p67 = por %p65, %p66
      %p68 = scmp.ne.s32.totalorder %s60, %s63
      %p69 = scmp.eq.s32.totalorder %s24, 0
      %p70 = por %p68, %p69
      %p71 = scmp.ne.s32.totalorder %s60, %s63
      %p72 = scmp.eq.s32.totalorder %s29, 1
      %p73 = por %p71, %p72
      %p74 = scmp.ne.s32.totalorder %s63, %s64
      %p75 = scmp.eq.s32.totalorder %s29, 0
      %p76 = por %p74, %p75
      %p77 = scmp.ne.s32.totalorder %s63, %s64
      %p78 = scmp.eq.s32.totalorder %s30, 1
      %p79 = por %p77, %p78
      %p81 = scmp.ne.s32.totalorder %s64, %s80
      %p82 = scmp.eq.s32.totalorder %s30, 0
      %p83 = por %p81, %p82
      %s84 = ssub.s32 %s24, %s31
      %p85 = scmp.eq.s32.totalorder %s84, 0
      %s87 = sadd.s32 %s86, 1
      %s88 = scalar_select %p85, %s86, %s87
      %p91 = pneg %p85
      %p92 = scmp.eq.s32.totalorder %s24, 1
      %p93 = por %p91, %p92
      %p94 = scmp.ne.s32.totalorder %s86, %s89
      %p95 = scmp.eq.s32.totalorder %s24, 0
      %p96 = por %p94, %p95
      %p97 = scmp.ne.s32.totalorder %s86, %s89
      %p98 = scmp.eq.s32.totalorder %s29, 1
      %p99 = por %p97, %p98
      %p100 = scmp.ne.s32.totalorder %s89, %s90
      %p101 = scmp.eq.s32.totalorder %s29, 0
      %p102 = por %p100, %p101
      %p103 = scmp.ne.s32.totalorder %s89, %s90
      %p104 = scmp.eq.s32.totalorder %s30, 1
      %p105 = por %p103, %p104
      %p107 = scmp.ne.s32.totalorder %s90, %s106
      %p108 = scmp.eq.s32.totalorder %s30, 0
      %p109 = por %p107, %p108
      %s111 = sadd.s32 %s110, 1
      %p114 = scmp.eq.s32.totalorder %s24, 1
      %p115 = scmp.ne.s32.totalorder %s110, %s112
      %p116 = scmp.eq.s32.totalorder %s24, 0
      %p117 = por %p115, %p116
      %p118 = scmp.ne.s32.totalorder %s110, %s112
      %p119 = scmp.eq.s32.totalorder %s29, 1
      %p120 = por %p118, %p119
      %p121 = scmp.ne.s32.totalorder %s112, %s113
      %p122 = scmp.eq.s32.totalorder %s29, 0
      %p123 = por %p121, %p122
      %p124 = scmp.ne.s32.totalorder %s112, %s113
      %p125 = scmp.eq.s32.totalorder %s30, 1
      %p126 = por %p124, %p125
      %p128 = scmp.ne.s32.totalorder %s113, %s127
      %p129 = scmp.eq.s32.totalorder %s30, 0
      %p130 = por %p128, %p129
      %s132 = sadd.s32 %s131, 1
      %p135 = scmp.eq.s32.totalorder %s24, 1
      %p136 = scmp.ne.s32.totalorder %s131, %s133
      %p137 = scmp.eq.s32.totalorder %s24, 0
      %p138 = por %p136, %p137
      %p139 = scmp.ne.s32.totalorder %s131, %s133
      %p140 = scmp.eq.s32.totalorder %s29, 1
      %p141 = por %p139, %p140
      %p142 = scmp.ne.s32.totalorder %s133, %s134
      %p143 = scmp.eq.s32.totalorder %s29, 0
      %p144 = por %p142, %p143
      %p145 = scmp.ne.s32.totalorder %s133, %s134
      %p146 = scmp.eq.s32.totalorder %s30, 1
      %p147 = por %p145, %p146
      %p149 = scmp.ne.s32.totalorder %s134, %s148
      %p150 = scmp.eq.s32.totalorder %s30, 0
      %p151 = por %p149, %p150
      %s153 = sadd.s32 %s152, 1
      %p156 = scmp.eq.s32.totalorder %s24, 1
      %p157 = scmp.ne.s32.totalorder %s152, %s154
      %p158 = scmp.eq.s32.totalorder %s24, 0
      %p159 = por %p157, %p158
      %p160 = scmp.ne.s32.totalorder %s152, %s154
      %p161 = scmp.eq.s32.totalorder %s29, 1
      %p162 = por %p160, %p161
      %p163 = scmp.ne.s32.totalorder %s154, %s155
      %p164 = scmp.eq.s32.totalorder %s29, 0
      %p165 = por %p163, %p164
      %p166 = scmp.ne.s32.totalorder %s154, %s155
      %p167 = scmp.eq.s32.totalorder %s30, 1
      %p168 = por %p166, %p167
      %p170 = scmp.ne.s32.totalorder %s155, %s169
      %p171 = scmp.eq.s32.totalorder %s30, 0
      %p172 = por %p170, %p171
      %s174 = sadd.s32 %s173, 1
      %p177 = scmp.eq.s32.totalorder %s24, 1
      %p178 = scmp.ne.s32.totalorder %s173, %s175
      %p179 = scmp.eq.s32.totalorder %s24, 0
      %p180 = por %p178, %p179
      %p181 = scmp.ne.s32.totalorder %s173, %s175
      %p182 = scmp.eq.s32.totalorder %s29, 1
      %p183 = por %p181, %p182
      %p184 = scmp.ne.s32.totalorder %s175, %s176
      %p185 = scmp.eq.s32.totalorder %s29, 0
      %p186 = por %p184, %p185
      %p187 = scmp.ne.s32.totalorder %s175, %s176
      %p188 = scmp.eq.s32.totalorder %s30, 1
      %p189 = por %p187, %p188
      %p191 = scmp.ne.s32.totalorder %s176, %s190
      %p192 = scmp.eq.s32.totalorder %s30, 0
      %p193 = por %p191, %p192
      %s195 = sadd.s32 %s194, 1
      %p198 = scmp.eq.s32.totalorder %s24, 1
      %p199 = scmp.ne.s32.totalorder %s194, %s196
      %p200 = scmp.eq.s32.totalorder %s24, 0
      %p201 = por %p199, %p200
      %p202 = scmp.ne.s32.totalorder %s194, %s196
      %p203 = scmp.eq.s32.totalorder %s29, 1
      %p204 = por %p202, %p203
      %p205 = scmp.ne.s32.totalorder %s196, %s197
      %p206 = scmp.eq.s32.totalorder %s29, 0
      %p207 = por %p205, %p206
      %p208 = scmp.ne.s32.totalorder %s196, %s197
      %p209 = scmp.eq.s32.totalorder %s30, 1
      %p210 = por %p208, %p209
      %p212 = scmp.ne.s32.totalorder %s197, %s211
      %p213 = scmp.eq.s32.totalorder %s30, 0
      %p214 = por %p212, %p213
      %s216 = sadd.s32 %s215, 1
      %p219 = scmp.eq.s32.totalorder %s24, 1
      %p220 = scmp.ne.s32.totalorder %s215, %s217
      %p221 = scmp.eq.s32.totalorder %s24, 0
      %p222 = por %p220, %p221
      %p223 = scmp.ne.s32.totalorder %s215, %s217
      %p224 = scmp.eq.s32.totalorder %s29, 1
      %p225 = por %p223, %p224
      %p226 = scmp.ne.s32.totalorder %s217, %s218
      %p227 = scmp.eq.s32.totalorder %s29, 0
      %p228 = por %p226, %p227
      %p229 = scmp.ne.s32.totalorder %s217, %s218
      %p230 = scmp.eq.s32.totalorder %s30, 1
      %p231 = por %p229, %p230
      %p233 = scmp.ne.s32.totalorder %s218, %s232
      %p234 = scmp.eq.s32.totalorder %s30, 0
      %p235 = por %p233, %p234
      %s237 = sadd.s32 %s236, 1
      %p240 = scmp.eq.s32.totalorder %s24, 1
      %p241 = scmp.ne.s32.totalorder %s236, %s238
      %p242 = scmp.eq.s32.totalorder %s24, 0
      %p243 = por %p241, %p242
      %p244 = scmp.ne.s32.totalorder %s236, %s238
      %p245 = scmp.eq.s32.totalorder %s29, 1
      %p246 = por %p244, %p245
      %p247 = scmp.ne.s32.totalorder %s238, %s239
      %p248 = scmp.eq.s32.totalorder %s29, 0
      %p249 = por %p247, %p248
      %p250 = scmp.ne.s32.totalorder %s238, %s239
      %p251 = scmp.eq.s32.totalorder %s30, 1
      %p252 = por %p250, %p251
      %p254 = scmp.ne.s32.totalorder %s239, %s253
      %p255 = scmp.eq.s32.totalorder %s30, 0
      %p256 = por %p254, %p255
      %s257 = ssub.s32 %s24, %s31
      %p258 = scmp.eq.s32.totalorder %s257, 0
      %s260 = sadd.s32 %s259, 1
      %s261 = scalar_select %p258, %s259, %s260
      %p264 = pneg %p258
      %p265 = scmp.eq.s32.totalorder %s24, 1
      %p266 = por %p264, %p265
      %p267 = scmp.ne.s32.totalorder %s259, %s262
      %p268 = scmp.eq.s32.totalorder %s24, 0
      %p269 = por %p267, %p268
      %p270 = scmp.ne.s32.totalorder %s259, %s262
      %p271 = scmp.eq.s32.totalorder %s29, 1
      %p272 = por %p270, %p271
      %p273 = scmp.ne.s32.totalorder %s262, %s263
      %p274 = scmp.eq.s32.totalorder %s29, 0
      %p275 = por %p273, %p274
      %p276 = scmp.ne.s32.totalorder %s262, %s263
      %p277 = scmp.eq.s32.totalorder %s30, 1
      %p278 = por %p276, %p277
      %p280 = scmp.ne.s32.totalorder %s263, %s279
      %p281 = scmp.eq.s32.totalorder %s30, 0
      %p282 = por %p280, %p281
      %s283 = ssub.s32 %s24, %s31
      %p284 = scmp.eq.s32.totalorder %s283, 0
      %s286 = sadd.s32 %s285, 1
      %s287 = scalar_select %p284, %s285, %s286
      %p290 = pneg %p284
      %p291 = scmp.eq.s32.totalorder %s24, 1
      %p292 = por %p290, %p291
      %p293 = scmp.ne.s32.totalorder %s285, %s288
      %p294 = scmp.eq.s32.totalorder %s24, 0
      %p295 = por %p293, %p294
      %p296 = scmp.ne.s32.totalorder %s285, %s288
      %p297 = scmp.eq.s32.totalorder %s29, 1
      %p298 = por %p296, %p297
      %p299 = scmp.ne.s32.totalorder %s288, %s289
      %p300 = scmp.eq.s32.totalorder %s29, 0
      %p301 = por %p299, %p300
      %p302 = scmp.ne.s32.totalorder %s288, %s289
      %p303 = scmp.eq.s32.totalorder %s30, 1
      %p304 = por %p302, %p303
      %p306 = scmp.ne.s32.totalorder %s289, %s305
      %p307 = scmp.eq.s32.totalorder %s30, 0
      %p308 = por %p306, %p307
      %p309 = scmp.le.s32.totalorder 1, %s24
      %p310 = scmp.lt.s32.totalorder %s24, 3
      %p311 = pnand %p309, %p310
      %p312 = pneg %p311
      // Predicated region
      $region9: #{semantic_interaction_forward.1} parent=5 // pred_check
        _
      $region10: #{semantic_interaction_forward.1} parent=5 // pred_check_branch
        %314 = sbr.rel (%p311) target = $region12
      $region11: #{semantic_interaction_forward.1} parent=5 // pred_region
        %s315 = ssub.s32 %s24, 1
        // Predicated region
        $region13: #{semantic_interaction_forward.1} parent=11 // pred_check
          %p316 = pneg %p123
        $region14: #{semantic_interaction_forward.1} parent=11 // pred_check_branch
          %318 = sbr.rel (%p316) target = $region16
        $region15: #{semantic_interaction_forward.1} parent=11 // pred_region
          _
        $region16: #{semantic_interaction_forward.1} parent=11 // pred_fallthru
          _
        // Predicated region
        $region17: #{semantic_interaction_forward.1} parent=11 // pred_check
          %p319 = pneg %p144
        $region18: #{semantic_interaction_forward.1} parent=11 // pred_check_branch
          %321 = sbr.rel (%p319) target = $region20
        $region19: #{semantic_interaction_forward.1} parent=11 // pred_region
          _
        $region20: #{semantic_interaction_forward.1} parent=11 // pred_fallthru
          _
        // Predicated region
        $region21: #{semantic_interaction_forward.1} parent=11 // pred_check
          %p322 = pneg %p165
        $region22: #{semantic_interaction_forward.1} parent=11 // pred_check_branch
          %324 = sbr.rel (%p322) target = $region24
        $region23: #{semantic_interaction_forward.1} parent=11 // pred_region
          _
        $region24: #{semantic_interaction_forward.1} parent=11 // pred_fallthru
          _
        // Predicated region
        $region25: #{semantic_interaction_forward.1} parent=11 // pred_check
          %p325 = pneg %p186
        $region26: #{semantic_interaction_forward.1} parent=11 // pred_check_branch
          %327 = sbr.rel (%p325) target = $region28
        $region27: #{semantic_interaction_forward.1} parent=11 // pred_region
          _
        $region28: #{semantic_interaction_forward.1} parent=11 // pred_fallthru
          _
        // Predicated region
        $region29: #{semantic_interaction_forward.1} parent=11 // pred_check
          %p328 = pneg %p207
        $region30: #{semantic_interaction_forward.1} parent=11 // pred_check_branch
          %330 = sbr.rel (%p328) target = $region32
        $region31: #{semantic_interaction_forward.1} parent=11 // pred_region
          _
        $region32: #{semantic_interaction_forward.1} parent=11 // pred_fallthru
          _
        // Predicated region
        $region33: #{semantic_interaction_forward.1} parent=11 // pred_check
          %p331 = pneg %p228
        $region34: #{semantic_interaction_forward.1} parent=11 // pred_check_branch
          %333 = sbr.rel (%p331) target = $region36
        $region35: #{semantic_interaction_forward.1} parent=11 // pred_region
          _
        $region36: #{semantic_interaction_forward.1} parent=11 // pred_fallthru
          _
        // Predicated region
        $region37: #{semantic_interaction_forward.1} parent=11 // pred_check
          %p334 = pneg %p249
        $region38: #{semantic_interaction_forward.1} parent=11 // pred_check_branch
          %336 = sbr.rel (%p334) target = $region40
        $region39: #{semantic_interaction_forward.1} parent=11 // pred_region
          _
        $region40: #{semantic_interaction_forward.1} parent=11 // pred_fallthru
          _
      $region12: #{semantic_interaction_forward.1} parent=5 // pred_fallthru
        _
      %p337 = scmp.lt.s32.totalorder %s24, 2
      // Predicated region
      $region41: #{semantic_interaction_forward.1} parent=5 // pred_check
        %p338 = pneg %p337
      $region42: #{semantic_interaction_forward.1} parent=5 // pred_check_branch
        %340 = sbr.rel (%p338) target = $region44
      $region43: #{semantic_interaction_forward.1} parent=5 // pred_region
        // Predicated region
        $region45: #{semantic_interaction_forward.1} parent=43 // pred_check
          %p341 = pneg %p44
        $region46: #{semantic_interaction_forward.1} parent=43 // pred_check_branch
          %343 = sbr.rel (%p341) target = $region48
        $region47: #{semantic_interaction_forward.1} parent=43 // pred_region
          %p344 = scmp.lt.s32.totalorder %s24, 1
          %s345 = scalar_select %p344, %s24, 1
          %s346 = smul.addr %s345, 20
          %s347 = smul.addr %s346, 4
          %s348 = scalar_lea.vmem %s0, %s347
        $region48: #{semantic_interaction_forward.1} parent=43 // pred_fallthru
          _
        // Predicated region
        $region49: #{semantic_interaction_forward.1} parent=43 // pred_check
          %p349 = pneg %p70
        $region50: #{semantic_interaction_forward.1} parent=43 // pred_check_branch
          %351 = sbr.rel (%p349) target = $region52
        $region51: #{semantic_interaction_forward.1} parent=43 // pred_region
          %p352 = scmp.lt.s32.totalorder %s24, 1
          %s353 = scalar_select %p352, %s24, 1
          %s354 = smul.addr %s353, 8
          %s355 = smul.addr %s354, 4
          %s356 = scalar_lea.vmem %s1, %s355
        $region52: #{semantic_interaction_forward.1} parent=43 // pred_fallthru
          _
        // Predicated region
        $region53: #{semantic_interaction_forward.1} parent=43 // pred_check
          %p357 = pneg %p96
        $region54: #{semantic_interaction_forward.1} parent=43 // pred_check_branch
          %359 = sbr.rel (%p357) target = $region56
        $region55: #{semantic_interaction_forward.1} parent=43 // pred_region
          %p360 = scmp.lt.s32.totalorder %s24, 1
          %s361 = scalar_select %p360, %s24, 1
          %s362 = smul.addr %s361, 20
          %s363 = smul.addr %s362, 4
          %s364 = scalar_lea.vmem %s2, %s363
        $region56: #{semantic_interaction_forward.1} parent=43 // pred_fallthru
          _
      $region44: #{semantic_interaction_forward.1} parent=5 // pred_fallthru
        _
      %p365 = scmp.le.s32.totalorder 1, %s24
      %p366 = scmp.lt.s32.totalorder %s24, 3
      %p367 = pnand %p365, %p366
      %p368 = pneg %p367
      // Predicated region
      $region57: #{semantic_interaction_forward.1} parent=5 // pred_check
        _
      $region58: #{semantic_interaction_forward.1} parent=5 // pred_check_branch
        %370 = sbr.rel (%p367) target = $region60
      $region59: #{semantic_interaction_forward.1} parent=5 // pred_region
        %s371 = ssub.s32 %s24, 1
        %p372 = scmp.lt.s32.totalorder %s29, 1
        %s373 = scalar_select %p372, %s29, 1
        %s374 = smul.addr %s373, 20
        %s375 = smul.addr %s374, 4
        %s376 = scalar_lea.vmem %s0, %s375
        %p377 = pneg %p50
        %p378 = pneg %p47
        %p379 = scmp.lt.s32.totalorder %s29, 1
        %s380 = scalar_select %p379, %s29, 1
        %s381 = smul.addr %s380, 8
        %s382 = smul.addr %s381, 4
        %s383 = scalar_lea.vmem %s1, %s382
        %p384 = pneg %p76
        %p385 = pneg %p73
        %p386 = scmp.lt.s32.totalorder %s29, 1
        %s387 = scalar_select %p386, %s29, 1
        %s388 = smul.addr %s387, 20
        %s389 = smul.addr %s388, 4
        %s390 = scalar_lea.vmem %s2, %s389
        %p391 = pneg %p102
        %p392 = pneg %p99
        %p393 = pneg %p123
        %p394 = pneg %p120
        %p395 = pneg %p144
        %p396 = pneg %p141
        %p397 = pneg %p165
        %p398 = pneg %p162
        %p399 = pneg %p186
        %p400 = pneg %p183
        %p401 = pneg %p207
        %p402 = pneg %p204
        %p403 = pneg %p228
        %p404 = pneg %p225
        %p405 = pneg %p249
        %p406 = pneg %p246
        %p407 = pneg %p275
        %p408 = pneg %p272
        %s409 = sand.u32 %s262, 1
        %s410 = scalar_lea.sflag [#allocation3], %s409
        %s411 = sand.u32 %s262, 1
        %s412 = smul.addr %s411, 64
        %s413 = scalar_lea.vmem [#allocation2], %s412
        %p414 = pneg %p301
        %p415 = pneg %p298
        %s416 = sand.u32 %s288, 1
        %s417 = scalar_lea.sflag [#allocation5], %s416
        %s418 = sand.u32 %s288, 1
        %s419 = smul.addr %s418, 256
        %s420 = scalar_lea.vmem [#allocation4], %s419
        %p421 = scmp.lt.s32.totalorder %s29, 1
        %s422 = scalar_select %p421, %s29, 1
        %s423 = smul.addr %s422, 20
        %s424 = smul.addr %s423, 4
        %s425 = scalar_lea.vmem %s0, %s424
        %p426 = scmp.lt.s32.totalorder %s29, 1
        %s427 = scalar_select %p426, %s29, 1
        %s428 = smul.addr %s427, 8
        %s429 = smul.addr %s428, 4
        %s430 = scalar_lea.vmem %s1, %s429
        %p431 = scmp.lt.s32.totalorder %s29, 1
        %s432 = scalar_select %p431, %s29, 1
        %s433 = smul.addr %s432, 20
        %s434 = smul.addr %s433, 4
        %s435 = scalar_lea.vmem %s2, %s434
        %v437 = vld [vmem:[%s425] sm:$0xf]
        %v438 = vld [vmem:[%s425 + $0x4] sm:$0x1]
        %v439 = vld [vmem:[%s425 + $0x8] sm:$0xf]
        %v440 = vld [vmem:[%s425 + $0xc] sm:$0x1]
        %v441 = vld [vmem:[%s425 + $0x10] sm:$0xf]
        %v442 = vld [vmem:[%s425 + $0x14] sm:$0x1]
        %v443 = vld [vmem:[%s425 + $0x18] sm:$0xf]
        %v444 = vld [vmem:[%s425 + $0x1c] sm:$0x1]
        %v445 = vld [vmem:[%s425 + $0x20] sm:$0xf]
        %v446 = vld [vmem:[%s425 + $0x24] sm:$0x1]
        %v447 = vld [vmem:[%s425 + $0x28] sm:$0xf]
        %v448 = vld [vmem:[%s425 + $0x2c] sm:$0x1]
        %v449 = vld [vmem:[%s425 + $0x30] sm:$0xf]
        %v450 = vld [vmem:[%s425 + $0x34] sm:$0x1]
        %v451 = vld [vmem:[%s425 + $0x38] sm:$0xf]
        %v452 = vld [vmem:[%s425 + $0x3c] sm:$0x1]
        %v453 = vld [vmem:[%s425 + $0x40] sm:$0xf]
        %v454 = vld [vmem:[%s425 + $0x44] sm:$0x1]
        %v455 = vld [vmem:[%s425 + $0x48] sm:$0xf]
        %v456 = vld [vmem:[%s425 + $0x4c] sm:$0x1]
        %vm457 = vsmask.f32 3328
        %vm458 = vsmask.f32 7440
        %vm459 = vmor %vm457, %vm458
        %v461 = vshrl.u32 %v437, 16
        %v463 = vrot.slane %v461, 4
        %v464 = vshll.u32 %v437, 16
        %v466 = vrot.slane %v464, 5
        %v467 = vor.u32 %v463, %v466
        %v468 = vrot.slane %v467, 4
        %v470 = vshll.u32 %v438, 16
        %v472 = vrot.slane %v470, 5
        %v473 = vsel %vm459, %v468, %v472
        %v475 = vshrl.u32 %v439, 16
        %v477 = vrot.slane %v475, 4
        %v478 = vshll.u32 %v439, 16
        %v480 = vrot.slane %v478, 5
        %v481 = vor.u32 %v477, %v480
        %v482 = vrot.slane %v481, 4
        %v484 = vshll.u32 %v440, 16
        %v486 = vrot.slane %v484, 5
        %v487 = vsel %vm459, %v482, %v486
        %v489 = vshrl.u32 %v441, 16
        %v491 = vrot.slane %v489, 4
        %v492 = vshll.u32 %v441, 16
        %v494 = vrot.slane %v492, 5
        %v495 = vor.u32 %v491, %v494
        %v496 = vrot.slane %v495, 4
        %v498 = vshll.u32 %v442, 16
        %v500 = vrot.slane %v498, 5
        %v501 = vsel %vm459, %v496, %v500
        %v503 = vshrl.u32 %v443, 16
        %v505 = vrot.slane %v503, 4
        %v506 = vshll.u32 %v443, 16
        %v508 = vrot.slane %v506, 5
        %v509 = vor.u32 %v505, %v508
        %v510 = vrot.slane %v509, 4
        %v512 = vshll.u32 %v444, 16
        %v514 = vrot.slane %v512, 5
        %v515 = vsel %vm459, %v510, %v514
        %v517 = vshrl.u32 %v445, 16
        %v519 = vrot.slane %v517, 4
        %v520 = vshll.u32 %v445, 16
        %v522 = vrot.slane %v520, 5
        %v523 = vor.u32 %v519, %v522
        %v524 = vrot.slane %v523, 4
        %v526 = vshll.u32 %v446, 16
        %v528 = vrot.slane %v526, 5
        %v529 = vsel %vm459, %v524, %v528
        %v531 = vshrl.u32 %v447, 16
        %v533 = vrot.slane %v531, 4
        %v534 = vshll.u32 %v447, 16
        %v536 = vrot.slane %v534, 5
        %v537 = vor.u32 %v533, %v536
        %v538 = vrot.slane %v537, 4
        %v540 = vshll.u32 %v448, 16
        %v542 = vrot.slane %v540, 5
        %v543 = vsel %vm459, %v538, %v542
        %v545 = vshrl.u32 %v449, 16
        %v547 = vrot.slane %v545, 4
        %v548 = vshll.u32 %v449, 16
        %v550 = vrot.slane %v548, 5
        %v551 = vor.u32 %v547, %v550
        %v552 = vrot.slane %v551, 4
        %v554 = vshll.u32 %v450, 16
        %v556 = vrot.slane %v554, 5
        %v557 = vsel %vm459, %v552, %v556
        %v559 = vshrl.u32 %v451, 16
        %v561 = vrot.slane %v559, 4
        %v562 = vshll.u32 %v451, 16
        %v564 = vrot.slane %v562, 5
        %v565 = vor.u32 %v561, %v564
        %v566 = vrot.slane %v565, 4
        %v568 = vshll.u32 %v452, 16
        %v570 = vrot.slane %v568, 5
        %v571 = vsel %vm459, %v566, %v570
        %vm588 = vcmask 1042432
        %vm589 = vcmask 1046532
        %vm590 = vmor %vm588, %vm589
        %v591 = vrot.slane %v437, 5
        %v592 = vrot.slane %v591, 4
        %v593 = vrot.slane %v438, 5
        %v594 = vsel %vm590, %v592, %v593
        %v595 = vrot.slane %v439, 5
        %v596 = vrot.slane %v595, 4
        %v597 = vrot.slane %v440, 5
        %v598 = vsel %vm590, %v596, %v597
        %v599 = vrot.slane %v441, 5
        %v600 = vrot.slane %v599, 4
        %v601 = vrot.slane %v442, 5
        %v602 = vsel %vm590, %v600, %v601
        %v603 = vrot.slane %v443, 5
        %v604 = vrot.slane %v603, 4
        %v605 = vrot.slane %v444, 5
        %v606 = vsel %vm590, %v604, %v605
        %v607 = vrot.slane %v445, 5
        %v608 = vrot.slane %v607, 4
        %v609 = vrot.slane %v446, 5
        %v610 = vsel %vm590, %v608, %v609
        %v611 = vrot.slane %v447, 5
        %v612 = vrot.slane %v611, 4
        %v613 = vrot.slane %v448, 5
        %v614 = vsel %vm590, %v612, %v613
        %v615 = vrot.slane %v449, 5
        %v616 = vrot.slane %v615, 4
        %v617 = vrot.slane %v450, 5
        %v618 = vsel %vm590, %v616, %v617
        %v619 = vrot.slane %v451, 5
        %v620 = vrot.slane %v619, 4
        %v621 = vrot.slane %v452, 5
        %v622 = vsel %vm590, %v620, %v621
        %v624 = vshrl.u32 %v453, 16
        %v626 = vrot.slane %v624, 4
        %v627 = vshll.u32 %v453, 16
        %v629 = vrot.slane %v627, 5
        %v630 = vor.u32 %v626, %v629
        %v631 = vrot.slane %v630, 4
        %v633 = vshll.u32 %v454, 16
        %v635 = vrot.slane %v633, 5
        %v636 = vsel %vm459, %v631, %v635
        %v639 = vrot.slane %v453, 5
        %v640 = vrot.slane %v639, 4
        %v641 = vrot.slane %v454, 5
        %v642 = vsel %vm590, %v640, %v641
        %v644 = vshrl.u32 %v455, 16
        %v646 = vrot.slane %v644, 4
        %v647 = vshll.u32 %v455, 16
        %v649 = vrot.slane %v647, 5
        %v650 = vor.u32 %v646, %v649
        %v651 = vrot.slane %v650, 4
        %v653 = vshll.u32 %v456, 16
        %v655 = vrot.slane %v653, 5
        %v656 = vsel %vm459, %v651, %v655
        %v659 = vrot.slane %v455, 5
        %v660 = vrot.slane %v659, 4
        %v661 = vrot.slane %v456, 5
        %v662 = vsel %vm590, %v660, %v661
        %v663 = vunpack.c.l.b16 %v437
        %v664 = vunpack.c.l.b16 %v439
        %v665 = vunpack.c.l.b16 %v441
        %v666 = vunpack.c.l.b16 %v443
        %v667 = vunpack.c.l.b16 %v445
        %v668 = vunpack.c.l.b16 %v447
        %v669 = vunpack.c.l.b16 %v449
        %v670 = vunpack.c.l.b16 %v451
        %v671 = vpack.c.b16 %v664, %v663
        %v672 = vpack.c.b16 %v666, %v665
        %v673 = vpack.c.b16 %v668, %v667
        %v674 = vpack.c.b16 %v670, %v669
        %v675 = vunpack.c.l.b16 %v473
        %v676 = vunpack.c.l.b16 %v487
        %v677 = vunpack.c.l.b16 %v501
        %v678 = vunpack.c.l.b16 %v515
        %v679 = vunpack.c.l.b16 %v529
        %v680 = vunpack.c.l.b16 %v543
        %v681 = vunpack.c.l.b16 %v557
        %v682 = vunpack.c.l.b16 %v571
        %v683 = vpack.c.b16 %v676, %v675
        %v684 = vpack.c.b16 %v678, %v677
        %v685 = vpack.c.b16 %v680, %v679
        %v686 = vpack.c.b16 %v682, %v681
        %687 = vrot.lane.b32.xlu0 %v683, 16
        %v688 = vpop.permute.xlu0 %687
        %689 = vrot.lane.b32.xlu0 %v684, 16
        %v690 = vpop.permute.xlu0 %689
        %691 = vrot.lane.b32.xlu0 %v685, 16
        %v692 = vpop.permute.xlu0 %691
        %693 = vrot.lane.b32.xlu0 %v686, 16
        %v694 = vpop.permute.xlu0 %693
        %v695 = vunpack.c.l.b16 %v594
        %v696 = vunpack.c.l.b16 %v598
        %v697 = vunpack.c.l.b16 %v602
        %v698 = vunpack.c.l.b16 %v606
        %v699 = vunpack.c.l.b16 %v610
        %v700 = vunpack.c.l.b16 %v614
        %v701 = vunpack.c.l.b16 %v618
        %v702 = vunpack.c.l.b16 %v622
        %v703 = vpack.c.b16 %v696, %v695
        %v704 = vpack.c.b16 %v698, %v697
        %v705 = vpack.c.b16 %v700, %v699
        %v706 = vpack.c.b16 %v702, %v701
        %707 = vrot.lane.b32.xlu0 %v703, 32
        %v708 = vpop.permute.xlu0 %707
        %709 = vrot.lane.b32.xlu0 %v704, 32
        %v710 = vpop.permute.xlu0 %709
        %711 = vrot.lane.b32.xlu0 %v705, 32
        %v712 = vpop.permute.xlu0 %711
        %713 = vrot.lane.b32.xlu0 %v706, 32
        %v714 = vpop.permute.xlu0 %713
        %v715 = vunpack.c.l.b16 %v453
        %v716 = vpack.c.b16 %v665, %v664
        %v717 = vpack.c.b16 %v667, %v666
        %v718 = vpack.c.b16 %v669, %v668
        %v719 = vpack.c.b16 %v715, %v670
        %720 = vrot.lane.b32.xlu0 %v716, 48
        %v721 = vpop.permute.xlu0 %720
        %722 = vrot.lane.b32.xlu0 %v717, 48
        %v723 = vpop.permute.xlu0 %722
        %724 = vrot.lane.b32.xlu0 %v718, 48
        %v725 = vpop.permute.xlu0 %724
        %726 = vrot.lane.b32.xlu0 %v719, 48
        %v727 = vpop.permute.xlu0 %726
        %v728 = vunpack.c.l.b16 %v636
        %v729 = vpack.c.b16 %v677, %v676
        %v730 = vpack.c.b16 %v679, %v678
        %v731 = vpack.c.b16 %v681, %v680
        %v732 = vpack.c.b16 %v728, %v682
        %733 = vrot.lane.b32.xlu0 %v729, 64
        %v734 = vpop.permute.xlu0 %733
        %735 = vrot.lane.b32.xlu0 %v730, 64
        %v736 = vpop.permute.xlu0 %735
        %737 = vrot.lane.b32.xlu0 %v731, 64
        %v738 = vpop.permute.xlu0 %737
        %739 = vrot.lane.b32.xlu0 %v732, 64
        %v740 = vpop.permute.xlu0 %739
        %v741 = vunpack.c.l.b16 %v642
        %v742 = vpack.c.b16 %v697, %v696
        %v743 = vpack.c.b16 %v699, %v698
        %v744 = vpack.c.b16 %v701, %v700
        %v745 = vpack.c.b16 %v741, %v702
        %746 = vrot.lane.b32.xlu0 %v742, 80
        %v747 = vpop.permute.xlu0 %746
        %748 = vrot.lane.b32.xlu0 %v743, 80
        %v749 = vpop.permute.xlu0 %748
        %750 = vrot.lane.b32.xlu0 %v744, 80
        %v751 = vpop.permute.xlu0 %750
        %752 = vrot.lane.b32.xlu0 %v745, 80
        %v753 = vpop.permute.xlu0 %752
        %v754 = vunpack.c.l.b16 %v455
        %v755 = vpack.c.b16 %v754, %v715
        %756 = vrot.lane.b32.xlu0 %v672, 96
        %v757 = vpop.permute.xlu0 %756
        %758 = vrot.lane.b32.xlu0 %v673, 96
        %v759 = vpop.permute.xlu0 %758
        %760 = vrot.lane.b32.xlu0 %v674, 96
        %v761 = vpop.permute.xlu0 %760
        %762 = vrot.lane.b32.xlu0 %v755, 96
        %v763 = vpop.permute.xlu0 %762
        %v764 = vunpack.c.l.b16 %v656
        %v765 = vpack.c.b16 %v764, %v728
        %766 = vrot.lane.b32.xlu0 %v684, 112
        %v767 = vpop.permute.xlu0 %766
        %768 = vrot.lane.b32.xlu0 %v685, 112
        %v769 = vpop.permute.xlu0 %768
        %770 = vrot.lane.b32.xlu0 %v686, 112
        %v771 = vpop.permute.xlu0 %770
        %772 = vrot.lane.b32.xlu0 %v765, 112
        %v773 = vpop.permute.xlu0 %772
        %v774 = vunpack.c.l.b16 %v662
        %v775 = vpack.c.b16 %v774, %v741
        %vm776 = vcmask 130048
        %v779 = vsel %vm776, %v671, %v688
        %v782 = vsel %vm776, %v672, %v690
        %v785 = vsel %vm776, %v673, %v692
        %v788 = vsel %vm776, %v674, %v694
        %vm789 = vcmask 261120
        %v791 = vsel %vm789, %v779, %v708
        %v793 = vsel %vm789, %v782, %v710
        %v795 = vsel %vm789, %v785, %v712
        %v797 = vsel %vm789, %v788, %v714
        %vm798 = vcmask 392192
        %v800 = vsel %vm798, %v791, %v721
        %v802 = vsel %vm798, %v793, %v723
        %v804 = vsel %vm798, %v795, %v725
        %v806 = vsel %vm798, %v797, %v727
        %vm807 = vcmask 523264
        %v809 = vsel %vm807, %v800, %v734
        %v811 = vsel %vm807, %v802, %v736
        %v813 = vsel %vm807, %v804, %v738
        %v815 = vsel %vm807, %v806, %v740
        %vm816 = vcmask 654336
        %v818 = vsel %vm816, %v809, %v747
        %v820 = vsel %vm816, %v811, %v749
        %v822 = vsel %vm816, %v813, %v751
        %v824 = vsel %vm816, %v815, %v753
        %vm825 = vcmask 785408
        %v827 = vsel %vm825, %v818, %v757
        %v829 = vsel %vm825, %v820, %v759
        %v831 = vsel %vm825, %v822, %v761
        %v833 = vsel %vm825, %v824, %v763
        %vm834 = vcmask 916480
        %v836 = vsel %vm834, %v827, %v767
        %v839 = vsel %vm834, %v829, %v769
        %v842 = vsel %vm834, %v831, %v771
        %v845 = vsel %vm834, %v833, %v773
        %v847 = vld [vmem:[%s3] sm:$0xf]
        %v848 = vld [vmem:[%s3 + $0x4] sm:$0xf]
        %v849 = vld [vmem:[%s3 + $0x8] sm:$0xf]
        %v850 = vld [vmem:[%s3 + $0xc] sm:$0xf]
        %v851 = vld [vmem:[%s3 + $0x10] sm:$0xf]
        %v852 = vld [vmem:[%s3 + $0x14] sm:$0xf]
        %v853 = vld [vmem:[%s3 + $0x18] sm:$0xf]
        %v854 = vld [vmem:[%s3 + $0x1c] sm:$0xf]
        %v855 = vld [vmem:[%s3 + $0x20] sm:$0xf]
        %v856 = vld [vmem:[%s3 + $0x24] sm:$0xf]
        %v857 = vld [vmem:[%s3 + $0x28] sm:$0xf]
        %v858 = vld [vmem:[%s3 + $0x2c] sm:$0xf]
        %v859 = vld [vmem:[%s3 + $0x30] sm:$0xf]
        %v860 = vld [vmem:[%s3 + $0x34] sm:$0xf]
        %v861 = vld [vmem:[%s3 + $0x38] sm:$0xf]
        %v862 = vld [vmem:[%s3 + $0x3c] sm:$0xf]
        %v863 = vld [vmem:[%s3 + $0x40] sm:$0xf]
        %v864 = vld [vmem:[%s3 + $0x44] sm:$0xf]
        %v865 = vld [vmem:[%s4] sm:$0x1]
        %v866 = vlaneseq
        %v867 = vshrl.u32 %v866, 7
        %v868 = vsub.s32 0, %v867
        %v869 = vrot.slane %v865, %v868
        %v888 = vunpack.c.l.b16 %v847
        %v889 = vunpack.c.l.b16 %v848
        %v890 = vunpack.c.l.b16 %v849
        %v891 = vunpack.c.l.b16 %v850
        %v892 = vunpack.c.l.b16 %v851
        %v893 = vunpack.c.l.b16 %v852
        %v894 = vunpack.c.l.b16 %v853
        %v895 = vunpack.c.l.b16 %v854
        %v896 = vunpack.c.l.b16 %v855
        %v897 = vunpack.c.l.b16 %v856
        %v898 = vunpack.c.l.b16 %v857
        %v899 = vunpack.c.l.b16 %v858
        %v900 = vunpack.c.l.b16 %v859
        %v901 = vunpack.c.l.b16 %v860
        %v902 = vunpack.c.l.b16 %v861
        %v903 = vunpack.c.l.b16 %v862
        %v904 = vunpack.c.l.b16 %v863
        %v905 = vunpack.c.l.b16 %v864
        %v906 = vpack.c.b16 %v889, %v888
        %v907 = vpack.c.b16 %v891, %v890
        %v908 = vpack.c.b16 %v893, %v892
        %v909 = vpack.c.b16 %v895, %v894
        %v910 = vpack.c.b16 %v897, %v896
        %v911 = vpack.c.b16 %v899, %v898
        %v912 = vpack.c.b16 %v901, %v900
        %v913 = vpack.c.b16 %v903, %v902
        %v914 = vpack.c.b16 %v905, %v904
        %v925 = vsel %vm776, %v704, 0
        %v928 = vsel %vm776, %v705, 0
        %v931 = vsel %vm776, %v706, 0
        %v934 = vsel %vm776, %v775, 0
        %936 = vmatprep.subr.bf16.mxu0 0
        %937 = vmatpush1.bf16.msra.mxu0 %v906
        %938 = vmatprep.subr.bf16.mxu0 0
        %939 = vmatpush1.bf16.msra.mxu0 %v907
        %940 = vmatprep.subr.bf16.mxu0 0
        %941 = vmatpush1.bf16.msra.mxu0 %v908
        %942 = vmatprep.subr.bf16.mxu0 0
        %943 = vmatpush1.bf16.msra.mxu0 %v909
        %944 = vmatprep.subr.bf16.mxu0 0
        %945 = vmatpush1.bf16.msra.mxu0 %v910
        %946 = vmatprep.subr.bf16.mxu0 0
        %947 = vmatpush1.bf16.msra.mxu0 %v911
        %948 = vmatprep.subr.bf16.mxu0 0
        %949 = vmatpush1.bf16.msra.mxu0 %v912
        %950 = vmatprep.subr.bf16.mxu0 0
        %951 = vmatpush1.bf16.msra.mxu0 %v913
        %952 = vmatprep.subr.bf16.mxu0 0
        %953 = vmatpush1.bf16.msra.mxu0 %v914
        %954 = vmatprep.subr.bf16.mxu0 0
        %955 = vmatpush1.bf16.msra.mxu0 0
        %956 = vmatprep.subr.bf16.mxu0 0
        %957 = vmatpush1.bf16.msra.mxu0 0
        %958 = vmatprep.subr.bf16.mxu0 0
        %959 = vmatpush1.bf16.msra.mxu0 0
        %960 = vmatprep.subr.bf16.mxu0 0
        %961 = vmatpush1.bf16.msra.mxu0 0
        %962 = vmatprep.subr.bf16.mxu0 0
        %963 = vmatpush1.bf16.msra.mxu0 0
        %964 = vmatprep.subr.bf16.mxu0 0
        %965 = vmatpush1.bf16.msra.mxu0 0
        %966 = vmatprep.subr.bf16.mxu0 0
        %967 = vmatpush1.bf16.msra.mxu0 0
        %968 = vmatprep.mubr.bf16.mxu0 %v925
        %969 = vmatmul.mubr.bf16.gmra.mrb[0].mxu0 %v836
        %v970 = vpop.f32.mrb[0].mxu0
        %v971 = vadd.f32 %v869, %v970
        %v972 = vpop.f32.mrb[0].mxu0
        %v973 = vpop.f32.mrb[0].mxu0
        %v974 = vadd.f32 %v869, %v973
        %v975 = vpop.f32.mrb[0].mxu0
        %976 = vmatprep.mubr.bf16.mxu0 %v928
        %977 = vmatmul.mubr.bf16.gmra.mrb[0].mxu0 %v839
        %v978 = vpop.f32.mrb[0].mxu0
        %v979 = vadd.f32 %v869, %v978
        %v980 = vpop.f32.mrb[0].mxu0
        %v981 = vpop.f32.mrb[0].mxu0
        %v982 = vadd.f32 %v869, %v981
        %v983 = vpop.f32.mrb[0].mxu0
        %984 = vmatprep.mubr.bf16.mxu0 %v931
        %985 = vmatmul.mubr.bf16.gmra.mrb[0].mxu0 %v842
        %v986 = vpop.f32.mrb[0].mxu0
        %v987 = vadd.f32 %v869, %v986
        %v988 = vpop.f32.mrb[0].mxu0
        %v989 = vpop.f32.mrb[0].mxu0
        %v990 = vadd.f32 %v869, %v989
        %v991 = vpop.f32.mrb[0].mxu0
        %992 = vmatprep.mubr.bf16.mxu0 %v934
        %993 = vmatmul.mubr.bf16.gmra.mrb[0].mxu0 %v845
        %v994 = vpop.f32.mrb[0].mxu0
        %v995 = vadd.f32 %v869, %v994
        %v996 = vpop.f32.mrb[0].mxu0
        %v997 = vpop.f32.mrb[0].mxu0
        %v998 = vadd.f32 %v869, %v997
        %v999 = vpop.f32.mrb[0].mxu0
        %1000 = vdwg.mxu0
        %v1001 = vsel %vm789, %v971, 0.0
        %v1002 = vsel %vm789, %v974, 0.0
        %v1003 = vadd.f32 %v1001, %v1002
        %v1004 = vsel %vm789, %v979, 0.0
        %v1005 = vadd.f32 %v1003, %v1004
        %v1006 = vsel %vm789, %v982, 0.0
        %v1007 = vadd.f32 %v1005, %v1006
        %v1008 = vsel %vm789, %v987, 0.0
        %v1009 = vadd.f32 %v1007, %v1008
        %v1010 = vsel %vm789, %v990, 0.0
        %v1011 = vadd.f32 %v1009, %v1010
        %v1012 = vsel %vm789, %v995, 0.0
        %v1013 = vadd.f32 %v1011, %v1012
        %v1014 = vsel %vm789, %v998, 0.0
        %v1015 = vadd.f32 %v1013, %v1014
        %v1016 = vrot.slane %v1015, 4
        %v1017 = vadd.f32 %v1015, %v1016
        %v1018 = vrot.slane %v1017, 2
        %v1019 = vadd.f32 %v1017, %v1018
        %v1020 = vrot.slane %v1019, 1
        %v1021 = vadd.f32 %v1019, %v1020
        %v1022 = vmul.f32 %v1021, 0.015625
        %v1023 = vsub.f32 %v971, %v1022
        %v1024 = vsub.f32 %v974, %v1022
        %v1025 = vsub.f32 %v979, %v1022
        %v1026 = vsub.f32 %v982, %v1022
        %v1027 = vsub.f32 %v987, %v1022
        %v1028 = vsub.f32 %v990, %v1022
        %v1029 = vsub.f32 %v995, %v1022
        %v1030 = vsub.f32 %v998, %v1022
        %v1031 = vmul.f32 %v1023, %v1023
        %v1032 = vmul.f32 %v1024, %v1024
        %v1033 = vmul.f32 %v1025, %v1025
        %v1034 = vmul.f32 %v1026, %v1026
        %v1035 = vmul.f32 %v1027, %v1027
        %v1036 = vmul.f32 %v1028, %v1028
        %v1037 = vmul.f32 %v1029, %v1029
        %v1038 = vmul.f32 %v1030, %v1030
        %v1039 = vsel %vm789, %v1031, 0.0
        %v1040 = vsel %vm789, %v1032, 0.0
        %v1041 = vadd.f32 %v1039, %v1040
        %v1042 = vsel %vm789, %v1033, 0.0
        %v1043 = vadd.f32 %v1041, %v1042
        %v1044 = vsel %vm789, %v1034, 0.0
        %v1045 = vadd.f32 %v1043, %v1044
        %v1046 = vsel %vm789, %v1035, 0.0
        %v1047 = vadd.f32 %v1045, %v1046
        %v1048 = vsel %vm789, %v1036, 0.0
        %v1049 = vadd.f32 %v1047, %v1048
        %v1050 = vsel %vm789, %v1037, 0.0
        %v1051 = vadd.f32 %v1049, %v1050
        %v1052 = vsel %vm789, %v1038, 0.0
        %v1053 = vadd.f32 %v1051, %v1052
        %v1054 = vrot.slane %v1053, 4
        %v1055 = vadd.f32 %v1053, %v1054
        %v1056 = vrot.slane %v1055, 2
        %v1057 = vadd.f32 %v1055, %v1056
        %v1058 = vrot.slane %v1057, 1
        %v1059 = vadd.f32 %v1057, %v1058
        %v1060 = vmul.f32 %v1059, 0.015625
        %v1061 = vadd.f32 %v1060, 1e-05
        %v1062 = vrsqrt.pop %v1061
        %v1063 = vld [vmem:[%s4 + $0x1] sm:$0x1]
        %v1064 = vmul.f32 %v1062, %v1063
        %v1065 = vlaneseq
        %v1066 = vshrl.u32 %v1065, 7
        %v1067 = vsub.s32 0, %v1066
        %v1068 = vrot.slane %v1064, %v1067
        %v1069 = vmul.f32 %v1023, %v1068
        %v1070 = vmul.f32 %v1024, %v1068
        %v1071 = vmul.f32 %v1025, %v1068
        %v1072 = vmul.f32 %v1026, %v1068
        %v1073 = vmul.f32 %v1027, %v1068
        %v1074 = vmul.f32 %v1028, %v1068
        %v1075 = vmul.f32 %v1029, %v1068
        %v1076 = vmul.f32 %v1030, %v1068
        %v1077 = vld [vmem:[%s4 + $0x2] sm:$0x1]
        %v1078 = vlaneseq
        %v1079 = vshrl.u32 %v1078, 7
        %v1080 = vsub.s32 0, %v1079
        %v1081 = vrot.slane %v1077, %v1080
        %v1082 = vadd.f32 %v1069, %v1081
        %v1083 = vadd.f32 %v1070, %v1081
        %v1084 = vadd.f32 %v1071, %v1081
        %v1085 = vadd.f32 %v1072, %v1081
        %v1086 = vadd.f32 %v1073, %v1081
        %v1087 = vadd.f32 %v1074, %v1081
        %v1088 = vadd.f32 %v1075, %v1081
        %v1089 = vadd.f32 %v1076, %v1081
        %v1090 = vxor.u32 %v1082, 2147483648
        %v1091 = vxor.u32 %v1083, 2147483648
        %v1092 = vxor.u32 %v1084, 2147483648
        %v1093 = vxor.u32 %v1085, 2147483648
        %v1094 = vxor.u32 %v1086, 2147483648
        %v1095 = vxor.u32 %v1087, 2147483648
        %v1096 = vxor.u32 %v1088, 2147483648
        %v1097 = vxor.u32 %v1089, 2147483648
        %v1098 = vmul.f32 %v1090, 1.442695
        %v1099 = vpow.pop %v1098
        %v1100 = vmul.f32 %v1091, 1.442695
        %v1101 = vpow.pop %v1100
        %v1102 = vmul.f32 %v1092, 1.442695
        %v1103 = vpow.pop %v1102
        %v1104 = vmul.f32 %v1093, 1.442695
        %v1105 = vpow.pop %v1104
        %v1106 = vmul.f32 %v1094, 1.442695
        %v1107 = vpow.pop %v1106
        %v1108 = vmul.f32 %v1095, 1.442695
        %v1109 = vpow.pop %v1108
        %v1110 = vmul.f32 %v1096, 1.442695
        %v1111 = vpow.pop %v1110
        %v1112 = vmul.f32 %v1097, 1.442695
        %v1113 = vpow.pop %v1112
        %v1114 = vadd.f32 %v1099, 1.0
        %v1115 = vadd.f32 %v1101, 1.0
        %v1116 = vadd.f32 %v1103, 1.0
        %v1117 = vadd.f32 %v1105, 1.0
        %v1118 = vadd.f32 %v1107, 1.0
        %v1119 = vadd.f32 %v1109, 1.0
        %v1120 = vadd.f32 %v1111, 1.0
        %v1121 = vadd.f32 %v1113, 1.0
        %v1122 = vrcp.pop %v1114
        %v1123 = vmul.f32 1.0, %v1122
        %v1124 = vrcp.pop %v1115
        %v1125 = vmul.f32 1.0, %v1124
        %v1126 = vrcp.pop %v1116
        %v1127 = vmul.f32 1.0, %v1126
        %v1128 = vrcp.pop %v1117
        %v1129 = vmul.f32 1.0, %v1128
        %v1130 = vrcp.pop %v1118
        %v1131 = vmul.f32 1.0, %v1130
        %v1132 = vrcp.pop %v1119
        %v1133 = vmul.f32 1.0, %v1132
        %v1134 = vrcp.pop %v1120
        %v1135 = vmul.f32 1.0, %v1134
        %v1136 = vrcp.pop %v1121
        %v1137 = vmul.f32 1.0, %v1136
        %v1138 = vmul.f32 %v1082, %v1123
        %v1139 = vmul.f32 %v1083, %v1125
        %v1140 = vmul.f32 %v1084, %v1127
        %v1141 = vmul.f32 %v1085, %v1129
        %v1142 = vmul.f32 %v1086, %v1131
        %v1143 = vmul.f32 %v1087, %v1133
        %v1144 = vmul.f32 %v1088, %v1135
        %v1145 = vmul.f32 %v1089, %v1137
        %v1146 = vld [vmem:[%s430] sm:$0xf]
        %v1147 = vld [vmem:[%s430 + $0x4] sm:$0xf]
        %v1148 = vld [vmem:[%s430 + $0x8] sm:$0xf]
        %v1149 = vld [vmem:[%s430 + $0xc] sm:$0xf]
        %v1150 = vld [vmem:[%s430 + $0x10] sm:$0xf]
        %v1151 = vld [vmem:[%s430 + $0x14] sm:$0xf]
        %v1152 = vld [vmem:[%s430 + $0x18] sm:$0xf]
        %v1153 = vld [vmem:[%s430 + $0x1c] sm:$0xf]
        %v1154 = vld [vmem:[%s5] sm:$0xf]
        %v1155 = vld [vmem:[%s5 + $0x4] sm:$0xf]
        %v1156 = vld [vmem:[%s6] sm:$0x1]
        %v1157 = vlaneseq
        %v1158 = vshrl.u32 %v1157, 7
        %v1159 = vsub.s32 0, %v1158
        %v1160 = vrot.slane %v1156, %v1159
        %v1169 = vunpack.c.l.b16 %v1146
        %v1170 = vunpack.c.l.b16 %v1147
        %v1171 = vunpack.c.l.b16 %v1148
        %v1172 = vunpack.c.l.b16 %v1149
        %v1173 = vunpack.c.l.b16 %v1150
        %v1174 = vunpack.c.l.b16 %v1151
        %v1175 = vunpack.c.l.b16 %v1152
        %v1176 = vunpack.c.l.b16 %v1153
        %v1177 = vpack.c.b16 %v1170, %v1169
        %v1178 = vpack.c.b16 %v1172, %v1171
        %v1179 = vpack.c.b16 %v1174, %v1173
        %v1180 = vpack.c.b16 %v1176, %v1175
        %v1183 = vunpack.c.l.b16 %v1154
        %v1184 = vunpack.c.l.b16 %v1155
        %v1185 = vpack.c.b16 %v1184, %v1183
        %v1188 = vsel %vm776, %v1177, 0
        %v1191 = vsel %vm776, %v1178, 0
        %v1194 = vsel %vm776, %v1179, 0
        %v1197 = vsel %vm776, %v1180, 0
        %1199 = vmatprep.subr.bf16.mxu0 0
        %1200 = vmatpush1.bf16.msra.mxu0 %v1185
        %1201 = vmatprep.subr.bf16.mxu0 0
        %1202 = vmatpush1.bf16.msra.mxu0 0
        %1203 = vmatprep.subr.bf16.mxu0 0
        %1204 = vmatpush1.bf16.msra.mxu0 0
        %1205 = vmatprep.subr.bf16.mxu0 0
        %1206 = vmatpush1.bf16.msra.mxu0 0
        %1207 = vmatprep.subr.bf16.mxu0 0
        %1208 = vmatpush1.bf16.msra.mxu0 0
        %1209 = vmatprep.subr.bf16.mxu0 0
        %1210 = vmatpush1.bf16.msra.mxu0 0
        %1211 = vmatprep.subr.bf16.mxu0 0
        %1212 = vmatpush1.bf16.msra.mxu0 0
        %1213 = vmatprep.subr.bf16.mxu0 0
        %1214 = vmatpush1.bf16.msra.mxu0 0
        %1215 = vmatprep.subr.bf16.mxu0 0
        %1216 = vmatpush1.bf16.msra.mxu0 0
        %1217 = vmatprep.subr.bf16.mxu0 0
        %1218 = vmatpush1.bf16.msra.mxu0 0
        %1219 = vmatprep.subr.bf16.mxu0 0
        %1220 = vmatpush1.bf16.msra.mxu0 0
        %1221 = vmatprep.subr.bf16.mxu0 0
        %1222 = vmatpush1.bf16.msra.mxu0 0
        %1223 = vmatprep.subr.bf16.mxu0 0
        %1224 = vmatpush1.bf16.msra.mxu0 0
        %1225 = vmatprep.subr.bf16.mxu0 0
        %1226 = vmatpush1.bf16.msra.mxu0 0
        %1227 = vmatprep.subr.bf16.mxu0 0
        %1228 = vmatpush1.bf16.msra.mxu0 0
        %1229 = vmatprep.subr.bf16.mxu0 0
        %1230 = vmatpush1.bf16.msra.mxu0 0
        %1231 = vmatprep.mubr.bf16.mxu0 0
        %1232 = vmatmul.mubr.bf16.gmra.mrb[0].mxu0 %v1188
        %v1233 = vpop.f32.mrb[0].mxu0
        %v1234 = vadd.f32 %v1160, %v1233
        %v1235 = vpop.f32.mrb[0].mxu0
        %v1236 = vpop.f32.mrb[0].mxu0
        %v1237 = vadd.f32 %v1160, %v1236
        %v1238 = vpop.f32.mrb[0].mxu0
        %1239 = vmatprep.mubr.bf16.mxu0 0
        %1240 = vmatmul.mubr.bf16.gmra.mrb[0].mxu0 %v1191
        %v1241 = vpop.f32.mrb[0].mxu0
        %v1242 = vadd.f32 %v1160, %v1241
        %v1243 = vpop.f32.mrb[0].mxu0
        %v1244 = vpop.f32.mrb[0].mxu0
        %v1245 = vadd.f32 %v1160, %v1244
        %v1246 = vpop.f32.mrb[0].mxu0
        %1247 = vmatprep.mubr.bf16.mxu0 0
        %1248 = vmatmul.mubr.bf16.gmra.mrb[0].mxu0 %v1194
        %v1249 = vpop.f32.mrb[0].mxu0
        %v1250 = vadd.f32 %v1160, %v1249
        %v1251 = vpop.f32.mrb[0].mxu0
        %v1252 = vpop.f32.mrb[0].mxu0
        %v1253 = vadd.f32 %v1160, %v1252
        %v1254 = vpop.f32.mrb[0].mxu0
        %1255 = vmatprep.mubr.bf16.mxu0 0
        %1256 = vmatmul.mubr.bf16.gmra.mrb[0].mxu0 %v1197
        %v1257 = vpop.f32.mrb[0].mxu0
        %v1258 = vadd.f32 %v1160, %v1257
        %v1259 = vpop.f32.mrb[0].mxu0
        %v1260 = vpop.f32.mrb[0].mxu0
        %v1261 = vadd.f32 %v1160, %v1260
        %v1262 = vpop.f32.mrb[0].mxu0
        %1263 = vdwg.mxu0
        %v1264 = vsel %vm789, %v1234, 0.0
        %v1265 = vsel %vm789, %v1237, 0.0
        %v1266 = vadd.f32 %v1264, %v1265
        %v1267 = vsel %vm789, %v1242, 0.0
        %v1268 = vadd.f32 %v1266, %v1267
        %v1269 = vsel %vm789, %v1245, 0.0
        %v1270 = vadd.f32 %v1268, %v1269
        %v1271 = vsel %vm789, %v1250, 0.0
        %v1272 = vadd.f32 %v1270, %v1271
        %v1273 = vsel %vm789, %v1253, 0.0
        %v1274 = vadd.f32 %v1272, %v1273
        %v1275 = vsel %vm789, %v1258, 0.0
        %v1276 = vadd.f32 %v1274, %v1275
        %v1277 = vsel %vm789, %v1261, 0.0
        %v1278 = vadd.f32 %v1276, %v1277
        %v1279 = vrot.slane %v1278, 4
        %v1280 = vadd.f32 %v1278, %v1279
        %v1281 = vrot.slane %v1280, 2
        %v1282 = vadd.f32 %v1280, %v1281
        %v1283 = vrot.slane %v1282, 1
        %v1284 = vadd.f32 %v1282, %v1283
        %v1285 = vmul.f32 %v1284, 0.015625
        %v1286 = vsub.f32 %v1234, %v1285
        %v1287 = vsub.f32 %v1237, %v1285
        %v1288 = vsub.f32 %v1242, %v1285
        %v1289 = vsub.f32 %v1245, %v1285
        %v1290 = vsub.f32 %v1250, %v1285
        %v1291 = vsub.f32 %v1253, %v1285
        %v1292 = vsub.f32 %v1258, %v1285
        %v1293 = vsub.f32 %v1261, %v1285
        %v1294 = vmul.f32 %v1286, %v1286
        %v1295 = vmul.f32 %v1287, %v1287
        %v1296 = vmul.f32 %v1288, %v1288
        %v1297 = vmul.f32 %v1289, %v1289
        %v1298 = vmul.f32 %v1290, %v1290
        %v1299 = vmul.f32 %v1291, %v1291
        %v1300 = vmul.f32 %v1292, %v1292
        %v1301 = vmul.f32 %v1293, %v1293
        %v1302 = vsel %vm789, %v1294, 0.0
        %v1303 = vsel %vm789, %v1295, 0.0
        %v1304 = vadd.f32 %v1302, %v1303
        %v1305 = vsel %vm789, %v1296, 0.0
        %v1306 = vadd.f32 %v1304, %v1305
        %v1307 = vsel %vm789, %v1297, 0.0
        %v1308 = vadd.f32 %v1306, %v1307
        %v1309 = vsel %vm789, %v1298, 0.0
        %v1310 = vadd.f32 %v1308, %v1309
        %v1311 = vsel %vm789, %v1299, 0.0
        %v1312 = vadd.f32 %v1310, %v1311
        %v1313 = vsel %vm789, %v1300, 0.0
        %v1314 = vadd.f32 %v1312, %v1313
        %v1315 = vsel %vm789, %v1301, 0.0
        %v1316 = vadd.f32 %v1314, %v1315
        %v1317 = vrot.slane %v1316, 4
        %v1318 = vadd.f32 %v1316, %v1317
        %v1319 = vrot.slane %v1318, 2
        %v1320 = vadd.f32 %v1318, %v1319
        %v1321 = vrot.slane %v1320, 1
        %v1322 = vadd.f32 %v1320, %v1321
        %v1323 = vmul.f32 %v1322, 0.015625
        %v1324 = vadd.f32 %v1323, 1e-05
        %v1325 = vrsqrt.pop %v1324
        %v1326 = vld [vmem:[%s6 + $0x1] sm:$0x1]
        %v1327 = vmul.f32 %v1325, %v1326
        %v1328 = vlaneseq
        %v1329 = vshrl.u32 %v1328, 7
        %v1330 = vsub.s32 0, %v1329
        %v1331 = vrot.slane %v1327, %v1330
        %v1332 = vmul.f32 %v1286, %v1331
        %v1333 = vmul.f32 %v1287, %v1331
        %v1334 = vmul.f32 %v1288, %v1331
        %v1335 = vmul.f32 %v1289, %v1331
        %v1336 = vmul.f32 %v1290, %v1331
        %v1337 = vmul.f32 %v1291, %v1331
        %v1338 = vmul.f32 %v1292, %v1331
        %v1339 = vmul.f32 %v1293, %v1331
        %v1340 = vld [vmem:[%s6 + $0x2] sm:$0x1]
        %v1341 = vlaneseq
        %v1342 = vshrl.u32 %v1341, 7
        %v1343 = vsub.s32 0, %v1342
        %v1344 = vrot.slane %v1340, %v1343
        %v1345 = vadd.f32 %v1332, %v1344
        %v1346 = vadd.f32 %v1333, %v1344
        %v1347 = vadd.f32 %v1334, %v1344
        %v1348 = vadd.f32 %v1335, %v1344
        %v1349 = vadd.f32 %v1336, %v1344
        %v1350 = vadd.f32 %v1337, %v1344
        %v1351 = vadd.f32 %v1338, %v1344
        %v1352 = vadd.f32 %v1339, %v1344
        %v1353 = vxor.u32 %v1345, 2147483648
        %v1354 = vxor.u32 %v1346, 2147483648
        %v1355 = vxor.u32 %v1347, 2147483648
        %v1356 = vxor.u32 %v1348, 2147483648
        %v1357 = vxor.u32 %v1349, 2147483648
        %v1358 = vxor.u32 %v1350, 2147483648
        %v1359 = vxor.u32 %v1351, 2147483648
        %v1360 = vxor.u32 %v1352, 2147483648
        %v1361 = vmul.f32 %v1353, 1.442695
        %v1362 = vpow.pop %v1361
        %v1363 = vmul.f32 %v1354, 1.442695
        %v1364 = vpow.pop %v1363
        %v1365 = vmul.f32 %v1355, 1.442695
        %v1366 = vpow.pop %v1365
        %v1367 = vmul.f32 %v1356, 1.442695
        %v1368 = vpow.pop %v1367
        %v1369 = vmul.f32 %v1357, 1.442695
        %v1370 = vpow.pop %v1369
        %v1371 = vmul.f32 %v1358, 1.442695
        %v1372 = vpow.pop %v1371
        %v1373 = vmul.f32 %v1359, 1.442695
        %v1374 = vpow.pop %v1373
        %v1375 = vmul.f32 %v1360, 1.442695
        %v1376 = vpow.pop %v1375
        %v1377 = vadd.f32 %v1362, 1.0
        %v1378 = vadd.f32 %v1364, 1.0
        %v1379 = vadd.f32 %v1366, 1.0
        %v1380 = vadd.f32 %v1368, 1.0
        %v1381 = vadd.f32 %v1370, 1.0
        %v1382 = vadd.f32 %v1372, 1.0
        %v1383 = vadd.f32 %v1374, 1.0
        %v1384 = vadd.f32 %v1376, 1.0
        %v1385 = vrcp.pop %v1377
        %v1386 = vmul.f32 1.0, %v1385
        %v1387 = vrcp.pop %v1378
        %v1388 = vmul.f32 1.0, %v1387
        %v1389 = vrcp.pop %v1379
        %v1390 = vmul.f32 1.0, %v1389
        %v1391 = vrcp.pop %v1380
        %v1392 = vmul.f32 1.0, %v1391
        %v1393 = vrcp.pop %v1381
        %v1394 = vmul.f32 1.0, %v1393
        %v1395 = vrcp.pop %v1382
        %v1396 = vmul.f32 1.0, %v1395
        %v1397 = vrcp.pop %v1383
        %v1398 = vmul.f32 1.0, %v1397
        %v1399 = vrcp.pop %v1384
        %v1400 = vmul.f32 1.0, %v1399
        %v1401 = vld [vmem:[%s435] sm:$0xf]
        %v1402 = vld [vmem:[%s435 + $0x4] sm:$0x1]
        %v1403 = vld [vmem:[%s435 + $0x8] sm:$0xf]
        %v1404 = vld [vmem:[%s435 + $0xc] sm:$0x1]
        %v1405 = vld [vmem:[%s435 + $0x10] sm:$0xf]
        %v1406 = vld [vmem:[%s435 + $0x14] sm:$0x1]
        %v1407 = vld [vmem:[%s435 + $0x18] sm:$0xf]
        %v1408 = vld [vmem:[%s435 + $0x1c] sm:$0x1]
        %v1409 = vld [vmem:[%s435 + $0x20] sm:$0xf]
        %v1410 = vld [vmem:[%s435 + $0x24] sm:$0x1]
        %v1411 = vld [vmem:[%s435 + $0x28] sm:$0xf]
        %v1412 = vld [vmem:[%s435 + $0x2c] sm:$0x1]
        %v1413 = vld [vmem:[%s435 + $0x30] sm:$0xf]
        %v1414 = vld [vmem:[%s435 + $0x34] sm:$0x1]
        %v1415 = vld [vmem:[%s435 + $0x38] sm:$0xf]
        %v1416 = vld [vmem:[%s435 + $0x3c] sm:$0x1]
        %v1417 = vld [vmem:[%s435 + $0x40] sm:$0xf]
        %v1418 = vld [vmem:[%s435 + $0x44] sm:$0x1]
        %v1419 = vld [vmem:[%s435 + $0x48] sm:$0xf]
        %v1420 = vld [vmem:[%s435 + $0x4c] sm:$0x1]
        %v1422 = vshrl.u32 %v1401, 16
        %v1424 = vrot.slane %v1422, 4
        %v1425 = vshll.u32 %v1401, 16
        %v1427 = vrot.slane %v1425, 5
        %v1428 = vor.u32 %v1424, %v1427
        %v1429 = vrot.slane %v1428, 4
        %v1431 = vshll.u32 %v1402, 16
        %v1433 = vrot.slane %v1431, 5
        %v1434 = vsel %vm459, %v1429, %v1433
        %v1436 = vshrl.u32 %v1403, 16
        %v1438 = vrot.slane %v1436, 4
        %v1439 = vshll.u32 %v1403, 16
        %v1441 = vrot.slane %v1439, 5
        %v1442 = vor.u32 %v1438, %v1441
        %v1443 = vrot.slane %v1442, 4
        %v1445 = vshll.u32 %v1404, 16
        %v1447 = vrot.slane %v1445, 5
        %v1448 = vsel %vm459, %v1443, %v1447
        %v1450 = vshrl.u32 %v1405, 16
        %v1452 = vrot.slane %v1450, 4
        %v1453 = vshll.u32 %v1405, 16
        %v1455 = vrot.slane %v1453, 5
        %v1456 = vor.u32 %v1452, %v1455
        %v1457 = vrot.slane %v1456, 4
        %v1459 = vshll.u32 %v1406, 16
        %v1461 = vrot.slane %v1459, 5
        %v1462 = vsel %vm459, %v1457, %v1461
        %v1464 = vshrl.u32 %v1407, 16
        %v1466 = vrot.slane %v1464, 4
        %v1467 = vshll.u32 %v1407, 16
        %v1469 = vrot.slane %v1467, 5
        %v1470 = vor.u32 %v1466, %v1469
        %v1471 = vrot.slane %v1470, 4
        %v1473 = vshll.u32 %v1408, 16
        %v1475 = vrot.slane %v1473, 5
        %v1476 = vsel %vm459, %v1471, %v1475
        %v1478 = vshrl.u32 %v1409, 16
        %v1480 = vrot.slane %v1478, 4
        %v1481 = vshll.u32 %v1409, 16
        %v1483 = vrot.slane %v1481, 5
        %v1484 = vor.u32 %v1480, %v1483
        %v1485 = vrot.slane %v1484, 4
        %v1487 = vshll.u32 %v1410, 16
        %v1489 = vrot.slane %v1487, 5
        %v1490 = vsel %vm459, %v1485, %v1489
        %v1492 = vshrl.u32 %v1411, 16
        %v1494 = vrot.slane %v1492, 4
        %v1495 = vshll.u32 %v1411, 16
        %v1497 = vrot.slane %v1495, 5
        %v1498 = vor.u32 %v1494, %v1497
        %v1499 = vrot.slane %v1498, 4
        %v1501 = vshll.u32 %v1412, 16
        %v1503 = vrot.slane %v1501, 5
        %v1504 = vsel %vm459, %v1499, %v1503
        %v1506 = vshrl.u32 %v1413, 16
        %v1508 = vrot.slane %v1506, 4
        %v1509 = vshll.u32 %v1413, 16
        %v1511 = vrot.slane %v1509, 5
        %v1512 = vor.u32 %v1508, %v1511
        %v1513 = vrot.slane %v1512, 4
        %v1515 = vshll.u32 %v1414, 16
        %v1517 = vrot.slane %v1515, 5
        %v1518 = vsel %vm459, %v1513, %v1517
        %v1520 = vshrl.u32 %v1415, 16
        %v1522 = vrot.slane %v1520, 4
        %v1523 = vshll.u32 %v1415, 16
        %v1525 = vrot.slane %v1523, 5
        %v1526 = vor.u32 %v1522, %v1525
        %v1527 = vrot.slane %v1526, 4
        %v1529 = vshll.u32 %v1416, 16
        %v1531 = vrot.slane %v1529, 5
        %v1532 = vsel %vm459, %v1527, %v1531
        %v1549 = vrot.slane %v1401, 5
        %v1550 = vrot.slane %v1549, 4
        %v1551 = vrot.slane %v1402, 5
        %v1552 = vsel %vm590, %v1550, %v1551
        %v1553 = vrot.slane %v1403, 5
        %v1554 = vrot.slane %v1553, 4
        %v1555 = vrot.slane %v1404, 5
        %v1556 = vsel %vm590, %v1554, %v1555
        %v1557 = vrot.slane %v1405, 5
        %v1558 = vrot.slane %v1557, 4
        %v1559 = vrot.slane %v1406, 5
        %v1560 = vsel %vm590, %v1558, %v1559
        %v1561 = vrot.slane %v1407, 5
        %v1562 = vrot.slane %v1561, 4
        %v1563 = vrot.slane %v1408, 5
        %v1564 = vsel %vm590, %v1562, %v1563
        %v1565 = vrot.slane %v1409, 5
        %v1566 = vrot.slane %v1565, 4
        %v1567 = vrot.slane %v1410, 5
        %v1568 = vsel %vm590, %v1566, %v1567
        %v1569 = vrot.slane %v1411, 5
        %v1570 = vrot.slane %v1569, 4
        %v1571 = vrot.slane %v1412, 5
        %v1572 = vsel %vm590, %v1570, %v1571
        %v1573 = vrot.slane %v1413, 5
        %v1574 = vrot.slane %v1573, 4
        %v1575 = vrot.slane %v1414, 5
        %v1576 = vsel %vm590, %v1574, %v1575
        %v1577 = vrot.slane %v1415, 5
        %v1578 = vrot.slane %v1577, 4
        %v1579 = vrot.slane %v1416, 5
        %v1580 = vsel %vm590, %v1578, %v1579
        %v1582 = vshrl.u32 %v1417, 16
        %v1584 = vrot.slane %v1582, 4
        %v1585 = vshll.u32 %v1417, 16
        %v1587 = vrot.slane %v1585, 5
        %v1588 = vor.u32 %v1584, %v1587
        %v1589 = vrot.slane %v1588, 4
        %v1591 = vshll.u32 %v1418, 16
        %v1593 = vrot.slane %v1591, 5
        %v1594 = vsel %vm459, %v1589, %v1593
        %v1597 = vrot.slane %v1417, 5
        %v1598 = vrot.slane %v1597, 4
        %v1599 = vrot.slane %v1418, 5
        %v1600 = vsel %vm590, %v1598, %v1599
        %v1602 = vshrl.u32 %v1419, 16
        %v1604 = vrot.slane %v1602, 4
        %v1605 = vshll.u32 %v1419, 16
        %v1607 = vrot.slane %v1605, 5
        %v1608 = vor.u32 %v1604, %v1607
        %v1609 = vrot.slane %v1608, 4
        %v1611 = vshll.u32 %v1420, 16
        %v1613 = vrot.slane %v1611, 5
        %v1614 = vsel %vm459, %v1609, %v1613
        %v1617 = vrot.slane %v1419, 5
        %v1618 = vrot.slane %v1617, 4
        %v1619 = vrot.slane %v1420, 5
        %v1620 = vsel %vm590, %v1618, %v1619
        %v1621 = vunpack.c.l.b16 %v1401
        %v1622 = vunpack.c.l.b16 %v1403
        %v1623 = vunpack.c.l.b16 %v1405
        %v1624 = vunpack.c.l.b16 %v1407
        %v1625 = vunpack.c.l.b16 %v1409
        %v1626 = vunpack.c.l.b16 %v1411
        %v1627 = vunpack.c.l.b16 %v1413
        %v1628 = vunpack.c.l.b16 %v1415
        %v1629 = vpack.c.b16 %v1622, %v1621
        %v1630 = vpack.c.b16 %v1624, %v1623
        %v1631 = vpack.c.b16 %v1626, %v1625
        %v1632 = vpack.c.b16 %v1628, %v1627
        %v1633 = vunpack.c.l.b16 %v1434
        %v1634 = vunpack.c.l.b16 %v1448
        %v1635 = vunpack.c.l.b16 %v1462
        %v1636 = vunpack.c.l.b16 %v1476
        %v1637 = vunpack.c.l.b16 %v1490
        %v1638 = vunpack.c.l.b16 %v1504
        %v1639 = vunpack.c.l.b16 %v1518
        %v1640 = vunpack.c.l.b16 %v1532
        %v1641 = vpack.c.b16 %v1634, %v1633
        %v1642 = vpack.c.b16 %v1636, %v1635
        %v1643 = vpack.c.b16 %v1638, %v1637
        %v1644 = vpack.c.b16 %v1640, %v1639
        %1645 = vrot.lane.b32.xlu0 %v1641, 16
        %v1646 = vpop.permute.xlu0 %1645
        %1647 = vrot.lane.b32.xlu0 %v1642, 16
        %v1648 = vpop.permute.xlu0 %1647
        %1649 = vrot.lane.b32.xlu0 %v1643, 16
        %v1650 = vpop.permute.xlu0 %1649
        %1651 = vrot.lane.b32.xlu0 %v1644, 16
        %v1652 = vpop.permute.xlu0 %1651
        %v1653 = vunpack.c.l.b16 %v1552
        %v1654 = vunpack.c.l.b16 %v1556
        %v1655 = vunpack.c.l.b16 %v1560
        %v1656 = vunpack.c.l.b16 %v1564
        %v1657 = vunpack.c.l.b16 %v1568
        %v1658 = vunpack.c.l.b16 %v1572
        %v1659 = vunpack.c.l.b16 %v1576
        %v1660 = vunpack.c.l.b16 %v1580
        %v1661 = vpack.c.b16 %v1654, %v1653
        %v1662 = vpack.c.b16 %v1656, %v1655
        %v1663 = vpack.c.b16 %v1658, %v1657
        %v1664 = vpack.c.b16 %v1660, %v1659
        %1665 = vrot.lane.b32.xlu0 %v1661, 32
        %v1666 = vpop.permute.xlu0 %1665
        %1667 = vrot.lane.b32.xlu0 %v1662, 32
        %v1668 = vpop.permute.xlu0 %1667
        %1669 = vrot.lane.b32.xlu0 %v1663, 32
        %v1670 = vpop.permute.xlu0 %1669
        %1671 = vrot.lane.b32.xlu0 %v1664, 32
        %v1672 = vpop.permute.xlu0 %1671
        %v1673 = vunpack.c.l.b16 %v1417
        %v1674 = vpack.c.b16 %v1623, %v1622
        %v1675 = vpack.c.b16 %v1625, %v1624
        %v1676 = vpack.c.b16 %v1627, %v1626
        %v1677 = vpack.c.b16 %v1673, %v1628
        %1678 = vrot.lane.b32.xlu0 %v1674, 48
        %v1679 = vpop.permute.xlu0 %1678
        %1680 = vrot.lane.b32.xlu0 %v1675, 48
        %v1681 = vpop.permute.xlu0 %1680
        %1682 = vrot.lane.b32.xlu0 %v1676, 48
        %v1683 = vpop.permute.xlu0 %1682
        %1684 = vrot.lane.b32.xlu0 %v1677, 48
        %v1685 = vpop.permute.xlu0 %1684
        %v1686 = vunpack.c.l.b16 %v1594
        %v1687 = vpack.c.b16 %v1635, %v1634
        %v1688 = vpack.c.b16 %v1637, %v1636
        %v1689 = vpack.c.b16 %v1639, %v1638
        %v1690 = vpack.c.b16 %v1686, %v1640
        %1691 = vrot.lane.b32.xlu0 %v1687, 64
        %v1692 = vpop.permute.xlu0 %1691
        %1693 = vrot.lane.b32.xlu0 %v1688, 64
        %v1694 = vpop.permute.xlu0 %1693
        %1695 = vrot.lane.b32.xlu0 %v1689, 64
        %v1696 = vpop.permute.xlu0 %1695
        %1697 = vrot.lane.b32.xlu0 %v1690, 64
        %v1698 = vpop.permute.xlu0 %1697
        %v1699 = vunpack.c.l.b16 %v1600
        %v1700 = vpack.c.b16 %v1655, %v1654
        %v1701 = vpack.c.b16 %v1657, %v1656
        %v1702 = vpack.c.b16 %v1659, %v1658
        %v1703 = vpack.c.b16 %v1699, %v1660
        %1704 = vrot.lane.b32.xlu0 %v1700, 80
        %v1705 = vpop.permute.xlu0 %1704
        %1706 = vrot.lane.b32.xlu0 %v1701, 80
        %v1707 = vpop.permute.xlu0 %1706
        %1708 = vrot.lane.b32.xlu0 %v1702, 80
        %v1709 = vpop.permute.xlu0 %1708
        %1710 = vrot.lane.b32.xlu0 %v1703, 80
        %v1711 = vpop.permute.xlu0 %1710
        %v1712 = vunpack.c.l.b16 %v1419
        %v1713 = vpack.c.b16 %v1712, %v1673
        %1714 = vrot.lane.b32.xlu0 %v1630, 96
        %v1715 = vpop.permute.xlu0 %1714
        %1716 = vrot.lane.b32.xlu0 %v1631, 96
        %v1717 = vpop.permute.xlu0 %1716
        %1718 = vrot.lane.b32.xlu0 %v1632, 96
        %v1719 = vpop.permute.xlu0 %1718
        %1720 = vrot.lane.b32.xlu0 %v1713, 96
        %v1721 = vpop.permute.xlu0 %1720
        %v1722 = vunpack.c.l.b16 %v1614
        %v1723 = vpack.c.b16 %v1722, %v1686
        %1724 = vrot.lane.b32.xlu0 %v1642, 112
        %v1725 = vpop.permute.xlu0 %1724
        %1726 = vrot.lane.b32.xlu0 %v1643, 112
        %v1727 = vpop.permute.xlu0 %1726
        %1728 = vrot.lane.b32.xlu0 %v1644, 112
        %v1729 = vpop.permute.xlu0 %1728
        %1730 = vrot.lane.b32.xlu0 %v1723, 112
        %v1731 = vpop.permute.xlu0 %1730
        %v1732 = vunpack.c.l.b16 %v1620
        %v1733 = vpack.c.b16 %v1732, %v1699
        %v1736 = vsel %vm776, %v1629, %v1646
        %v1739 = vsel %vm776, %v1630, %v1648
        %v1742 = vsel %vm776, %v1631, %v1650
        %v1745 = vsel %vm776, %v1632, %v1652
        %v1747 = vsel %vm789, %v1736, %v1666
        %v1749 = vsel %vm789, %v1739, %v1668
        %v1751 = vsel %vm789, %v1742, %v1670
        %v1753 = vsel %vm789, %v1745, %v1672
        %v1755 = vsel %vm798, %v1747, %v1679
        %v1757 = vsel %vm798, %v1749, %v1681
        %v1759 = vsel %vm798, %v1751, %v1683
        %v1761 = vsel %vm798, %v1753, %v1685
        %v1763 = vsel %vm807, %v1755, %v1692
        %v1765 = vsel %vm807, %v1757, %v1694
        %v1767 = vsel %vm807, %v1759, %v1696
        %v1769 = vsel %vm807, %v1761, %v1698
        %v1771 = vsel %vm816, %v1763, %v1705
        %v1773 = vsel %vm816, %v1765, %v1707
        %v1775 = vsel %vm816, %v1767, %v1709
        %v1777 = vsel %vm816, %v1769, %v1711
        %v1779 = vsel %vm825, %v1771, %v1715
        %v1781 = vsel %vm825, %v1773, %v1717
        %v1783 = vsel %vm825, %v1775, %v1719
        %v1785 = vsel %vm825, %v1777, %v1721
        %v1787 = vsel %vm834, %v1779, %v1725
        %v1790 = vsel %vm834, %v1781, %v1727
        %v1793 = vsel %vm834, %v1783, %v1729
        %v1796 = vsel %vm834, %v1785, %v1731
        %v1798 = vld [vmem:[%s7] sm:$0xf]
        %v1799 = vld [vmem:[%s7 + $0x4] sm:$0xf]
        %v1800 = vld [vmem:[%s7 + $0x8] sm:$0xf]
        %v1801 = vld [vmem:[%s7 + $0xc] sm:$0xf]
        %v1802 = vld [vmem:[%s7 + $0x10] sm:$0xf]
        %v1803 = vld [vmem:[%s7 + $0x14] sm:$0xf]
        %v1804 = vld [vmem:[%s7 + $0x18] sm:$0xf]
        %v1805 = vld [vmem:[%s7 + $0x1c] sm:$0xf]
        %v1806 = vld [vmem:[%s7 + $0x20] sm:$0xf]
        %v1807 = vld [vmem:[%s7 + $0x24] sm:$0xf]
        %v1808 = vld [vmem:[%s7 + $0x28] sm:$0xf]
        %v1809 = vld [vmem:[%s7 + $0x2c] sm:$0xf]
        %v1810 = vld [vmem:[%s7 + $0x30] sm:$0xf]
        %v1811 = vld [vmem:[%s7 + $0x34] sm:$0xf]
        %v1812 = vld [vmem:[%s7 + $0x38] sm:$0xf]
        %v1813 = vld [vmem:[%s7 + $0x3c] sm:$0xf]
        %v1814 = vld [vmem:[%s7 + $0x40] sm:$0xf]
        %v1815 = vld [vmem:[%s7 + $0x44] sm:$0xf]
        %v1816 = vld [vmem:[%s8] sm:$0x1]
        %v1817 = vlaneseq
        %v1818 = vshrl.u32 %v1817, 7
        %v1819 = vsub.s32 0, %v1818
        %v1820 = vrot.slane %v1816, %v1819
        %v1839 = vunpack.c.l.b16 %v1798
        %v1840 = vunpack.c.l.b16 %v1799
        %v1841 = vunpack.c.l.b16 %v1800
        %v1842 = vunpack.c.l.b16 %v1801
        %v1843 = vunpack.c.l.b16 %v1802
        %v1844 = vunpack.c.l.b16 %v1803
        %v1845 = vunpack.c.l.b16 %v1804
        %v1846 = vunpack.c.l.b16 %v1805
        %v1847 = vunpack.c.l.b16 %v1806
        %v1848 = vunpack.c.l.b16 %v1807
        %v1849 = vunpack.c.l.b16 %v1808
        %v1850 = vunpack.c.l.b16 %v1809
        %v1851 = vunpack.c.l.b16 %v1810
        %v1852 = vunpack.c.l.b16 %v1811
        %v1853 = vunpack.c.l.b16 %v1812
        %v1854 = vunpack.c.l.b16 %v1813
        %v1855 = vunpack.c.l.b16 %v1814
        %v1856 = vunpack.c.l.b16 %v1815
        %v1857 = vpack.c.b16 %v1840, %v1839
        %v1858 = vpack.c.b16 %v1842, %v1841
        %v1859 = vpack.c.b16 %v1844, %v1843
        %v1860 = vpack.c.b16 %v1846, %v1845
        %v1861 = vpack.c.b16 %v1848, %v1847
        %v1862 = vpack.c.b16 %v1850, %v1849
        %v1863 = vpack.c.b16 %v1852, %v1851
        %v1864 = vpack.c.b16 %v1854, %v1853
        %v1865 = vpack.c.b16 %v1856, %v1855
        %v1876 = vsel %vm776, %v1662, 0
        %v1879 = vsel %vm776, %v1663, 0
        %v1882 = vsel %vm776, %v1664, 0
        %v1885 = vsel %vm776, %v1733, 0
        %1887 = vmatprep.subr.bf16.mxu0 0
        %1888 = vmatpush1.bf16.msra.mxu0 %v1857
        %1889 = vmatprep.subr.bf16.mxu0 0
        %1890 = vmatpush1.bf16.msra.mxu0 %v1858
        %1891 = vmatprep.subr.bf16.mxu0 0
        %1892 = vmatpush1.bf16.msra.mxu0 %v1859
        %1893 = vmatprep.subr.bf16.mxu0 0
        %1894 = vmatpush1.bf16.msra.mxu0 %v1860
        %1895 = vmatprep.subr.bf16.mxu0 0
        %1896 = vmatpush1.bf16.msra.mxu0 %v1861
        %1897 = vmatprep.subr.bf16.mxu0 0
        %1898 = vmatpush1.bf16.msra.mxu0 %v1862
        %1899 = vmatprep.subr.bf16.mxu0 0
        %1900 = vmatpush1.bf16.msra.mxu0 %v1863
        %1901 = vmatprep.subr.bf16.mxu0 0
        %1902 = vmatpush1.bf16.msra.mxu0 %v1864
        %1903 = vmatprep.subr.bf16.mxu0 0
        %1904 = vmatpush1.bf16.msra.mxu0 %v1865
        %1905 = vmatprep.subr.bf16.mxu0 0
        %1906 = vmatpush1.bf16.msra.mxu0 0
        %1907 = vmatprep.subr.bf16.mxu0 0
        %1908 = vmatpush1.bf16.msra.mxu0 0
        %1909 = vmatprep.subr.bf16.mxu0 0
        %1910 = vmatpush1.bf16.msra.mxu0 0
        %1911 = vmatprep.subr.bf16.mxu0 0
        %1912 = vmatpush1.bf16.msra.mxu0 0
        %1913 = vmatprep.subr.bf16.mxu0 0
        %1914 = vmatpush1.bf16.msra.mxu0 0
        %1915 = vmatprep.subr.bf16.mxu0 0
        %1916 = vmatpush1.bf16.msra.mxu0 0
        %1917 = vmatprep.subr.bf16.mxu0 0
        %1918 = vmatpush1.bf16.msra.mxu0 0
        %1919 = vmatprep.mubr.bf16.mxu0 %v1876
        %1920 = vmatmul.mubr.bf16.gmra.mrb[0].mxu0 %v1787
        %v1921 = vpop.f32.mrb[0].mxu0
        %v1922 = vadd.f32 %v1820, %v1921
        %v1923 = vpop.f32.mrb[0].mxu0
        %v1924 = vpop.f32.mrb[0].mxu0
        %v1925 = vadd.f32 %v1820, %v1924
        %v1926 = vpop.f32.mrb[0].mxu0
        %1927 = vmatprep.mubr.bf16.mxu0 %v1879
        %1928 = vmatmul.mubr.bf16.gmra.mrb[0].mxu0 %v1790
        %v1929 = vpop.f32.mrb[0].mxu0
        %v1930 = vadd.f32 %v1820, %v1929
        %v1931 = vpop.f32.mrb[0].mxu0
        %v1932 = vpop.f32.mrb[0].mxu0
        %v1933 = vadd.f32 %v1820, %v1932
        %v1934 = vpop.f32.mrb[0].mxu0
        %1935 = vmatprep.mubr.bf16.mxu0 %v1882
        %1936 = vmatmul.mubr.bf16.gmra.mrb[0].mxu0 %v1793
        %v1937 = vpop.f32.mrb[0].mxu0
        %v1938 = vadd.f32 %v1820, %v1937
        %v1939 = vpop.f32.mrb[0].mxu0
        %v1940 = vpop.f32.mrb[0].mxu0
        %v1941 = vadd.f32 %v1820, %v1940
        %v1942 = vpop.f32.mrb[0].mxu0
        %1943 = vmatprep.mubr.bf16.mxu0 %v1885
        %1944 = vmatmul.mubr.bf16.gmra.mrb[0].mxu0 %v1796
        %v1945 = vpop.f32.mrb[0].mxu0
        %v1946 = vadd.f32 %v1820, %v1945
        %v1947 = vpop.f32.mrb[0].mxu0
        %v1948 = vpop.f32.mrb[0].mxu0
        %v1949 = vadd.f32 %v1820, %v1948
        %v1950 = vpop.f32.mrb[0].mxu0
        %1951 = vdwg.mxu0
        %v1952 = vsel %vm789, %v1922, 0.0
        %v1953 = vsel %vm789, %v1925, 0.0
        %v1954 = vadd.f32 %v1952, %v1953
        %v1955 = vsel %vm789, %v1930, 0.0
        %v1956 = vadd.f32 %v1954, %v1955
        %v1957 = vsel %vm789, %v1933, 0.0
        %v1958 = vadd.f32 %v1956, %v1957
        %v1959 = vsel %vm789, %v1938, 0.0
        %v1960 = vadd.f32 %v1958, %v1959
        %v1961 = vsel %vm789, %v1941, 0.0
        %v1962 = vadd.f32 %v1960, %v1961
        %v1963 = vsel %vm789, %v1946, 0.0
        %v1964 = vadd.f32 %v1962, %v1963
        %v1965 = vsel %vm789, %v1949, 0.0
        %v1966 = vadd.f32 %v1964, %v1965
        %v1967 = vrot.slane %v1966, 4
        %v1968 = vadd.f32 %v1966, %v1967
        %v1969 = vrot.slane %v1968, 2
        %v1970 = vadd.f32 %v1968, %v1969
        %v1971 = vrot.slane %v1970, 1
        %v1972 = vadd.f32 %v1970, %v1971
        %v1973 = vmul.f32 %v1972, 0.015625
        %v1974 = vsub.f32 %v1922, %v1973
        %v1975 = vsub.f32 %v1925, %v1973
        %v1976 = vsub.f32 %v1930, %v1973
        %v1977 = vsub.f32 %v1933, %v1973
        %v1978 = vsub.f32 %v1938, %v1973
        %v1979 = vsub.f32 %v1941, %v1973
        %v1980 = vsub.f32 %v1946, %v1973
        %v1981 = vsub.f32 %v1949, %v1973
        %v1982 = vmul.f32 %v1974, %v1974
        %v1983 = vmul.f32 %v1975, %v1975
        %v1984 = vmul.f32 %v1976, %v1976
        %v1985 = vmul.f32 %v1977, %v1977
        %v1986 = vmul.f32 %v1978, %v1978
        %v1987 = vmul.f32 %v1979, %v1979
        %v1988 = vmul.f32 %v1980, %v1980
        %v1989 = vmul.f32 %v1981, %v1981
        %v1990 = vsel %vm789, %v1982, 0.0
        %v1991 = vsel %vm789, %v1983, 0.0
        %v1992 = vadd.f32 %v1990, %v1991
        %v1993 = vsel %vm789, %v1984, 0.0
        %v1994 = vadd.f32 %v1992, %v1993
        %v1995 = vsel %vm789, %v1985, 0.0
        %v1996 = vadd.f32 %v1994, %v1995
        %v1997 = vsel %vm789, %v1986, 0.0
        %v1998 = vadd.f32 %v1996, %v1997
        %v1999 = vsel %vm789, %v1987, 0.0
        %v2000 = vadd.f32 %v1998, %v1999
        %v2001 = vsel %vm789, %v1988, 0.0
        %v2002 = vadd.f32 %v2000, %v2001
        %v2003 = vsel %vm789, %v1989, 0.0
        %v2004 = vadd.f32 %v2002, %v2003
        %v2005 = vrot.slane %v2004, 4
        %v2006 = vadd.f32 %v2004, %v2005
        %v2007 = vrot.slane %v2006, 2
        %v2008 = vadd.f32 %v2006, %v2007
        %v2009 = vrot.slane %v2008, 1
        %v2010 = vadd.f32 %v2008, %v2009
        %v2011 = vmul.f32 %v2010, 0.015625
        %v2012 = vadd.f32 %v2011, 1e-05
        %v2013 = vrsqrt.pop %v2012
        %v2014 = vld [vmem:[%s8 + $0x1] sm:$0x1]
        %v2015 = vmul.f32 %v2013, %v2014
        %v2016 = vlaneseq
        %v2017 = vshrl.u32 %v2016, 7
        %v2018 = vsub.s32 0, %v2017
        %v2019 = vrot.slane %v2015, %v2018
        %v2020 = vmul.f32 %v1974, %v2019
        %v2021 = vmul.f32 %v1975, %v2019
        %v2022 = vmul.f32 %v1976, %v2019
        %v2023 = vmul.f32 %v1977, %v2019
        %v2024 = vmul.f32 %v1978, %v2019
        %v2025 = vmul.f32 %v1979, %v2019
        %v2026 = vmul.f32 %v1980, %v2019
        %v2027 = vmul.f32 %v1981, %v2019
        %v2028 = vld [vmem:[%s8 + $0x2] sm:$0x1]
        %v2029 = vlaneseq
        %v2030 = vshrl.u32 %v2029, 7
        %v2031 = vsub.s32 0, %v2030
        %v2032 = vrot.slane %v2028, %v2031
        %v2033 = vadd.f32 %v2020, %v2032
        %v2034 = vadd.f32 %v2021, %v2032
        %v2035 = vadd.f32 %v2022, %v2032
        %v2036 = vadd.f32 %v2023, %v2032
        %v2037 = vadd.f32 %v2024, %v2032
        %v2038 = vadd.f32 %v2025, %v2032
        %v2039 = vadd.f32 %v2026, %v2032
        %v2040 = vadd.f32 %v2027, %v2032
        %v2041 = vxor.u32 %v2033, 2147483648
        %v2042 = vxor.u32 %v2034, 2147483648
        %v2043 = vxor.u32 %v2035, 2147483648
        %v2044 = vxor.u32 %v2036, 2147483648
        %v2045 = vxor.u32 %v2037, 2147483648
        %v2046 = vxor.u32 %v2038, 2147483648
        %v2047 = vxor.u32 %v2039, 2147483648
        %v2048 = vxor.u32 %v2040, 2147483648
        %v2049 = vmul.f32 %v2041, 1.442695
        %v2050 = vpow.pop %v2049
        %v2051 = vmul.f32 %v2042, 1.442695
        %v2052 = vpow.pop %v2051
        %v2053 = vmul.f32 %v2043, 1.442695
        %v2054 = vpow.pop %v2053
        %v2055 = vmul.f32 %v2044, 1.442695
        %v2056 = vpow.pop %v2055
        %v2057 = vmul.f32 %v2045, 1.442695
        %v2058 = vpow.pop %v2057
        %v2059 = vmul.f32 %v2046, 1.442695
        %v2060 = vpow.pop %v2059
        %v2061 = vmul.f32 %v2047, 1.442695
        %v2062 = vpow.pop %v2061
        %v2063 = vmul.f32 %v2048, 1.442695
        %v2064 = vpow.pop %v2063
        %v2065 = vadd.f32 %v2050, 1.0
        %v2066 = vadd.f32 %v2052, 1.0
        %v2067 = vadd.f32 %v2054, 1.0
        %v2068 = vadd.f32 %v2056, 1.0
        %v2069 = vadd.f32 %v2058, 1.0
        %v2070 = vadd.f32 %v2060, 1.0
        %v2071 = vadd.f32 %v2062, 1.0
        %v2072 = vadd.f32 %v2064, 1.0
        %v2073 = vrcp.pop %v2065
        %v2074 = vmul.f32 1.0, %v2073
        %v2075 = vrcp.pop %v2066
        %v2076 = vmul.f32 1.0, %v2075
        %v2077 = vrcp.pop %v2067
        %v2078 = vmul.f32 1.0, %v2077
        %v2079 = vrcp.pop %v2068
        %v2080 = vmul.f32 1.0, %v2079
        %v2081 = vrcp.pop %v2069
        %v2082 = vmul.f32 1.0, %v2081
        %v2083 = vrcp.pop %v2070
        %v2084 = vmul.f32 1.0, %v2083
        %v2085 = vrcp.pop %v2071
        %v2086 = vmul.f32 1.0, %v2085
        %v2087 = vrcp.pop %v2072
        %v2088 = vmul.f32 1.0, %v2087
        %v2089 = vmul.f32 %v2033, %v2074
        %v2090 = vmul.f32 %v2034, %v2076
        %v2091 = vmul.f32 %v2035, %v2078
        %v2092 = vmul.f32 %v2036, %v2080
        %v2093 = vmul.f32 %v2037, %v2082
        %v2094 = vmul.f32 %v2038, %v2084
        %v2095 = vmul.f32 %v2039, %v2086
        %v2096 = vmul.f32 %v2040, %v2088
        %v2097 = vmul.f32 %v1138, %v1386
        %v2098 = vmul.f32 %v1139, %v1388
        %v2099 = vmul.f32 %v1140, %v1390
        %v2100 = vmul.f32 %v1141, %v1392
        %v2101 = vmul.f32 %v1142, %v1394
        %v2102 = vmul.f32 %v1143, %v1396
        %v2103 = vmul.f32 %v1144, %v1398
        %v2104 = vmul.f32 %v1145, %v1400
        %v2105 = vadd.f32 %v2097, %v2089
        %v2106 = vadd.f32 %v2098, %v2090
        %v2107 = vadd.f32 %v2099, %v2091
        %v2108 = vadd.f32 %v2100, %v2092
        %v2109 = vadd.f32 %v2101, %v2093
        %v2110 = vadd.f32 %v2102, %v2094
        %v2111 = vadd.f32 %v2103, %v2095
        %v2112 = vadd.f32 %v2104, %v2096
        %2113 = vst.msk [vmem:[%s413] sm:$0xff] %vm789, %v2105
        %2114 = vst.msk [vmem:[%s413 + $0x8] sm:$0xff] %vm789, %v2106
        %2115 = vst.msk [vmem:[%s413 + $0x10] sm:$0xff] %vm789, %v2107
        %2116 = vst.msk [vmem:[%s413 + $0x18] sm:$0xff] %vm789, %v2108
        %2117 = vst.msk [vmem:[%s413 + $0x20] sm:$0xff] %vm789, %v2109
        %2118 = vst.msk [vmem:[%s413 + $0x28] sm:$0xff] %vm789, %v2110
        %2119 = vst.msk [vmem:[%s413 + $0x30] sm:$0xff] %vm789, %v2111
        %2120 = vst.msk [vmem:[%s413 + $0x38] sm:$0xff] %vm789, %v2112
        %v2121 = vld [vmem:[%s9] sm:$0xf]
        %v2122 = vld [vmem:[%s9 + $0x4] sm:$0xf]
        %v2123 = vpack.c.bf16 %v2105, %v2105
        %v2124 = vpack.c.bf16 %v2106, %v2106
        %v2125 = vpack.c.bf16 %v2107, %v2107
        %v2126 = vpack.c.bf16 %v2108, %v2108
        %v2127 = vpack.c.bf16 %v2109, %v2109
        %v2128 = vpack.c.bf16 %v2110, %v2110
        %v2129 = vpack.c.bf16 %v2111, %v2111
        %v2130 = vpack.c.bf16 %v2112, %v2112
        %v2133 = vunpack.c.l.b16 %v2121
        %v2134 = vunpack.c.l.b16 %v2122
        %v2135 = vpack.c.b16 %v2134, %v2133
        %vm2136 = vcmask 64512
        %v2138 = vsel %vm2136, %v2135, 0
        %vm2140 = vcmask 1043456
        %v2142 = vsel %vm2140, %v2123, 0
        %2144 = vmatprep.subr.bf16.mxu0 0
        %2145 = vmatpush1.bf16.msra.mxu0 %v2142
        %2146 = vmatprep.subr.bf16.mxu0 0
        %2147 = vmatpush1.bf16.msra.mxu0 0
        %2148 = vmatprep.subr.bf16.mxu0 0
        %2149 = vmatpush1.bf16.msra.mxu0 0
        %2150 = vmatprep.subr.bf16.mxu0 0
        %2151 = vmatpush1.bf16.msra.mxu0 0
        %2152 = vmatprep.subr.bf16.mxu0 0
        %2153 = vmatpush1.bf16.msra.mxu0 0
        %2154 = vmatprep.subr.bf16.mxu0 0
        %2155 = vmatpush1.bf16.msra.mxu0 0
        %2156 = vmatprep.subr.bf16.mxu0 0
        %2157 = vmatpush1.bf16.msra.mxu0 0
        %2158 = vmatprep.subr.bf16.mxu0 0
        %2159 = vmatpush1.bf16.msra.mxu0 0
        %2160 = vmatprep.subr.bf16.mxu0 0
        %2161 = vmatpush1.bf16.msra.mxu0 0
        %2162 = vmatprep.subr.bf16.mxu0 0
        %2163 = vmatpush1.bf16.msra.mxu0 0
        %2164 = vmatprep.subr.bf16.mxu0 0
        %2165 = vmatpush1.bf16.msra.mxu0 0
        %2166 = vmatprep.subr.bf16.mxu0 0
        %2167 = vmatpush1.bf16.msra.mxu0 0
        %2168 = vmatprep.subr.bf16.mxu0 0
        %2169 = vmatpush1.bf16.msra.mxu0 0
        %2170 = vmatprep.subr.bf16.mxu0 0
        %2171 = vmatpush1.bf16.msra.mxu0 0
        %2172 = vmatprep.subr.bf16.mxu0 0
        %2173 = vmatpush1.bf16.msra.mxu0 0
        %2174 = vmatprep.subr.bf16.mxu0 0
        %2175 = vmatpush1.bf16.msra.mxu0 0
        %2176 = vmatprep.mubr.bf16.mxu0 0
        %2177 = vmatmul.mubr.bf16.gmra.mrb[0].mxu0 %v2138
        %v2178 = vpop.f32.mrb[0].mxu0
        %v2179 = vadd.f32 0.0, %v2178
        %v2180 = vpop.f32.mrb[0].mxu0
        %v2181 = vpop.f32.mrb[0].mxu0
        %v2182 = vadd.f32 0.0, %v2181
        %v2183 = vpop.f32.mrb[0].mxu0
        %2184 = vdwg.mxu0
        %v2186 = vsel %vm2140, %v2124, 0
        %2188 = vmatprep.subr.bf16.mxu0 0
        %2189 = vmatpush1.bf16.msra.mxu0 %v2186
        %2190 = vmatprep.subr.bf16.mxu0 0
        %2191 = vmatpush1.bf16.msra.mxu0 0
        %2192 = vmatprep.subr.bf16.mxu0 0
        %2193 = vmatpush1.bf16.msra.mxu0 0
        %2194 = vmatprep.subr.bf16.mxu0 0
        %2195 = vmatpush1.bf16.msra.mxu0 0
        %2196 = vmatprep.subr.bf16.mxu0 0
        %2197 = vmatpush1.bf16.msra.mxu0 0
        %2198 = vmatprep.subr.bf16.mxu0 0
        %2199 = vmatpush1.bf16.msra.mxu0 0
        %2200 = vmatprep.subr.bf16.mxu0 0
        %2201 = vmatpush1.bf16.msra.mxu0 0
        %2202 = vmatprep.subr.bf16.mxu0 0
        %2203 = vmatpush1.bf16.msra.mxu0 0
        %2204 = vmatprep.subr.bf16.mxu0 0
        %2205 = vmatpush1.bf16.msra.mxu0 0
        %2206 = vmatprep.subr.bf16.mxu0 0
        %2207 = vmatpush1.bf16.msra.mxu0 0
        %2208 = vmatprep.subr.bf16.mxu0 0
        %2209 = vmatpush1.bf16.msra.mxu0 0
        %2210 = vmatprep.subr.bf16.mxu0 0
        %2211 = vmatpush1.bf16.msra.mxu0 0
        %2212 = vmatprep.subr.bf16.mxu0 0
        %2213 = vmatpush1.bf16.msra.mxu0 0
        %2214 = vmatprep.subr.bf16.mxu0 0
        %2215 = vmatpush1.bf16.msra.mxu0 0
        %2216 = vmatprep.subr.bf16.mxu0 0
        %2217 = vmatpush1.bf16.msra.mxu0 0
        %2218 = vmatprep.subr.bf16.mxu0 0
        %2219 = vmatpush1.bf16.msra.mxu0 0
        %2220 = vmatprep.mubr.bf16.mxu0 0
        %2221 = vmatmul.mubr.bf16.gmra.mrb[0].mxu0 %v2138
        %v2222 = vpop.f32.mrb[0].mxu0
        %v2223 = vadd.f32 0.0, %v2222
        %v2224 = vpop.f32.mrb[0].mxu0
        %v2225 = vpop.f32.mrb[0].mxu0
        %v2226 = vadd.f32 0.0, %v2225
        %v2227 = vpop.f32.mrb[0].mxu0
        %2228 = vdwg.mxu0
        %v2230 = vsel %vm2140, %v2125, 0
        %2232 = vmatprep.subr.bf16.mxu0 0
        %2233 = vmatpush1.bf16.msra.mxu0 %v2230
        %2234 = vmatprep.subr.bf16.mxu0 0
        %2235 = vmatpush1.bf16.msra.mxu0 0
        %2236 = vmatprep.subr.bf16.mxu0 0
        %2237 = vmatpush1.bf16.msra.mxu0 0
        %2238 = vmatprep.subr.bf16.mxu0 0
        %2239 = vmatpush1.bf16.msra.mxu0 0
        %2240 = vmatprep.subr.bf16.mxu0 0
        %2241 = vmatpush1.bf16.msra.mxu0 0
        %2242 = vmatprep.subr.bf16.mxu0 0
        %2243 = vmatpush1.bf16.msra.mxu0 0
        %2244 = vmatprep.subr.bf16.mxu0 0
        %2245 = vmatpush1.bf16.msra.mxu0 0
        %2246 = vmatprep.subr.bf16.mxu0 0
        %2247 = vmatpush1.bf16.msra.mxu0 0
        %2248 = vmatprep.subr.bf16.mxu0 0
        %2249 = vmatpush1.bf16.msra.mxu0 0
        %2250 = vmatprep.subr.bf16.mxu0 0
        %2251 = vmatpush1.bf16.msra.mxu0 0
        %2252 = vmatprep.subr.bf16.mxu0 0
        %2253 = vmatpush1.bf16.msra.mxu0 0
        %2254 = vmatprep.subr.bf16.mxu0 0
        %2255 = vmatpush1.bf16.msra.mxu0 0
        %2256 = vmatprep.subr.bf16.mxu0 0
        %2257 = vmatpush1.bf16.msra.mxu0 0
        %2258 = vmatprep.subr.bf16.mxu0 0
        %2259 = vmatpush1.bf16.msra.mxu0 0
        %2260 = vmatprep.subr.bf16.mxu0 0
        %2261 = vmatpush1.bf16.msra.mxu0 0
        %2262 = vmatprep.subr.bf16.mxu0 0
        %2263 = vmatpush1.bf16.msra.mxu0 0
        %2264 = vmatprep.mubr.bf16.mxu0 0
        %2265 = vmatmul.mubr.bf16.gmra.mrb[0].mxu0 %v2138
        %v2266 = vpop.f32.mrb[0].mxu0
        %v2267 = vadd.f32 0.0, %v2266
        %v2268 = vpop.f32.mrb[0].mxu0
        %v2269 = vpop.f32.mrb[0].mxu0
        %v2270 = vadd.f32 0.0, %v2269
        %v2271 = vpop.f32.mrb[0].mxu0
        %2272 = vdwg.mxu0
        %v2274 = vsel %vm2140, %v2126, 0
        %2276 = vmatprep.subr.bf16.mxu0 0
        %2277 = vmatpush1.bf16.msra.mxu0 %v2274
        %2278 = vmatprep.subr.bf16.mxu0 0
        %2279 = vmatpush1.bf16.msra.mxu0 0
        %2280 = vmatprep.subr.bf16.mxu0 0
        %2281 = vmatpush1.bf16.msra.mxu0 0
        %2282 = vmatprep.subr.bf16.mxu0 0
        %2283 = vmatpush1.bf16.msra.mxu0 0
        %2284 = vmatprep.subr.bf16.mxu0 0
        %2285 = vmatpush1.bf16.msra.mxu0 0
        %2286 = vmatprep.subr.bf16.mxu0 0
        %2287 = vmatpush1.bf16.msra.mxu0 0
        %2288 = vmatprep.subr.bf16.mxu0 0
        %2289 = vmatpush1.bf16.msra.mxu0 0
        %2290 = vmatprep.subr.bf16.mxu0 0
        %2291 = vmatpush1.bf16.msra.mxu0 0
        %2292 = vmatprep.subr.bf16.mxu0 0
        %2293 = vmatpush1.bf16.msra.mxu0 0
        %2294 = vmatprep.subr.bf16.mxu0 0
        %2295 = vmatpush1.bf16.msra.mxu0 0
        %2296 = vmatprep.subr.bf16.mxu0 0
        %2297 = vmatpush1.bf16.msra.mxu0 0
        %2298 = vmatprep.subr.bf16.mxu0 0
        %2299 = vmatpush1.bf16.msra.mxu0 0
        %2300 = vmatprep.subr.bf16.mxu0 0
        %2301 = vmatpush1.bf16.msra.mxu0 0
        %2302 = vmatprep.subr.bf16.mxu0 0
        %2303 = vmatpush1.bf16.msra.mxu0 0
        %2304 = vmatprep.subr.bf16.mxu0 0
        %2305 = vmatpush1.bf16.msra.mxu0 0
        %2306 = vmatprep.subr.bf16.mxu0 0
        %2307 = vmatpush1.bf16.msra.mxu0 0
        %2308 = vmatprep.mubr.bf16.mxu0 0
        %2309 = vmatmul.mubr.bf16.gmra.mrb[0].mxu0 %v2138
        %v2310 = vpop.f32.mrb[0].mxu0
        %v2311 = vadd.f32 0.0, %v2310
        %v2312 = vpop.f32.mrb[0].mxu0
        %v2313 = vpop.f32.mrb[0].mxu0
        %v2314 = vadd.f32 0.0, %v2313
        %v2315 = vpop.f32.mrb[0].mxu0
        %2316 = vdwg.mxu0
        %v2318 = vsel %vm2140, %v2127, 0
        %2320 = vmatprep.subr.bf16.mxu0 0
        %2321 = vmatpush1.bf16.msra.mxu0 %v2318
        %2322 = vmatprep.subr.bf16.mxu0 0
        %2323 = vmatpush1.bf16.msra.mxu0 0
        %2324 = vmatprep.subr.bf16.mxu0 0
        %2325 = vmatpush1.bf16.msra.mxu0 0
        %2326 = vmatprep.subr.bf16.mxu0 0
        %2327 = vmatpush1.bf16.msra.mxu0 0
        %2328 = vmatprep.subr.bf16.mxu0 0
        %2329 = vmatpush1.bf16.msra.mxu0 0
        %2330 = vmatprep.subr.bf16.mxu0 0
        %2331 = vmatpush1.bf16.msra.mxu0 0
        %2332 = vmatprep.subr.bf16.mxu0 0
        %2333 = vmatpush1.bf16.msra.mxu0 0
        %2334 = vmatprep.subr.bf16.mxu0 0
        %2335 = vmatpush1.bf16.msra.mxu0 0
        %2336 = vmatprep.subr.bf16.mxu0 0
        %2337 = vmatpush1.bf16.msra.mxu0 0
        %2338 = vmatprep.subr.bf16.mxu0 0
        %2339 = vmatpush1.bf16.msra.mxu0 0
        %2340 = vmatprep.subr.bf16.mxu0 0
        %2341 = vmatpush1.bf16.msra.mxu0 0
        %2342 = vmatprep.subr.bf16.mxu0 0
        %2343 = vmatpush1.bf16.msra.mxu0 0
        %2344 = vmatprep.subr.bf16.mxu0 0
        %2345 = vmatpush1.bf16.msra.mxu0 0
        %2346 = vmatprep.subr.bf16.mxu0 0
        %2347 = vmatpush1.bf16.msra.mxu0 0
        %2348 = vmatprep.subr.bf16.mxu0 0
        %2349 = vmatpush1.bf16.msra.mxu0 0
        %2350 = vmatprep.subr.bf16.mxu0 0
        %2351 = vmatpush1.bf16.msra.mxu0 0
        %2352 = vmatprep.mubr.bf16.mxu0 0
        %2353 = vmatmul.mubr.bf16.gmra.mrb[0].mxu0 %v2138
        %v2354 = vpop.f32.mrb[0].mxu0
        %v2355 = vadd.f32 0.0, %v2354
        %v2356 = vpop.f32.mrb[0].mxu0
        %v2357 = vpop.f32.mrb[0].mxu0
        %v2358 = vadd.f32 0.0, %v2357
        %v2359 = vpop.f32.mrb[0].mxu0
        %2360 = vdwg.mxu0
        %v2362 = vsel %vm2140, %v2128, 0
        %2364 = vmatprep.subr.bf16.mxu0 0
        %2365 = vmatpush1.bf16.msra.mxu0 %v2362
        %2366 = vmatprep.subr.bf16.mxu0 0
        %2367 = vmatpush1.bf16.msra.mxu0 0
        %2368 = vmatprep.subr.bf16.mxu0 0
        %2369 = vmatpush1.bf16.msra.mxu0 0
        %2370 = vmatprep.subr.bf16.mxu0 0
        %2371 = vmatpush1.bf16.msra.mxu0 0
        %2372 = vmatprep.subr.bf16.mxu0 0
        %2373 = vmatpush1.bf16.msra.mxu0 0
        %2374 = vmatprep.subr.bf16.mxu0 0
        %2375 = vmatpush1.bf16.msra.mxu0 0
        %2376 = vmatprep.subr.bf16.mxu0 0
        %2377 = vmatpush1.bf16.msra.mxu0 0
        %2378 = vmatprep.subr.bf16.mxu0 0
        %2379 = vmatpush1.bf16.msra.mxu0 0
        %2380 = vmatprep.subr.bf16.mxu0 0
        %2381 = vmatpush1.bf16.msra.mxu0 0
        %2382 = vmatprep.subr.bf16.mxu0 0
        %2383 = vmatpush1.bf16.msra.mxu0 0
        %2384 = vmatprep.subr.bf16.mxu0 0
        %2385 = vmatpush1.bf16.msra.mxu0 0
        %2386 = vmatprep.subr.bf16.mxu0 0
        %2387 = vmatpush1.bf16.msra.mxu0 0
        %2388 = vmatprep.subr.bf16.mxu0 0
        %2389 = vmatpush1.bf16.msra.mxu0 0
        %2390 = vmatprep.subr.bf16.mxu0 0
        %2391 = vmatpush1.bf16.msra.mxu0 0
        %2392 = vmatprep.subr.bf16.mxu0 0
        %2393 = vmatpush1.bf16.msra.mxu0 0
        %2394 = vmatprep.subr.bf16.mxu0 0
        %2395 = vmatpush1.bf16.msra.mxu0 0
        %2396 = vmatprep.mubr.bf16.mxu0 0
        %2397 = vmatmul.mubr.bf16.gmra.mrb[0].mxu0 %v2138
        %v2398 = vpop.f32.mrb[0].mxu0
        %v2399 = vadd.f32 0.0, %v2398
        %v2400 = vpop.f32.mrb[0].mxu0
        %v2401 = vpop.f32.mrb[0].mxu0
        %v2402 = vadd.f32 0.0, %v2401
        %v2403 = vpop.f32.mrb[0].mxu0
        %2404 = vdwg.mxu0
        %v2406 = vsel %vm2140, %v2129, 0
        %2408 = vmatprep.subr.bf16.mxu0 0
        %2409 = vmatpush1.bf16.msra.mxu0 %v2406
        %2410 = vmatprep.subr.bf16.mxu0 0
        %2411 = vmatpush1.bf16.msra.mxu0 0
        %2412 = vmatprep.subr.bf16.mxu0 0
        %2413 = vmatpush1.bf16.msra.mxu0 0
        %2414 = vmatprep.subr.bf16.mxu0 0
        %2415 = vmatpush1.bf16.msra.mxu0 0
        %2416 = vmatprep.subr.bf16.mxu0 0
        %2417 = vmatpush1.bf16.msra.mxu0 0
        %2418 = vmatprep.subr.bf16.mxu0 0
        %2419 = vmatpush1.bf16.msra.mxu0 0
        %2420 = vmatprep.subr.bf16.mxu0 0
        %2421 = vmatpush1.bf16.msra.mxu0 0
        %2422 = vmatprep.subr.bf16.mxu0 0
        %2423 = vmatpush1.bf16.msra.mxu0 0
        %2424 = vmatprep.subr.bf16.mxu0 0
        %2425 = vmatpush1.bf16.msra.mxu0 0
        %2426 = vmatprep.subr.bf16.mxu0 0
        %2427 = vmatpush1.bf16.msra.mxu0 0
        %2428 = vmatprep.subr.bf16.mxu0 0
        %2429 = vmatpush1.bf16.msra.mxu0 0
        %2430 = vmatprep.subr.bf16.mxu0 0
        %2431 = vmatpush1.bf16.msra.mxu0 0
        %2432 = vmatprep.subr.bf16.mxu0 0
        %2433 = vmatpush1.bf16.msra.mxu0 0
        %2434 = vmatprep.subr.bf16.mxu0 0
        %2435 = vmatpush1.bf16.msra.mxu0 0
        %2436 = vmatprep.subr.bf16.mxu0 0
        %2437 = vmatpush1.bf16.msra.mxu0 0
        %2438 = vmatprep.subr.bf16.mxu0 0
        %2439 = vmatpush1.bf16.msra.mxu0 0
        %2440 = vmatprep.mubr.bf16.mxu0 0
        %2441 = vmatmul.mubr.bf16.gmra.mrb[0].mxu0 %v2138
        %v2442 = vpop.f32.mrb[0].mxu0
        %v2443 = vadd.f32 0.0, %v2442
        %v2444 = vpop.f32.mrb[0].mxu0
        %v2445 = vpop.f32.mrb[0].mxu0
        %v2446 = vadd.f32 0.0, %v2445
        %v2447 = vpop.f32.mrb[0].mxu0
        %2448 = vdwg.mxu0
        %v2450 = vsel %vm2140, %v2130, 0
        %2452 = vmatprep.subr.bf16.mxu0 0
        %2453 = vmatpush1.bf16.msra.mxu0 %v2450
        %2454 = vmatprep.subr.bf16.mxu0 0
        %2455 = vmatpush1.bf16.msra.mxu0 0
        %2456 = vmatprep.subr.bf16.mxu0 0
        %2457 = vmatpush1.bf16.msra.mxu0 0
        %2458 = vmatprep.subr.bf16.mxu0 0
        %2459 = vmatpush1.bf16.msra.mxu0 0
        %2460 = vmatprep.subr.bf16.mxu0 0
        %2461 = vmatpush1.bf16.msra.mxu0 0
        %2462 = vmatprep.subr.bf16.mxu0 0
        %2463 = vmatpush1.bf16.msra.mxu0 0
        %2464 = vmatprep.subr.bf16.mxu0 0
        %2465 = vmatpush1.bf16.msra.mxu0 0
        %2466 = vmatprep.subr.bf16.mxu0 0
        %2467 = vmatpush1.bf16.msra.mxu0 0
        %2468 = vmatprep.subr.bf16.mxu0 0
        %2469 = vmatpush1.bf16.msra.mxu0 0
        %2470 = vmatprep.subr.bf16.mxu0 0
        %2471 = vmatpush1.bf16.msra.mxu0 0
        %2472 = vmatprep.subr.bf16.mxu0 0
        %2473 = vmatpush1.bf16.msra.mxu0 0
        %2474 = vmatprep.subr.bf16.mxu0 0
        %2475 = vmatpush1.bf16.msra.mxu0 0
        %2476 = vmatprep.subr.bf16.mxu0 0
        %2477 = vmatpush1.bf16.msra.mxu0 0
        %2478 = vmatprep.subr.bf16.mxu0 0
        %2479 = vmatpush1.bf16.msra.mxu0 0
        %2480 = vmatprep.subr.bf16.mxu0 0
        %2481 = vmatpush1.bf16.msra.mxu0 0
        %2482 = vmatprep.subr.bf16.mxu0 0
        %2483 = vmatpush1.bf16.msra.mxu0 0
        %2484 = vmatprep.mubr.bf16.mxu0 0
        %2485 = vmatmul.mubr.bf16.gmra.mrb[0].mxu0 %v2138
        %v2486 = vpop.f32.mrb[0].mxu0
        %v2487 = vadd.f32 0.0, %v2486
        %v2488 = vpop.f32.mrb[0].mxu0
        %v2489 = vpop.f32.mrb[0].mxu0
        %v2490 = vadd.f32 0.0, %v2489
        %v2491 = vpop.f32.mrb[0].mxu0
        %2492 = vdwg.mxu0
        %v2493 = vmul.f32 %v2179, 0.53333336
        %v2494 = vmul.f32 %v2182, 0.53333336
        %v2495 = vmul.f32 %v2223, 0.46666667
        %v2496 = vmul.f32 %v2226, 0.46666667
        %v2497 = vadd.f32 %v2493, %v2495
        %v2498 = vadd.f32 %v2494, %v2496
        %v2499 = vmul.f32 %v2179, 0.06666667
        %v2500 = vmul.f32 %v2182, 0.06666667
        %v2501 = vmul.f32 %v2223, 0.93333334
        %v2502 = vmul.f32 %v2226, 0.93333334
        %v2503 = vadd.f32 %v2499, %v2501
        %v2504 = vadd.f32 %v2500, %v2502
        %v2505 = vmul.f32 %v2223, 0.6
        %v2506 = vmul.f32 %v2226, 0.6
        %v2507 = vmul.f32 %v2267, 0.4
        %v2508 = vmul.f32 %v2270, 0.4
        %v2509 = vadd.f32 %v2505, %v2507
        %v2510 = vadd.f32 %v2506, %v2508
        %v2511 = vmul.f32 %v2223, 0.13333334
        %v2512 = vmul.f32 %v2226, 0.13333334
        %v2513 = vmul.f32 %v2267, 0.8666667
        %v2514 = vmul.f32 %v2270, 0.8666667
        %v2515 = vadd.f32 %v2511, %v2513
        %v2516 = vadd.f32 %v2512, %v2514
        %v2517 = vmul.f32 %v2267, 0.6666667
        %v2518 = vmul.f32 %v2270, 0.6666667
        %v2519 = vmul.f32 %v2311, 0.33333334
        %v2520 = vmul.f32 %v2314, 0.33333334
        %v2521 = vadd.f32 %v2517, %v2519
        %v2522 = vadd.f32 %v2518, %v2520
        %v2523 = vmul.f32 %v2267, 0.2
        %v2524 = vmul.f32 %v2270, 0.2
        %v2525 = vmul.f32 %v2311, 0.8
        %v2526 = vmul.f32 %v2314, 0.8
        %v2527 = vadd.f32 %v2523, %v2525
        %v2528 = vadd.f32 %v2524, %v2526
        %v2529 = vmul.f32 %v2311, 0.73333335
        %v2530 = vmul.f32 %v2314, 0.73333335
        %v2531 = vmul.f32 %v2355, 0.26666668
        %v2532 = vmul.f32 %v2358, 0.26666668
        %v2533 = vadd.f32 %v2529, %v2531
        %v2534 = vadd.f32 %v2530, %v2532
        %v2535 = vmul.f32 %v2311, 0.26666668
        %v2536 = vmul.f32 %v2314, 0.26666668
        %v2537 = vmul.f32 %v2355, 0.73333335
        %v2538 = vmul.f32 %v2358, 0.73333335
        %v2539 = vadd.f32 %v2535, %v2537
        %v2540 = vadd.f32 %v2536, %v2538
        %v2541 = vmul.f32 %v2355, 0.8
        %v2542 = vmul.f32 %v2358, 0.8
        %v2543 = vmul.f32 %v2399, 0.2
        %v2544 = vmul.f32 %v2402, 0.2
        %v2545 = vadd.f32 %v2541, %v2543
        %v2546 = vadd.f32 %v2542, %v2544
        %v2547 = vmul.f32 %v2355, 0.33333334
        %v2548 = vmul.f32 %v2358, 0.33333334
        %v2549 = vmul.f32 %v2399, 0.6666667
        %v2550 = vmul.f32 %v2402, 0.6666667
        %v2551 = vadd.f32 %v2547, %v2549
        %v2552 = vadd.f32 %v2548, %v2550
        %v2553 = vmul.f32 %v2399, 0.8666667
        %v2554 = vmul.f32 %v2402, 0.8666667
        %v2555 = vmul.f32 %v2443, 0.13333334
        %v2556 = vmul.f32 %v2446, 0.13333334
        %v2557 = vadd.f32 %v2553, %v2555
        %v2558 = vadd.f32 %v2554, %v2556
        %v2559 = vmul.f32 %v2399, 0.4
        %v2560 = vmul.f32 %v2402, 0.4
        %v2561 = vmul.f32 %v2443, 0.6
        %v2562 = vmul.f32 %v2446, 0.6
        %v2563 = vadd.f32 %v2559, %v2561
        %v2564 = vadd.f32 %v2560, %v2562
        %v2565 = vmul.f32 %v2443, 0.93333334
        %v2566 = vmul.f32 %v2446, 0.93333334
        %v2567 = vmul.f32 %v2487, 0.06666667
        %v2568 = vmul.f32 %v2490, 0.06666667
        %v2569 = vadd.f32 %v2565, %v2567
        %v2570 = vadd.f32 %v2566, %v2568
        %v2571 = vmul.f32 %v2443, 0.46666667
        %v2572 = vmul.f32 %v2446, 0.46666667
        %v2573 = vmul.f32 %v2487, 0.53333336
        %v2574 = vmul.f32 %v2490, 0.53333336
        %v2575 = vadd.f32 %v2571, %v2573
        %v2576 = vadd.f32 %v2572, %v2574
        %2577 = vst.msk [vmem:[%s420] sm:$0xff] %vm789, %v2179
        %2578 = vst.msk [vmem:[%s420 + $0x8] sm:$0xff] %vm789, %v2182
        %2579 = vst.msk [vmem:[%s420 + $0x10] sm:$0xff] %vm789, %v2497
        %2580 = vst.msk [vmem:[%s420 + $0x18] sm:$0xff] %vm789, %v2498
        %2581 = vst.msk [vmem:[%s420 + $0x20] sm:$0xff] %vm789, %v2503
        %2582 = vst.msk [vmem:[%s420 + $0x28] sm:$0xff] %vm789, %v2504
        %2583 = vst.msk [vmem:[%s420 + $0x30] sm:$0xff] %vm789, %v2509
        %2584 = vst.msk [vmem:[%s420 + $0x38] sm:$0xff] %vm789, %v2510
        %2585 = vst.msk [vmem:[%s420 + $0x40] sm:$0xff] %vm789, %v2515
        %2586 = vst.msk [vmem:[%s420 + $0x48] sm:$0xff] %vm789, %v2516
        %2587 = vst.msk [vmem:[%s420 + $0x50] sm:$0xff] %vm789, %v2521
        %2588 = vst.msk [vmem:[%s420 + $0x58] sm:$0xff] %vm789, %v2522
        %2589 = vst.msk [vmem:[%s420 + $0x60] sm:$0xff] %vm789, %v2527
        %2590 = vst.msk [vmem:[%s420 + $0x68] sm:$0xff] %vm789, %v2528
        %2591 = vst.msk [vmem:[%s420 + $0x70] sm:$0xff] %vm789, %v2533
        %2592 = vst.msk [vmem:[%s420 + $0x78] sm:$0xff] %vm789, %v2534
        %2593 = vst.msk [vmem:[%s420 + $0x80] sm:$0xff] %vm789, %v2539
        %2594 = vst.msk [vmem:[%s420 + $0x88] sm:$0xff] %vm789, %v2540
        %2595 = vst.msk [vmem:[%s420 + $0x90] sm:$0xff] %vm789, %v2545
        %2596 = vst.msk [vmem:[%s420 + $0x98] sm:$0xff] %vm789, %v2546
        %2597 = vst.msk [vmem:[%s420 + $0xa0] sm:$0xff] %vm789, %v2551
        %2598 = vst.msk [vmem:[%s420 + $0xa8] sm:$0xff] %vm789, %v2552
        %2599 = vst.msk [vmem:[%s420 + $0xb0] sm:$0xff] %vm789, %v2557
        %2600 = vst.msk [vmem:[%s420 + $0xb8] sm:$0xff] %vm789, %v2558
        %2601 = vst.msk [vmem:[%s420 + $0xc0] sm:$0xff] %vm789, %v2563
        %2602 = vst.msk [vmem:[%s420 + $0xc8] sm:$0xff] %vm789, %v2564
        %2603 = vst.msk [vmem:[%s420 + $0xd0] sm:$0xff] %vm789, %v2569
        %2604 = vst.msk [vmem:[%s420 + $0xd8] sm:$0xff] %vm789, %v2570
        %2605 = vst.msk [vmem:[%s420 + $0xe0] sm:$0xff] %vm789, %v2575
        %2606 = vst.msk [vmem:[%s420 + $0xe8] sm:$0xff] %vm789, %v2576
        %2607 = vst.msk [vmem:[%s420 + $0xf0] sm:$0xff] %vm789, %v2487
        %2608 = vst.msk [vmem:[%s420 + $0xf8] sm:$0xff] %vm789, %v2490
        %s2609 = sand.u32 %s262, 1
        %s2610 = scalar_lea.sflag [#allocation3], %s2609
        %s2611 = sand.u32 %s262, 1
        %s2612 = smul.addr %s2611, 64
        %s2613 = scalar_lea.vmem [#allocation2], %s2612
        %s2614 = sand.u32 %s288, 1
        %s2615 = scalar_lea.sflag [#allocation5], %s2614
        %s2616 = sand.u32 %s288, 1
        %s2617 = smul.addr %s2616, 256
        %s2618 = scalar_lea.vmem [#allocation4], %s2617
        // Predicated region
        $region61: #{semantic_interaction_forward.1} parent=59 // pred_check
          %p2619 = pneg %p272
        $region62: #{semantic_interaction_forward.1} parent=59 // pred_check_branch
          %2621 = sbr.rel (%p2619) target = $region64
        $region63: #{semantic_interaction_forward.1} parent=59 // pred_region
          %s2623 = ssub.s32 1024, 1024
          %2624 = vsyncadd %s2610, %s2623
          %s2625 = smul.addr %s29, 8
          %s2626 = smul.addr %s2625, 128
          %s2627 = scalar_lea.hbm %s10, %s2626
          %s2628 = sshll.u32 %s2613, 4
          %s2629 = int_to_ptr.vmem [resolvable:$true] %s2628
          %2634 = dma.vmem_to_hbm [thread:$0]  %s2629, 1024, %s2627, %s2610, 128, 128, 8
        $region64: #{semantic_interaction_forward.1} parent=59 // pred_fallthru
          _
        // Predicated region
        $region65: #{semantic_interaction_forward.1} parent=59 // pred_check
          %p2635 = pneg %p298
        $region66: #{semantic_interaction_forward.1} parent=59 // pred_check_branch
          %2637 = sbr.rel (%p2635) target = $region68
        $region67: #{semantic_interaction_forward.1} parent=59 // pred_region
          %s2639 = ssub.s32 4096, 4096
          %2640 = vsyncadd %s2615, %s2639
          %s2641 = smul.addr %s29, 32
          %s2642 = smul.addr %s2641, 128
          %s2643 = scalar_lea.hbm %s11, %s2642
          %s2644 = sshll.u32 %s2618, 4
          %s2645 = int_to_ptr.vmem [resolvable:$true] %s2644
          %2650 = dma.vmem_to_hbm [thread:$0]  %s2645, 4096, %s2643, %s2615, 128, 128, 8
        $region68: #{semantic_interaction_forward.1} parent=59 // pred_fallthru
          _
      $region60: #{semantic_interaction_forward.1} parent=5 // pred_fallthru
        _
      %p2651 = scmp.le.s32.totalorder 2, %s24
      // Predicated region
      $region69: #{semantic_interaction_forward.1} parent=5 // pred_check
        %p2652 = pneg %p2651
      $region70: #{semantic_interaction_forward.1} parent=5 // pred_check_branch
        %2654 = sbr.rel (%p2652) target = $region72
      $region71: #{semantic_interaction_forward.1} parent=5 // pred_region
        %s2655 = ssub.s32 %s24, 2
        // Predicated region
        $region73: #{semantic_interaction_forward.1} parent=71 // pred_check
          %p2656 = pneg %p278
        $region74: #{semantic_interaction_forward.1} parent=71 // pred_check_branch
          %2658 = sbr.rel (%p2656) target = $region76
        $region75: #{semantic_interaction_forward.1} parent=71 // pred_region
          %s2659 = sand.u32 %s263, 1
          %s2660 = scalar_lea.sflag [#allocation3], %s2659
          %s2661 = sand.u32 %s263, 1
          %s2662 = smul.addr %s2661, 64
          %s2663 = scalar_lea.vmem [#allocation2], %s2662
          %2664 = dma.done %s2660, 1024
        $region76: #{semantic_interaction_forward.1} parent=71 // pred_fallthru
          _
        // Predicated region
        $region77: #{semantic_interaction_forward.1} parent=71 // pred_check
          %p2665 = pneg %p304
        $region78: #{semantic_interaction_forward.1} parent=71 // pred_check_branch
          %2667 = sbr.rel (%p2665) target = $region80
        $region79: #{semantic_interaction_forward.1} parent=71 // pred_region
          %s2668 = sand.u32 %s289, 1
          %s2669 = scalar_lea.sflag [#allocation5], %s2668
          %s2670 = sand.u32 %s289, 1
          %s2671 = smul.addr %s2670, 256
          %s2672 = scalar_lea.vmem [#allocation4], %s2671
          %2673 = dma.done %s2669, 4096
        $region80: #{semantic_interaction_forward.1} parent=71 // pred_fallthru
          _
      $region72: #{semantic_interaction_forward.1} parent=5 // pred_fallthru
        _
    $region6: #{semantic_interaction_forward.1} parent=1 // loop_footer
      %s28 = sadd.s32 1, %s24
    $region7: #{semantic_interaction_forward.1} parent=1 // loop_footer_branch
      %23 = sbr.rel target = $region3
    $region8: #{semantic_interaction_forward.1} parent=1 // loop_exit
      _
    %2674 = vsyncpa [#allocation3], 1
    %s2675 = scalar_lea.sflag [#allocation3], 1
    %2676 = vsyncpa %s2675, 1
    %2677 = vsyncpa [#allocation5], 1
    %s2678 = scalar_lea.sflag [#allocation5], 1
    %2679 = vsyncpa %s2678, 1

</llo_original>
